<compile_context>
chip_gen: v7x
topology: tpu7x:2x2x1
jax: 0.10.0
libtpu: 0.0.40
codegen_flags: <defaults>
</compile_context>

<pallas_src>
import functools

import jax
import jax.numpy as jnp
from jax.experimental import pallas as pl
from jax.experimental.pallas import tpu as pltpu


_B_BLK = 8      # batch rows per grid step (one full sublane group)
_LANES = 128    # lane width; H / V / F padded to multiples of this


def _round_up(x, m):
    return (x + m - 1) // m * m


def _pad_axis(x, axis, new_size, value=0.0):
    pad = new_size - x.shape[axis]
    if pad == 0:
        return x
    widths = [(0, 0)] * x.ndim
    widths[axis] = (0, pad)
    return jnp.pad(x, widths, constant_values=value)


def _pad_gate_axis(w, hp, axis):
    """Pad a 4H-wide LSTM gate axis gate-by-gate (PyTorch order i, f, g, o)."""
    gates = jnp.split(w, 4, axis=axis)
    return jnp.concatenate([_pad_axis(g, axis, hp) for g in gates], axis=axis)


def _s2vt_kernel(bos_id,
                 video_ref, wf1_ref, bf1_ref, bg1_ref, whh1_ref,
                 wih2w_ref, wih2v_ref, bg2_ref, whh2_ref,
                 emb_ref, w2_ref, b2_ref,
                 cap_ref,
                 gx1_ref, vid_out_ref, gx2_ref):
    """Whole S2VT inference forward for one batch block (everything in VMEM)."""
    n_step, B, _ = video_ref.shape
    Hp = whh1_ref.shape[0]
    Vp = emb_ref.shape[0]
    T1 = vid_out_ref.shape[0]        # 2 * n_step - 1
    n_dec = cap_ref.shape[0]         # n_step - 1
    f32 = jnp.float32

    whh1 = whh1_ref[...]
    whh2 = whh2_ref[...]
    wih2w = wih2w_ref[...]
    emb = emb_ref[...]
    w2 = w2_ref[...]
    b2 = b2_ref[...]

    def lstm_step(gx, h, c, whh):
        # gx already holds x @ W_ih + b_ih + b_hh; gate slices are lane-aligned.
        gates = gx + jnp.dot(h, whh, preferred_element_type=f32)
        i = jax.nn.sigmoid(gates[:, 0:Hp])
        f = jax.nn.sigmoid(gates[:, Hp:2 * Hp])
        g = jnp.tanh(gates[:, 2 * Hp:3 * Hp])
        o = jax.nn.sigmoid(gates[:, 3 * Hp:4 * Hp])
        c_new = f * c + i * g
        h_new = o * jnp.tanh(c_new)
        return h_new, c_new

    # --- fused linear1 + LSTM1 input projection: one matmul for all frames ---
    x_all = video_ref[...].reshape(n_step * B, video_ref.shape[2])
    gx1 = jnp.dot(x_all, wf1_ref[...], preferred_element_type=f32) + bf1_ref[...]
    gx1_ref[...] = gx1.reshape(n_step, B, 4 * Hp)

    zeros_bh = jnp.zeros((B, Hp), f32)

    # --- LSTM1 over real frames (only the recurrence is sequential) ---
    def body1a(t, carry):
        h, c = carry
        h, c = lstm_step(gx1_ref[t], h, c, whh1)
        vid_out_ref[t] = h
        return h, c

    h1, c1 = jax.lax.fori_loop(0, n_step, body1a, (zeros_bh, zeros_bh))

    # --- LSTM1 over zero-padded tail: input projection reduces to the bias ---
    gx_pad = jnp.broadcast_to(bg1_ref[...], (B, 4 * Hp))

    def body1b(t, carry):
        h, c = carry
        h, c = lstm_step(gx_pad, h, c, whh1)
        vid_out_ref[t] = h
        return h, c

    jax.lax.fori_loop(n_step, T1, body1b, (h1, c1))

    # --- hoisted LSTM2 video-side input projection for ALL time steps ---
    v_all = vid_out_ref[...].reshape(T1 * B, Hp)
    gx2 = jnp.dot(v_all, wih2v_ref[...], preferred_element_type=f32) + bg2_ref[...]
    gx2_ref[...] = gx2.reshape(T1, B, 4 * Hp)

    # --- LSTM2 encode phase (word half of the input is zeros) ---
    def body2(t, carry):
        h, c = carry
        return lstm_step(gx2_ref[t], h, c, whh2)

    h2, c2 = jax.lax.fori_loop(0, n_step, body2, (zeros_bh, zeros_bh))

    # --- greedy decode ---
    lane_iota = jax.lax.broadcasted_iota(jnp.int32, (B, Vp), 1)

    def decode_step(word_emb, d, h, c):
        gx = (jnp.dot(word_emb, wih2w, preferred_element_type=f32)
              + gx2_ref[n_step + d])
        h, c = lstm_step(gx, h, c, whh2)
        logits = jnp.dot(h, w2, preferred_element_type=f32) + b2    # (B, Vp)
        # argmax with first-occurrence tie-break (matches torch.argmax);
        # padded vocab columns carry bias -1e30 so they never win.
        mx = jnp.max(logits, axis=1, keepdims=True)
        ids = jnp.min(jnp.where(logits == mx, lane_iota, Vp),
                      axis=1, keepdims=True).astype(jnp.int32)
        return ids, h, c

    bos_emb = jnp.broadcast_to(emb[bos_id:bos_id + 1, :], (B, Hp))
    ids0, h2, c2 = decode_step(bos_emb, 0, h2, c2)
    cap_ref[0] = ids0

    # TODO(synk): at realistic vocab sizes replace the one-hot matmul lookup
    # below with a true row gather (ids -> SMEM scalars -> emb_ref[pl.ds(id,1)]),
    # and stream emb/w2/video from HBM (pl.ANY + make_async_copy).
    def dec_body(d, carry):
        ids, h, c = carry
        onehot = (ids == lane_iota).astype(f32)                        # (B, Vp)
        word_emb = jnp.dot(onehot, emb, preferred_element_type=f32)     # (B, Hp)
        ids, h, c = decode_step(word_emb, d, h, c)
        cap_ref[d] = ids
        return ids, h, c

    jax.lax.fori_loop(1, n_dec, dec_body, (ids0, h2, c2))


def _prepare_params(params, hp, vp, fp):
    """Pad weights to lane/gate-aligned shapes and fuse linear1 into LSTM1."""
    H = params["whh1"].shape[0]

    w1 = _pad_axis(_pad_axis(params["w1"], 0, fp), 1, hp)
    b1 = _pad_axis(params["b1"], 1, hp)
    wih1 = _pad_gate_axis(_pad_axis(params["wih1"], 0, hp), hp, 1)
    whh1 = _pad_gate_axis(_pad_axis(params["whh1"], 0, hp), hp, 1)
    bg1 = _pad_gate_axis(params["bg1"], hp, 1)

    # Exact fusion (eval mode: linear1 has no activation, dropout is identity).
    wf1 = jnp.dot(w1, wih1)              # (Fp, 4Hp)
    bf1 = jnp.dot(b1, wih1) + bg1        # (1, 4Hp)

    wih2 = params["wih2"]
    wih2w = _pad_gate_axis(_pad_axis(wih2[0:H, :], 0, hp), hp, 1)
    wih2v = _pad_gate_axis(_pad_axis(wih2[H:2 * H, :], 0, hp), hp, 1)
    whh2 = _pad_gate_axis(_pad_axis(params["whh2"], 0, hp), hp, 1)
    bg2 = _pad_gate_axis(params["bg2"], hp, 1)

    emb = _pad_axis(_pad_axis(params["emb"], 0, vp), 1, hp)
    w2 = _pad_axis(_pad_axis(params["w2"], 0, hp), 1, vp)
    b2 = _pad_axis(params["b2"], 1, vp, value=-1e30)   # padded vocab never argmax

    return (wf1, bf1, bg1, whh1, wih2w, wih2v, bg2, whh2, emb, w2, b2)


def s2vt_forward(video, params, bos_id):
    """video: (B, n_step, frame_dim) float32.  Returns (n_step-1, B) int32 ids."""
    B, n_step, F = video.shape
    H = params["whh1"].shape[0]
    V = params["emb"].shape[0]

    hp = _round_up(H, _LANES)
    vp = _round_up(V, _LANES)
    fp = _round_up(F, _LANES)
    b_pad = _round_up(B, _B_BLK)
    n_blocks = b_pad // _B_BLK
    T1 = 2 * n_step - 1
    n_dec = n_step - 1

    weights = _prepare_params(params, hp, vp, fp)

    # time-major, batch- and frame-padded video
    video_t = jnp.transpose(video, (1, 0, 2))                 # (n_step, B, F)
    video_t = _pad_axis(_pad_axis(video_t, 1, b_pad), 2, fp)  # (n_step, Bp, Fp)

    def _full_spec(shape):
        return pl.BlockSpec(shape, lambda i, _n=len(shape): (0,) * _n)

    in_specs = [pl.BlockSpec((n_step, _B_BLK, fp), lambda i: (0, i, 0))]
    in_specs += [_full_spec(w.shape) for w in weights]

    cap = pl.pallas_call(
        functools.partial(_s2vt_kernel, bos_id),
        out_shape=jax.ShapeDtypeStruct((n_dec, b_pad, 1), jnp.int32),
        grid=(n_blocks,),
        in_specs=in_specs,
        out_specs=pl.BlockSpec((n_dec, _B_BLK, 1), lambda i: (0, i, 0)),
        scratch_shapes=[
            pltpu.VMEM((n_step, _B_BLK, 4 * hp), jnp.float32),  # fused lin1+lstm1 gates
            pltpu.VMEM((T1, _B_BLK, hp), jnp.float32),          # vid_out (lstm1 hidden)
            pltpu.VMEM((T1, _B_BLK, 4 * hp), jnp.float32),      # lstm2 vid-side gates
        ],
        compiler_params=pltpu.CompilerParams(
            dimension_semantics=("parallel",),
            vmem_limit_bytes=32 * 1024 * 1024,
        ),
    )(video_t, *weights)

    # Match the PyTorch return convention: per-step (B,) ids, time-major.
    return cap[:, :B, 0]


def init_params(key, frame_dim, hidden, vocab_size):
    ks = jax.random.split(key, 11)
    scale = 0.1

    def rnd(k, shape):
        return jax.random.normal(k, shape, jnp.float32) * scale

    H = hidden
    return {
        # linear1: stored transposed so the kernel computes x @ W
        "w1": rnd(ks[0], (frame_dim, H)),
        "b1": rnd(ks[1], (1, H)),
        # lstm1: weight_ih/hh transposed to (in, 4H); bg = b_ih + b_hh (combined)
        "wih1": rnd(ks[2], (H, 4 * H)),
        "whh1": rnd(ks[3], (H, 4 * H)),
        "bg1": rnd(ks[4], (1, 4 * H)),
        # lstm2: input is 2H wide ([word_emb ; vid_out])
        "wih2": rnd(ks[5], (2 * H, 4 * H)),
        "whh2": rnd(ks[6], (H, 4 * H)),
        "bg2": rnd(ks[7], (1, 4 * H)),
        # embedding table and linear2 (transposed)
        "emb": rnd(ks[8], (vocab_size, H)),
        "w2": rnd(ks[9], (H, vocab_size)),
        "b2": rnd(ks[10], (1, vocab_size)),
    }


if __name__ == "__main__":
    # Small shapes consistent with the module's forward: video (B, n_step, frame_dim)
    B, N_STEP, FRAME_DIM, HIDDEN, VOCAB = 2, 8, 64, 32, 48
    BOS_ID = 1  # word2index['<BOS>']

    # TODO(synk): training branch (teacher forcing + dropout masks) not implemented;
    # this kernel reproduces the eval/inference branch (dropout = identity).

    key = jax.random.PRNGKey(0)
    k_param, k_video = jax.random.split(key)
    params = init_params(k_param, FRAME_DIM, HIDDEN, VOCAB)
    video = jax.random.normal(k_video, (B, N_STEP, FRAME_DIM), jnp.float32)

    caption_ids = s2vt_forward(video, params, BOS_ID)   # (n_step - 1, B) int32
    caption_ids = jax.block_until_ready(caption_ids)
    assert caption_ids.shape == (N_STEP - 1, B)
    print("KERNEL_OK")
</pallas_src>

<mosaic_0001>
module attributes {stable_mosaic.version = 11 : i64} {
  func.func @_s2vt_kernel(%arg0: i32, %arg1: memref<8x8x128xf32, #tpu.memory_space<vmem>>, %arg2: memref<128x512xf32, #tpu.memory_space<vmem>>, %arg3: memref<1x512xf32, #tpu.memory_space<vmem>>, %arg4: memref<1x512xf32, #tpu.memory_space<vmem>>, %arg5: memref<128x512xf32, #tpu.memory_space<vmem>>, %arg6: memref<128x512xf32, #tpu.memory_space<vmem>>, %arg7: memref<128x512xf32, #tpu.memory_space<vmem>>, %arg8: memref<1x512xf32, #tpu.memory_space<vmem>>, %arg9: memref<128x512xf32, #tpu.memory_space<vmem>>, %arg10: memref<128x128xf32, #tpu.memory_space<vmem>>, %arg11: memref<128x128xf32, #tpu.memory_space<vmem>>, %arg12: memref<1x128xf32, #tpu.memory_space<vmem>>, %arg13: memref<7x8x1xi32, #tpu.memory_space<vmem>>, %arg14: memref<8x8x512xf32, #tpu.memory_space<vmem>>, %arg15: memref<15x8x128xf32, #tpu.memory_space<vmem>>, %arg16: memref<15x8x512xf32, #tpu.memory_space<vmem>>) attributes {dimension_semantics = [#tpu.dimension_semantics<parallel>], iteration_bounds = array<i64: 1>, scalar_prefetch = 0 : i64, scratch_operands = 3 : i64, tpu.core_type = #tpu.core_type<tc>, window_params = [{transform_indices = @transform_0, window_bounds = array<i64: 8, 8, 128>}, {pipeline_mode = #tpu.pipeline_mode<synchronous>, transform_indices = @transform_1, window_bounds = array<i64: 128, 512>}, {pipeline_mode = #tpu.pipeline_mode<synchronous>, transform_indices = @transform_2, window_bounds = array<i64: 1, 512>}, {pipeline_mode = #tpu.pipeline_mode<synchronous>, transform_indices = @transform_3, window_bounds = array<i64: 1, 512>}, {pipeline_mode = #tpu.pipeline_mode<synchronous>, transform_indices = @transform_4, window_bounds = array<i64: 128, 512>}, {pipeline_mode = #tpu.pipeline_mode<synchronous>, transform_indices = @transform_5, window_bounds = array<i64: 128, 512>}, {pipeline_mode = #tpu.pipeline_mode<synchronous>, transform_indices = @transform_6, window_bounds = array<i64: 128, 512>}, {pipeline_mode = #tpu.pipeline_mode<synchronous>, transform_indices = @transform_7, window_bounds = array<i64: 1, 512>}, {pipeline_mode = #tpu.pipeline_mode<synchronous>, transform_indices = @transform_8, window_bounds = array<i64: 128, 512>}, {pipeline_mode = #tpu.pipeline_mode<synchronous>, transform_indices = @transform_9, window_bounds = array<i64: 128, 128>}, {pipeline_mode = #tpu.pipeline_mode<synchronous>, transform_indices = @transform_10, window_bounds = array<i64: 128, 128>}, {pipeline_mode = #tpu.pipeline_mode<synchronous>, transform_indices = @transform_11, window_bounds = array<i64: 1, 128>}, {transform_indices = @transform_12, window_bounds = array<i64: 7, 8, 1>}]} {
    %c0 = arith.constant 0 : index
    %c0_0 = arith.constant 0 : index
    %0 = vector.load %arg5[%c0, %c0_0] : memref<128x512xf32, #tpu.memory_space<vmem>>, vector<128x512xf32>
    %c0_1 = arith.constant 0 : index
    %c0_2 = arith.constant 0 : index
    %1 = vector.load %arg9[%c0_1, %c0_2] : memref<128x512xf32, #tpu.memory_space<vmem>>, vector<128x512xf32>
    %c0_3 = arith.constant 0 : index
    %c0_4 = arith.constant 0 : index
    %2 = vector.load %arg6[%c0_3, %c0_4] : memref<128x512xf32, #tpu.memory_space<vmem>>, vector<128x512xf32>
    %c0_5 = arith.constant 0 : index
    %c0_6 = arith.constant 0 : index
    %3 = vector.load %arg10[%c0_5, %c0_6] : memref<128x128xf32, #tpu.memory_space<vmem>>, vector<128x128xf32>
    %c0_7 = arith.constant 0 : index
    %c0_8 = arith.constant 0 : index
    %4 = vector.load %arg11[%c0_7, %c0_8] : memref<128x128xf32, #tpu.memory_space<vmem>>, vector<128x128xf32>
    %c0_9 = arith.constant 0 : index
    %c0_10 = arith.constant 0 : index
    %5 = vector.load %arg12[%c0_9, %c0_10] : memref<1x128xf32, #tpu.memory_space<vmem>>, vector<1x128xf32>
    %c0_11 = arith.constant 0 : index
    %c0_12 = arith.constant 0 : index
    %c0_13 = arith.constant 0 : index
    %6 = vector.load %arg1[%c0_11, %c0_12, %c0_13] : memref<8x8x128xf32, #tpu.memory_space<vmem>>, vector<8x8x128xf32>
    %7 = vector.shape_cast %6 : vector<8x8x128xf32> to vector<64x128xf32>
    %c0_14 = arith.constant 0 : index
    %c0_15 = arith.constant 0 : index
    %8 = vector.load %arg2[%c0_14, %c0_15] : memref<128x512xf32, #tpu.memory_space<vmem>>, vector<128x512xf32>
    %cst = arith.constant dense<0.000000e+00> : vector<64x512xf32>
    %9 = tpu.matmul %7, %8, %cst {dimension_numbers = #tpu.dot_dimension_numbers<[1], [0], [0], [1], [0, 0, 1, 1], [], []>} : vector<64x128xf32>, vector<128x512xf32>, vector<64x512xf32> -> vector<64x512xf32>
    %c0_16 = arith.constant 0 : index
    %c0_17 = arith.constant 0 : index
    %10 = vector.load %arg3[%c0_16, %c0_17] : memref<1x512xf32, #tpu.memory_space<vmem>>, vector<1x512xf32>
    %11 = vector.broadcast %10 : vector<1x512xf32> to vector<64x512xf32>
    %12 = arith.addf %9, %11 : vector<64x512xf32>
    %13 = vector.shape_cast %12 : vector<64x512xf32> to vector<8x8x512xf32>
    %c0_18 = arith.constant 0 : index
    %c0_19 = arith.constant 0 : index
    %c0_20 = arith.constant 0 : index
    %14 = vector.load %arg14[%c0_18, %c0_19, %c0_20] : memref<8x8x512xf32, #tpu.memory_space<vmem>>, vector<8x8x512xf32>
    tpu.vector_store %arg14[%c0_18, %c0_19, %c0_20], %13 {strides = array<i32>} : memref<8x8x512xf32, #tpu.memory_space<vmem>>, vector<8x8x512xf32>,
    %cst_21 = arith.constant 0.000000e+00 : f32
    %15 = vector.broadcast %cst_21 : f32 to vector<8x128xf32>
    %c0_i32 = arith.constant 0 : i32
    %c8_i32 = arith.constant 8 : i32
    %16 = arith.addi %c0_i32, %c8_i32 : i32
    %c1_i32 = arith.constant 1 : i32
    %17:2 = scf.for %arg17 = %c0_i32 to %16 step %c1_i32 iter_args(%arg18 = %15, %arg19 = %15) -> (vector<8x128xf32>, vector<8x128xf32>)  : i32 {
      %85 = arith.index_cast %arg17 : i32 to index
      %c0_59 = arith.constant 0 : index
      %c0_60 = arith.constant 0 : index
      %86 = vector.load %arg14[%85, %c0_59, %c0_60] : memref<8x8x512xf32, #tpu.memory_space<vmem>>, vector<1x8x512xf32>
      %87 = vector.shape_cast %86 : vector<1x8x512xf32> to vector<8x512xf32>
      %cst_61 = arith.constant dense<0.000000e+00> : vector<8x512xf32>
      %88 = tpu.matmul %arg18, %0, %cst_61 {dimension_numbers = #tpu.dot_dimension_numbers<[1], [0], [0], [1], [0, 0, 1, 1], [], []>} : vector<8x128xf32>, vector<128x512xf32>, vector<8x512xf32> -> vector<8x512xf32>
      %89 = arith.addf %87, %88 : vector<8x512xf32>
      %90 = vector.extract_strided_slice %89 {offsets = [0, 0], sizes = [8, 128], strides = [1, 1]} : vector<8x512xf32> to vector<8x128xf32>
      %91 = arith.negf %90 : vector<8x128xf32>
      %92 = math.exp %91 : vector<8x128xf32>
      %cst_62 = arith.constant 1.000000e+00 : f32
      %93 = vector.broadcast %cst_62 : f32 to vector<8x128xf32>
      %94 = arith.addf %93, %92 : vector<8x128xf32>
      %95 = arith.divf %93, %94 : vector<8x128xf32>
      %96 = vector.extract_strided_slice %89 {offsets = [0, 128], sizes = [8, 128], strides = [1, 1]} : vector<8x512xf32> to vector<8x128xf32>
      %97 = arith.negf %96 : vector<8x128xf32>
      %98 = math.exp %97 : vector<8x128xf32>
      %cst_63 = arith.constant 1.000000e+00 : f32
      %99 = vector.broadcast %cst_63 : f32 to vector<8x128xf32>
      %100 = arith.addf %99, %98 : vector<8x128xf32>
      %101 = arith.divf %99, %100 : vector<8x128xf32>
      %102 = vector.extract_strided_slice %89 {offsets = [0, 256], sizes = [8, 128], strides = [1, 1]} : vector<8x512xf32> to vector<8x128xf32>
      %103 = math.tanh %102 : vector<8x128xf32>
      %104 = vector.extract_strided_slice %89 {offsets = [0, 384], sizes = [8, 128], strides = [1, 1]} : vector<8x512xf32> to vector<8x128xf32>
      %105 = arith.negf %104 : vector<8x128xf32>
      %106 = math.exp %105 : vector<8x128xf32>
      %cst_64 = arith.constant 1.000000e+00 : f32
      %107 = vector.broadcast %cst_64 : f32 to vector<8x128xf32>
      %108 = arith.addf %107, %106 : vector<8x128xf32>
      %109 = arith.divf %107, %108 : vector<8x128xf32>
      %110 = arith.mulf %101, %arg19 : vector<8x128xf32>
      %111 = arith.mulf %95, %103 : vector<8x128xf32>
      %112 = arith.addf %110, %111 : vector<8x128xf32>
      %113 = math.tanh %112 : vector<8x128xf32>
      %114 = arith.mulf %109, %113 : vector<8x128xf32>
      %115 = arith.index_cast %arg17 : i32 to index
      %c0_65 = arith.constant 0 : index
      %c0_66 = arith.constant 0 : index
      %116 = vector.load %arg15[%115, %c0_65, %c0_66] : memref<15x8x128xf32, #tpu.memory_space<vmem>>, vector<1x8x128xf32>
      %117 = vector.shape_cast %116 : vector<1x8x128xf32> to vector<8x128xf32>
      %118 = vector.shape_cast %114 : vector<8x128xf32> to vector<1x8x128xf32>
      tpu.vector_store %arg15[%115, %c0_65, %c0_66], %118 {strides = array<i32>} : memref<15x8x128xf32, #tpu.memory_space<vmem>>, vector<1x8x128xf32>,
      scf.yield %114, %112 : vector<8x128xf32>, vector<8x128xf32>
    }
    %c8_i32_22 = arith.constant 8 : i32
    %c0_23 = arith.constant 0 : index
    %c0_24 = arith.constant 0 : index
    %18 = vector.load %arg4[%c0_23, %c0_24] : memref<1x512xf32, #tpu.memory_space<vmem>>, vector<1x512xf32>
    %19 = vector.shape_cast %18 : vector<1x512xf32> to vector<1x512xf32>
    %20 = vector.broadcast %19 : vector<1x512xf32> to vector<8x512xf32>
    %c8_i32_25 = arith.constant 8 : i32
    %c7_i32 = arith.constant 7 : i32
    %21 = arith.addi %c8_i32_25, %c7_i32 : i32
    %c1_i32_26 = arith.constant 1 : i32
    %22:2 = scf.for %arg17 = %c8_i32_25 to %21 step %c1_i32_26 iter_args(%arg18 = %17#0, %arg19 = %17#1) -> (vector<8x128xf32>, vector<8x128xf32>)  : i32 {
      %cst_59 = arith.constant dense<0.000000e+00> : vector<8x512xf32>
      %85 = tpu.matmul %arg18, %0, %cst_59 {dimension_numbers = #tpu.dot_dimension_numbers<[1], [0], [0], [1], [0, 0, 1, 1], [], []>} : vector<8x128xf32>, vector<128x512xf32>, vector<8x512xf32> -> vector<8x512xf32>
      %86 = arith.addf %20, %85 : vector<8x512xf32>
      %87 = vector.extract_strided_slice %86 {offsets = [0, 0], sizes = [8, 128], strides = [1, 1]} : vector<8x512xf32> to vector<8x128xf32>
      %88 = arith.negf %87 : vector<8x128xf32>
      %89 = math.exp %88 : vector<8x128xf32>
      %cst_60 = arith.constant 1.000000e+00 : f32
      %90 = vector.broadcast %cst_60 : f32 to vector<8x128xf32>
      %91 = arith.addf %90, %89 : vector<8x128xf32>
      %92 = arith.divf %90, %91 : vector<8x128xf32>
      %93 = vector.extract_strided_slice %86 {offsets = [0, 128], sizes = [8, 128], strides = [1, 1]} : vector<8x512xf32> to vector<8x128xf32>
      %94 = arith.negf %93 : vector<8x128xf32>
      %95 = math.exp %94 : vector<8x128xf32>
      %cst_61 = arith.constant 1.000000e+00 : f32
      %96 = vector.broadcast %cst_61 : f32 to vector<8x128xf32>
      %97 = arith.addf %96, %95 : vector<8x128xf32>
      %98 = arith.divf %96, %97 : vector<8x128xf32>
      %99 = vector.extract_strided_slice %86 {offsets = [0, 256], sizes = [8, 128], strides = [1, 1]} : vector<8x512xf32> to vector<8x128xf32>
      %100 = math.tanh %99 : vector<8x128xf32>
      %101 = vector.extract_strided_slice %86 {offsets = [0, 384], sizes = [8, 128], strides = [1, 1]} : vector<8x512xf32> to vector<8x128xf32>
      %102 = arith.negf %101 : vector<8x128xf32>
      %103 = math.exp %102 : vector<8x128xf32>
      %cst_62 = arith.constant 1.000000e+00 : f32
      %104 = vector.broadcast %cst_62 : f32 to vector<8x128xf32>
      %105 = arith.addf %104, %103 : vector<8x128xf32>
      %106 = arith.divf %104, %105 : vector<8x128xf32>
      %107 = arith.mulf %98, %arg19 : vector<8x128xf32>
      %108 = arith.mulf %92, %100 : vector<8x128xf32>
      %109 = arith.addf %107, %108 : vector<8x128xf32>
      %110 = math.tanh %109 : vector<8x128xf32>
      %111 = arith.mulf %106, %110 : vector<8x128xf32>
      %112 = arith.index_cast %arg17 : i32 to index
      %c0_63 = arith.constant 0 : index
      %c0_64 = arith.constant 0 : index
      %113 = vector.load %arg15[%112, %c0_63, %c0_64] : memref<15x8x128xf32, #tpu.memory_space<vmem>>, vector<1x8x128xf32>
      %114 = vector.shape_cast %113 : vector<1x8x128xf32> to vector<8x128xf32>
      %115 = vector.shape_cast %111 : vector<8x128xf32> to vector<1x8x128xf32>
      tpu.vector_store %arg15[%112, %c0_63, %c0_64], %115 {strides = array<i32>} : memref<15x8x128xf32, #tpu.memory_space<vmem>>, vector<1x8x128xf32>,
      scf.yield %111, %109 : vector<8x128xf32>, vector<8x128xf32>
    }
    %c7_i32_27 = arith.constant 7 : i32
    %c0_28 = arith.constant 0 : index
    %c0_29 = arith.constant 0 : index
    %c0_30 = arith.constant 0 : index
    %23 = vector.load %arg15[%c0_28, %c0_29, %c0_30] : memref<15x8x128xf32, #tpu.memory_space<vmem>>, vector<15x8x128xf32>
    %24 = vector.shape_cast %23 : vector<15x8x128xf32> to vector<120x128xf32>
    %c0_31 = arith.constant 0 : index
    %c0_32 = arith.constant 0 : index
    %25 = vector.load %arg7[%c0_31, %c0_32] : memref<128x512xf32, #tpu.memory_space<vmem>>, vector<128x512xf32>
    %cst_33 = arith.constant dense<0.000000e+00> : vector<120x512xf32>
    %26 = tpu.matmul %24, %25, %cst_33 {dimension_numbers = #tpu.dot_dimension_numbers<[1], [0], [0], [1], [0, 0, 1, 1], [], []>} : vector<120x128xf32>, vector<128x512xf32>, vector<120x512xf32> -> vector<120x512xf32>
    %c0_34 = arith.constant 0 : index
    %c0_35 = arith.constant 0 : index
    %27 = vector.load %arg8[%c0_34, %c0_35] : memref<1x512xf32, #tpu.memory_space<vmem>>, vector<1x512xf32>
    %28 = vector.broadcast %27 : vector<1x512xf32> to vector<120x512xf32>
    %29 = arith.addf %26, %28 : vector<120x512xf32>
    %30 = vector.shape_cast %29 : vector<120x512xf32> to vector<15x8x512xf32>
    %c0_36 = arith.constant 0 : index
    %c0_37 = arith.constant 0 : index
    %c0_38 = arith.constant 0 : index
    %31 = vector.load %arg16[%c0_36, %c0_37, %c0_38] : memref<15x8x512xf32, #tpu.memory_space<vmem>>, vector<15x8x512xf32>
    tpu.vector_store %arg16[%c0_36, %c0_37, %c0_38], %30 {strides = array<i32>} : memref<15x8x512xf32, #tpu.memory_space<vmem>>, vector<15x8x512xf32>,
    %c0_i32_39 = arith.constant 0 : i32
    %c8_i32_40 = arith.constant 8 : i32
    %32 = arith.addi %c0_i32_39, %c8_i32_40 : i32
    %c1_i32_41 = arith.constant 1 : i32
    %33:2 = scf.for %arg17 = %c0_i32_39 to %32 step %c1_i32_41 iter_args(%arg18 = %15, %arg19 = %15) -> (vector<8x128xf32>, vector<8x128xf32>)  : i32 {
      %85 = arith.index_cast %arg17 : i32 to index
      %c0_59 = arith.constant 0 : index
      %c0_60 = arith.constant 0 : index
      %86 = vector.load %arg16[%85, %c0_59, %c0_60] : memref<15x8x512xf32, #tpu.memory_space<vmem>>, vector<1x8x512xf32>
      %87 = vector.shape_cast %86 : vector<1x8x512xf32> to vector<8x512xf32>
      %cst_61 = arith.constant dense<0.000000e+00> : vector<8x512xf32>
      %88 = tpu.matmul %arg18, %1, %cst_61 {dimension_numbers = #tpu.dot_dimension_numbers<[1], [0], [0], [1], [0, 0, 1, 1], [], []>} : vector<8x128xf32>, vector<128x512xf32>, vector<8x512xf32> -> vector<8x512xf32>
      %89 = arith.addf %87, %88 : vector<8x512xf32>
      %90 = vector.extract_strided_slice %89 {offsets = [0, 0], sizes = [8, 128], strides = [1, 1]} : vector<8x512xf32> to vector<8x128xf32>
      %91 = arith.negf %90 : vector<8x128xf32>
      %92 = math.exp %91 : vector<8x128xf32>
      %cst_62 = arith.constant 1.000000e+00 : f32
      %93 = vector.broadcast %cst_62 : f32 to vector<8x128xf32>
      %94 = arith.addf %93, %92 : vector<8x128xf32>
      %95 = arith.divf %93, %94 : vector<8x128xf32>
      %96 = vector.extract_strided_slice %89 {offsets = [0, 128], sizes = [8, 128], strides = [1, 1]} : vector<8x512xf32> to vector<8x128xf32>
      %97 = arith.negf %96 : vector<8x128xf32>
      %98 = math.exp %97 : vector<8x128xf32>
      %cst_63 = arith.constant 1.000000e+00 : f32
      %99 = vector.broadcast %cst_63 : f32 to vector<8x128xf32>
      %100 = arith.addf %99, %98 : vector<8x128xf32>
      %101 = arith.divf %99, %100 : vector<8x128xf32>
      %102 = vector.extract_strided_slice %89 {offsets = [0, 256], sizes = [8, 128], strides = [1, 1]} : vector<8x512xf32> to vector<8x128xf32>
      %103 = math.tanh %102 : vector<8x128xf32>
      %104 = vector.extract_strided_slice %89 {offsets = [0, 384], sizes = [8, 128], strides = [1, 1]} : vector<8x512xf32> to vector<8x128xf32>
      %105 = arith.negf %104 : vector<8x128xf32>
      %106 = math.exp %105 : vector<8x128xf32>
      %cst_64 = arith.constant 1.000000e+00 : f32
      %107 = vector.broadcast %cst_64 : f32 to vector<8x128xf32>
      %108 = arith.addf %107, %106 : vector<8x128xf32>
      %109 = arith.divf %107, %108 : vector<8x128xf32>
      %110 = arith.mulf %101, %arg19 : vector<8x128xf32>
      %111 = arith.mulf %95, %103 : vector<8x128xf32>
      %112 = arith.addf %110, %111 : vector<8x128xf32>
      %113 = math.tanh %112 : vector<8x128xf32>
      %114 = arith.mulf %109, %113 : vector<8x128xf32>
      scf.yield %114, %112 : vector<8x128xf32>, vector<8x128xf32>
    }
    %c8_i32_42 = arith.constant 8 : i32
    %34 = tpu.iota {dimensions = array<i32: 1>} : vector<8x128xi32>
    %35 = vector.extract_strided_slice %3 {offsets = [1, 0], sizes = [1, 128], strides = [1, 1]} : vector<128x128xf32> to vector<1x128xf32>
    %36 = vector.shape_cast %35 : vector<1x128xf32> to vector<1x128xf32>
    %37 = vector.broadcast %36 : vector<1x128xf32> to vector<8x128xf32>
    %cst_43 = arith.constant dense<0.000000e+00> : vector<8x512xf32>
    %38 = tpu.matmul %37, %2, %cst_43 {dimension_numbers = #tpu.dot_dimension_numbers<[1], [0], [0], [1], [0, 0, 1, 1], [], []>} : vector<8x128xf32>, vector<128x512xf32>, vector<8x512xf32> -> vector<8x512xf32>
    %c8 = arith.constant 8 : index
    %c0_44 = arith.constant 0 : index
    %c0_45 = arith.constant 0 : index
    %39 = vector.load %arg16[%c8, %c0_44, %c0_45] : memref<15x8x512xf32, #tpu.memory_space<vmem>>, vector<1x8x512xf32>
    %40 = vector.shape_cast %39 : vector<1x8x512xf32> to vector<8x512xf32>
    %41 = arith.addf %38, %40 : vector<8x512xf32>
    %cst_46 = arith.constant dense<0.000000e+00> : vector<8x512xf32>
    %42 = tpu.matmul %33#0, %1, %cst_46 {dimension_numbers = #tpu.dot_dimension_numbers<[1], [0], [0], [1], [0, 0, 1, 1], [], []>} : vector<8x128xf32>, vector<128x512xf32>, vector<8x512xf32> -> vector<8x512xf32>
    %43 = arith.addf %41, %42 : vector<8x512xf32>
    %44 = vector.extract_strided_slice %43 {offsets = [0, 0], sizes = [8, 128], strides = [1, 1]} : vector<8x512xf32> to vector<8x128xf32>
    %45 = arith.negf %44 : vector<8x128xf32>
    %46 = math.exp %45 : vector<8x128xf32>
    %cst_47 = arith.constant 1.000000e+00 : f32
    %47 = vector.broadcast %cst_47 : f32 to vector<8x128xf32>
    %48 = arith.addf %47, %46 : vector<8x128xf32>
    %49 = arith.divf %47, %48 : vector<8x128xf32>
    %50 = vector.extract_strided_slice %43 {offsets = [0, 128], sizes = [8, 128], strides = [1, 1]} : vector<8x512xf32> to vector<8x128xf32>
    %51 = arith.negf %50 : vector<8x128xf32>
    %52 = math.exp %51 : vector<8x128xf32>
    %cst_48 = arith.constant 1.000000e+00 : f32
    %53 = vector.broadcast %cst_48 : f32 to vector<8x128xf32>
    %54 = arith.addf %53, %52 : vector<8x128xf32>
    %55 = arith.divf %53, %54 : vector<8x128xf32>
    %56 = vector.extract_strided_slice %43 {offsets = [0, 256], sizes = [8, 128], strides = [1, 1]} : vector<8x512xf32> to vector<8x128xf32>
    %57 = math.tanh %56 : vector<8x128xf32>
    %58 = vector.extract_strided_slice %43 {offsets = [0, 384], sizes = [8, 128], strides = [1, 1]} : vector<8x512xf32> to vector<8x128xf32>
    %59 = arith.negf %58 : vector<8x128xf32>
    %60 = math.exp %59 : vector<8x128xf32>
    %cst_49 = arith.constant 1.000000e+00 : f32
    %61 = vector.broadcast %cst_49 : f32 to vector<8x128xf32>
    %62 = arith.addf %61, %60 : vector<8x128xf32>
    %63 = arith.divf %61, %62 : vector<8x128xf32>
    %64 = arith.mulf %55, %33#1 : vector<8x128xf32>
    %65 = arith.mulf %49, %57 : vector<8x128xf32>
    %66 = arith.addf %64, %65 : vector<8x128xf32>
    %67 = math.tanh %66 : vector<8x128xf32>
    %68 = arith.mulf %63, %67 : vector<8x128xf32>
    %cst_50 = arith.constant dense<0.000000e+00> : vector<8x128xf32>
    %69 = tpu.matmul %68, %4, %cst_50 {dimension_numbers = #tpu.dot_dimension_numbers<[1], [0], [0], [1], [0, 0, 1, 1], [], []>} : vector<8x128xf32>, vector<128x128xf32>, vector<8x128xf32> -> vector<8x128xf32>
    %70 = vector.broadcast %5 : vector<1x128xf32> to vector<8x128xf32>
    %71 = arith.addf %69, %70 : vector<8x128xf32>
    %cst_51 = arith.constant dense<0xFF800000> : vector<8xf32>
    %72 = vector.multi_reduction <maximumf>, %71, %cst_51 [1] : vector<8x128xf32> to vector<8xf32>
    %73 = vector.shape_cast %72 : vector<8xf32> to vector<8x1xf32>
    %74 = vector.broadcast %73 : vector<8x1xf32> to vector<8x128xf32>
    %75 = arith.cmpf oeq, %71, %74 : vector<8x128xf32>
    %c128_i32 = arith.constant 128 : i32
    %76 = vector.broadcast %c128_i32 : i32 to vector<8x128xi32>
    %77 = arith.select %75, %34, %76 : vector<8x128xi1>, vector<8x128xi32>
    %cst_52 = arith.constant dense<2147483647> : vector<8xi32>
    %78 = vector.multi_reduction <minsi>, %77, %cst_52 [1] : vector<8x128xi32> to vector<8xi32>
    %79 = vector.shape_cast %78 : vector<8xi32> to vector<8x1xi32>
    %c0_53 = arith.constant 0 : index
    %c0_54 = arith.constant 0 : index
    %c0_55 = arith.constant 0 : index
    %80 = vector.load %arg13[%c0_53, %c0_54, %c0_55] : memref<7x8x1xi32, #tpu.memory_space<vmem>>, vector<1x8x1xi32>
    %81 = vector.shape_cast %80 : vector<1x8x1xi32> to vector<8x1xi32>
    %82 = vector.shape_cast %79 : vector<8x1xi32> to vector<1x8x1xi32>
    tpu.vector_store %arg13[%c0_53, %c0_54, %c0_55], %82 {strides = array<i32>} : memref<7x8x1xi32, #tpu.memory_space<vmem>>, vector<1x8x1xi32>,
    %c1_i32_56 = arith.constant 1 : i32
    %c6_i32 = arith.constant 6 : i32
    %83 = arith.addi %c1_i32_56, %c6_i32 : i32
    %c1_i32_57 = arith.constant 1 : i32
    %84:3 = scf.for %arg17 = %c1_i32_56 to %83 step %c1_i32_57 iter_args(%arg18 = %79, %arg19 = %68, %arg20 = %66) -> (vector<8x1xi32>, vector<8x128xf32>, vector<8x128xf32>)  : i32 {
      %85 = vector.broadcast %arg18 : vector<8x1xi32> to vector<8x128xi32>
      %86 = arith.cmpi eq, %85, %34 : vector<8x128xi32>
      %87 = arith.extui %86 : vector<8x128xi1> to vector<8x128xi32>
      %88 = arith.sitofp %87 : vector<8x128xi32> to vector<8x128xf32>
      %cst_59 = arith.constant dense<0.000000e+00> : vector<8x128xf32>
      %89 = tpu.matmul %88, %3, %cst_59 {dimension_numbers = #tpu.dot_dimension_numbers<[1], [0], [0], [1], [0, 0, 1, 1], [], []>} : vector<8x128xf32>, vector<128x128xf32>, vector<8x128xf32> -> vector<8x128xf32>
      %cst_60 = arith.constant dense<0.000000e+00> : vector<8x512xf32>
      %90 = tpu.matmul %89, %2, %cst_60 {dimension_numbers = #tpu.dot_dimension_numbers<[1], [0], [0], [1], [0, 0, 1, 1], [], []>} : vector<8x128xf32>, vector<128x512xf32>, vector<8x512xf32> -> vector<8x512xf32>
      %c8_i32_61 = arith.constant 8 : i32
      %91 = arith.addi %c8_i32_61, %arg17 : i32
      %92 = arith.index_cast %91 : i32 to index
      %c0_62 = arith.constant 0 : index
      %c0_63 = arith.constant 0 : index
      %93 = vector.load %arg16[%92, %c0_62, %c0_63] : memref<15x8x512xf32, #tpu.memory_space<vmem>>, vector<1x8x512xf32>
      %94 = vector.shape_cast %93 : vector<1x8x512xf32> to vector<8x512xf32>
      %95 = arith.addf %90, %94 : vector<8x512xf32>
      %cst_64 = arith.constant dense<0.000000e+00> : vector<8x512xf32>
      %96 = tpu.matmul %arg19, %1, %cst_64 {dimension_numbers = #tpu.dot_dimension_numbers<[1], [0], [0], [1], [0, 0, 1, 1], [], []>} : vector<8x128xf32>, vector<128x512xf32>, vector<8x512xf32> -> vector<8x512xf32>
      %97 = arith.addf %95, %96 : vector<8x512xf32>
      %98 = vector.extract_strided_slice %97 {offsets = [0, 0], sizes = [8, 128], strides = [1, 1]} : vector<8x512xf32> to vector<8x128xf32>
      %99 = arith.negf %98 : vector<8x128xf32>
      %100 = math.exp %99 : vector<8x128xf32>
      %cst_65 = arith.constant 1.000000e+00 : f32
      %101 = vector.broadcast %cst_65 : f32 to vector<8x128xf32>
      %102 = arith.addf %101, %100 : vector<8x128xf32>
      %103 = arith.divf %101, %102 : vector<8x128xf32>
      %104 = vector.extract_strided_slice %97 {offsets = [0, 128], sizes = [8, 128], strides = [1, 1]} : vector<8x512xf32> to vector<8x128xf32>
      %105 = arith.negf %104 : vector<8x128xf32>
      %106 = math.exp %105 : vector<8x128xf32>
      %cst_66 = arith.constant 1.000000e+00 : f32
      %107 = vector.broadcast %cst_66 : f32 to vector<8x128xf32>
      %108 = arith.addf %107, %106 : vector<8x128xf32>
      %109 = arith.divf %107, %108 : vector<8x128xf32>
      %110 = vector.extract_strided_slice %97 {offsets = [0, 256], sizes = [8, 128], strides = [1, 1]} : vector<8x512xf32> to vector<8x128xf32>
      %111 = math.tanh %110 : vector<8x128xf32>
      %112 = vector.extract_strided_slice %97 {offsets = [0, 384], sizes = [8, 128], strides = [1, 1]} : vector<8x512xf32> to vector<8x128xf32>
      %113 = arith.negf %112 : vector<8x128xf32>
      %114 = math.exp %113 : vector<8x128xf32>
      %cst_67 = arith.constant 1.000000e+00 : f32
      %115 = vector.broadcast %cst_67 : f32 to vector<8x128xf32>
      %116 = arith.addf %115, %114 : vector<8x128xf32>
      %117 = arith.divf %115, %116 : vector<8x128xf32>
      %118 = arith.mulf %109, %arg20 : vector<8x128xf32>
      %119 = arith.mulf %103, %111 : vector<8x128xf32>
      %120 = arith.addf %118, %119 : vector<8x128xf32>
      %121 = math.tanh %120 : vector<8x128xf32>
      %122 = arith.mulf %117, %121 : vector<8x128xf32>
      %cst_68 = arith.constant dense<0.000000e+00> : vector<8x128xf32>
      %123 = tpu.matmul %122, %4, %cst_68 {dimension_numbers = #tpu.dot_dimension_numbers<[1], [0], [0], [1], [0, 0, 1, 1], [], []>} : vector<8x128xf32>, vector<128x128xf32>, vector<8x128xf32> -> vector<8x128xf32>
      %124 = vector.broadcast %5 : vector<1x128xf32> to vector<8x128xf32>
      %125 = arith.addf %123, %124 : vector<8x128xf32>
      %cst_69 = arith.constant dense<0xFF800000> : vector<8xf32>
      %126 = vector.multi_reduction <maximumf>, %125, %cst_69 [1] : vector<8x128xf32> to vector<8xf32>
      %127 = vector.shape_cast %126 : vector<8xf32> to vector<8x1xf32>
      %128 = vector.broadcast %127 : vector<8x1xf32> to vector<8x128xf32>
      %129 = arith.cmpf oeq, %125, %128 : vector<8x128xf32>
      %c128_i32_70 = arith.constant 128 : i32
      %130 = vector.broadcast %c128_i32_70 : i32 to vector<8x128xi32>
      %131 = arith.select %129, %34, %130 : vector<8x128xi1>, vector<8x128xi32>
      %cst_71 = arith.constant dense<2147483647> : vector<8xi32>
      %132 = vector.multi_reduction <minsi>, %131, %cst_71 [1] : vector<8x128xi32> to vector<8xi32>
      %133 = vector.shape_cast %132 : vector<8xi32> to vector<8x1xi32>
      %134 = arith.index_cast %arg17 : i32 to index
      %c0_72 = arith.constant 0 : index
      %c0_73 = arith.constant 0 : index
      %135 = vector.load %arg13[%134, %c0_72, %c0_73] : memref<7x8x1xi32, #tpu.memory_space<vmem>>, vector<1x8x1xi32>
      %136 = vector.shape_cast %135 : vector<1x8x1xi32> to vector<8x1xi32>
      %137 = vector.shape_cast %133 : vector<8x1xi32> to vector<1x8x1xi32>
      tpu.vector_store %arg13[%134, %c0_72, %c0_73], %137 {strides = array<i32>} : memref<7x8x1xi32, #tpu.memory_space<vmem>>, vector<1x8x1xi32>,
      scf.yield %133, %122, %120 : vector<8x1xi32>, vector<8x128xf32>, vector<8x128xf32>
    }
    %c6_i32_58 = arith.constant 6 : i32
    return
  }
  func.func @transform_0(%arg0: i32) -> (i32, i32, i32) {
    %c0_i32 = arith.constant 0 : i32
    %c0_i32_0 = arith.constant 0 : i32
    %c0_i32_1 = arith.constant 0 : i32
    return %c0_i32, %arg0, %c0_i32_0 : i32, i32, i32
  }
  func.func @transform_1(%arg0: i32) -> (i32, i32) {
    %c0_i32 = arith.constant 0 : i32
    %c0_i32_0 = arith.constant 0 : i32
    %c0_i32_1 = arith.constant 0 : i32
    return %c0_i32, %c0_i32_0 : i32, i32
  }
  func.func @transform_2(%arg0: i32) -> (i32, i32) {
    %c0_i32 = arith.constant 0 : i32
    %c0_i32_0 = arith.constant 0 : i32
    %c0_i32_1 = arith.constant 0 : i32
    return %c0_i32, %c0_i32_0 : i32, i32
  }
  func.func @transform_3(%arg0: i32) -> (i32, i32) {
    %c0_i32 = arith.constant 0 : i32
    %c0_i32_0 = arith.constant 0 : i32
    %c0_i32_1 = arith.constant 0 : i32
    return %c0_i32, %c0_i32_0 : i32, i32
  }
  func.func @transform_4(%arg0: i32) -> (i32, i32) {
    %c0_i32 = arith.constant 0 : i32
    %c0_i32_0 = arith.constant 0 : i32
    %c0_i32_1 = arith.constant 0 : i32
    return %c0_i32, %c0_i32_0 : i32, i32
  }
  func.func @transform_5(%arg0: i32) -> (i32, i32) {
    %c0_i32 = arith.constant 0 : i32
    %c0_i32_0 = arith.constant 0 : i32
    %c0_i32_1 = arith.constant 0 : i32
    return %c0_i32, %c0_i32_0 : i32, i32
  }
  func.func @transform_6(%arg0: i32) -> (i32, i32) {
    %c0_i32 = arith.constant 0 : i32
    %c0_i32_0 = arith.constant 0 : i32
    %c0_i32_1 = arith.constant 0 : i32
    return %c0_i32, %c0_i32_0 : i32, i32
  }
  func.func @transform_7(%arg0: i32) -> (i32, i32) {
    %c0_i32 = arith.constant 0 : i32
    %c0_i32_0 = arith.constant 0 : i32
    %c0_i32_1 = arith.constant 0 : i32
    return %c0_i32, %c0_i32_0 : i32, i32
  }
  func.func @transform_8(%arg0: i32) -> (i32, i32) {
    %c0_i32 = arith.constant 0 : i32
    %c0_i32_0 = arith.constant 0 : i32
    %c0_i32_1 = arith.constant 0 : i32
    return %c0_i32, %c0_i32_0 : i32, i32
  }
  func.func @transform_9(%arg0: i32) -> (i32, i32) {
    %c0_i32 = arith.constant 0 : i32
    %c0_i32_0 = arith.constant 0 : i32
    %c0_i32_1 = arith.constant 0 : i32
    return %c0_i32, %c0_i32_0 : i32, i32
  }
  func.func @transform_10(%arg0: i32) -> (i32, i32) {
    %c0_i32 = arith.constant 0 : i32
    %c0_i32_0 = arith.constant 0 : i32
    %c0_i32_1 = arith.constant 0 : i32
    return %c0_i32, %c0_i32_0 : i32, i32
  }
  func.func @transform_11(%arg0: i32) -> (i32, i32) {
    %c0_i32 = arith.constant 0 : i32
    %c0_i32_0 = arith.constant 0 : i32
    %c0_i32_1 = arith.constant 0 : i32
    return %c0_i32, %c0_i32_0 : i32, i32
  }
  func.func @transform_12(%arg0: i32) -> (i32, i32, i32) {
    %c0_i32 = arith.constant 0 : i32
    %c0_i32_0 = arith.constant 0 : i32
    %c0_i32_1 = arith.constant 0 : i32
    return %c0_i32, %arg0, %c0_i32_0 : i32, i32, i32
  }
}

</mosaic_0001>

<llo_original>
// kernel: tpu_custom_call.1
$region0: #{tpu_custom_call.1}
  #allocation0 [shape = 'u32[]', space=smem, size = 0x4, offset = 0x4, fixed_abs, tag = 'smem constant byte address 0x4 - core index']
  #allocation1 [shape = 'u32[144,128]{1,0:T(1,128)}', space=vmem, size = 0x12000, scoped, tag = 'internal scratch']
  #allocation2 [shape = 'f32[8,8,512]{2,1,0:T(8,128)}', space=vmem, size = 0x20000, scoped, tag = 'scratch operand']
  #allocation3 [shape = 'f32[15,8,128]{2,1,0:T(8,128)}', space=vmem, size = 0xf000, scoped, tag = 'scratch operand']
  #allocation4 [shape = 'f32[15,8,512]{2,1,0:T(8,128)}', space=vmem, size = 0x3c000, scoped, tag = 'scratch operand']
  %s0 = inlined_call_operand.hbm [shape: f32[8,8,128], index: 0, kind: input, shape index: {}]
  %s1 = inlined_call_operand.hbm [shape: f32[128,512], index: 1, kind: input, shape index: {}]
  %s2 = inlined_call_operand.vmem [shape: f32[1,512], index: 2, kind: input, shape index: {}]
  %s3 = inlined_call_operand.vmem [shape: f32[1,512], index: 3, kind: input, shape index: {}]
  %s4 = inlined_call_operand.hbm [shape: f32[128,512], index: 4, kind: input, shape index: {}]
  %s5 = inlined_call_operand.hbm [shape: f32[128,512], index: 5, kind: input, shape index: {}]
  %s6 = inlined_call_operand.hbm [shape: f32[128,512], index: 6, kind: input, shape index: {}]
  %s7 = inlined_call_operand.vmem [shape: f32[1,512], index: 7, kind: input, shape index: {}]
  %s8 = inlined_call_operand.hbm [shape: f32[128,512], index: 8, kind: input, shape index: {}]
  %s9 = inlined_call_operand.hbm [shape: f32[128,128], index: 9, kind: input, shape index: {}]
  %s10 = inlined_call_operand.hbm [shape: f32[128,128], index: 10, kind: input, shape index: {}]
  %s11 = inlined_call_operand.vmem [shape: f32[1,128], index: 11, kind: input, shape index: {}]
  %s12 = inlined_call_operand.vmem [shape: s32[7,8,1], index: 12, kind: output, shape index: {}]
  %s13 = sld [smem:[#allocation0]]
  $region118: #{tpu_custom_call.1} parent=0
    _
  %s15 = ssub.s32 1, %s13
  %s16 = scalar_select 0, %s15, %s13
  $region1: #{tpu_custom_call.1} parent=0
    #allocation5 [shape = 'u8[32768]{0}', space=vmem, size = 0x8000, scoped, tag = 'input window, operand 0, single buffered']
    #allocation6 [shape = 's32[1]{0}', space=sflag, size = 0x4, scoped, tag = 'scoped memory for tpu_custom_call.1']
    #allocation7 [shape = 'u8[262144]{0}', space=vmem, size = 0x40000, scoped, tag = 'input window, operand 1, single buffered']
    #allocation8 [shape = 's32[1]{0}', space=sflag, size = 0x4, scoped, tag = 'scoped memory for tpu_custom_call.1']
    #allocation9 [shape = 'u8[262144]{0}', space=vmem, size = 0x40000, scoped, tag = 'input window, operand 4, single buffered']
    #allocation10 [shape = 'u8[262144]{0}', space=vmem, size = 0x40000, scoped, tag = 'input window, operand 5, single buffered']
    #allocation11 [shape = 's32[1]{0}', space=sflag, size = 0x4, scoped, tag = 'scoped memory for tpu_custom_call.1']
    #allocation12 [shape = 'u8[262144]{0}', space=vmem, size = 0x40000, scoped, tag = 'input window, operand 6, single buffered']
    #allocation13 [shape = 'u8[262144]{0}', space=vmem, size = 0x40000, scoped, tag = 'input window, operand 8, single buffered']
    #allocation14 [shape = 's32[1]{0}', space=sflag, size = 0x4, scoped, tag = 'scoped memory for tpu_custom_call.1']
    #allocation15 [shape = 'u8[65536]{0}', space=vmem, size = 0x10000, scoped, tag = 'input window, operand 9, single buffered']
    #allocation16 [shape = 'u8[65536]{0}', space=vmem, size = 0x10000, scoped, tag = 'input window, operand 10, single buffered']
    #allocation17 [shape = 's32[1]{0}', space=sflag, size = 0x4, scoped, tag = 'scoped memory for tpu_custom_call.1']
    %17 = vsyncpa [#allocation6], 0
    %18 = vsyncpa [#allocation8], 0
    %19 = vsyncpa [#allocation11], 0
    %20 = vsyncpa [#allocation14], 0
    %21 = vsyncpa [#allocation17], 0
    // Predicated region
    $region2: #{tpu_custom_call.1} parent=1 // pred_check
      _
    $region3: #{tpu_custom_call.1} parent=1 // pred_check_branch
      %23 = sbr.rel (0) target = $region5
    $region4: #{tpu_custom_call.1} parent=1 // pred_region
      %s25 = ssub.s32 1024, 1024
      %26 = vsyncadd [#allocation6], %s25
      %s27 = sshll.u32 [#allocation5], 4
      %s28 = int_to_ptr.vmem [resolvable:$true] %s27
      %33 = dma.hbm_to_vmem [thread:$0]  %s0, 1024, %s28, [#allocation6], 128, 128, 8
    $region5: #{tpu_custom_call.1} parent=1 // pred_fallthru
      _
    // Predicated region
    $region6: #{tpu_custom_call.1} parent=1 // pred_check
      _
    $region7: #{tpu_custom_call.1} parent=1 // pred_check_branch
      %35 = sbr.rel (0) target = $region9
    $region8: #{tpu_custom_call.1} parent=1 // pred_region
      %s37 = ssub.s32 8192, 8192
      %38 = vsyncadd [#allocation8], %s37
      %s39 = sshll.u32 [#allocation7], 4
      %s40 = int_to_ptr.vmem [resolvable:$true] %s39
      %45 = dma.hbm_to_vmem [thread:$0]  %s1, 8192, %s40, [#allocation8], 512, 512, 32
    $region9: #{tpu_custom_call.1} parent=1 // pred_fallthru
      _
    // Predicated region
    $region10: #{tpu_custom_call.1} parent=1 // pred_check
      _
    $region11: #{tpu_custom_call.1} parent=1 // pred_check_branch
      %47 = sbr.rel (0) target = $region13
    $region12: #{tpu_custom_call.1} parent=1 // pred_region
      _
    $region13: #{tpu_custom_call.1} parent=1 // pred_fallthru
      _
    // Predicated region
    $region14: #{tpu_custom_call.1} parent=1 // pred_check
      _
    $region15: #{tpu_custom_call.1} parent=1 // pred_check_branch
      %49 = sbr.rel (0) target = $region17
    $region16: #{tpu_custom_call.1} parent=1 // pred_region
      _
    $region17: #{tpu_custom_call.1} parent=1 // pred_fallthru
      _
    // Predicated region
    $region18: #{tpu_custom_call.1} parent=1 // pred_check
      _
    $region19: #{tpu_custom_call.1} parent=1 // pred_check_branch
      %51 = sbr.rel (0) target = $region21
    $region20: #{tpu_custom_call.1} parent=1 // pred_region
      %s53 = ssub.s32 8192, 8192
      %54 = vsyncadd [#allocation8], %s53
      %s55 = sshll.u32 [#allocation9], 4
      %s56 = int_to_ptr.vmem [resolvable:$true] %s55
      %61 = dma.hbm_to_vmem [thread:$0]  %s4, 8192, %s56, [#allocation8], 512, 512, 32
    $region21: #{tpu_custom_call.1} parent=1 // pred_fallthru
      _
    // Predicated region
    $region22: #{tpu_custom_call.1} parent=1 // pred_check
      _
    $region23: #{tpu_custom_call.1} parent=1 // pred_check_branch
      %63 = sbr.rel (0) target = $region25
    $region24: #{tpu_custom_call.1} parent=1 // pred_region
      %s65 = ssub.s32 8192, 8192
      %66 = vsyncadd [#allocation11], %s65
      %s67 = sshll.u32 [#allocation10], 4
      %s68 = int_to_ptr.vmem [resolvable:$true] %s67
      %73 = dma.hbm_to_vmem [thread:$0]  %s5, 8192, %s68, [#allocation11], 512, 512, 32
    $region25: #{tpu_custom_call.1} parent=1 // pred_fallthru
      _
    // Predicated region
    $region26: #{tpu_custom_call.1} parent=1 // pred_check
      _
    $region27: #{tpu_custom_call.1} parent=1 // pred_check_branch
      %75 = sbr.rel (0) target = $region29
    $region28: #{tpu_custom_call.1} parent=1 // pred_region
      %s77 = ssub.s32 8192, 8192
      %78 = vsyncadd [#allocation11], %s77
      %s79 = sshll.u32 [#allocation12], 4
      %s80 = int_to_ptr.vmem [resolvable:$true] %s79
      %85 = dma.hbm_to_vmem [thread:$0]  %s6, 8192, %s80, [#allocation11], 512, 512, 32
    $region29: #{tpu_custom_call.1} parent=1 // pred_fallthru
      _
    // Predicated region
    $region30: #{tpu_custom_call.1} parent=1 // pred_check
      _
    $region31: #{tpu_custom_call.1} parent=1 // pred_check_branch
      %87 = sbr.rel (0) target = $region33
    $region32: #{tpu_custom_call.1} parent=1 // pred_region
      _
    $region33: #{tpu_custom_call.1} parent=1 // pred_fallthru
      _
    // Predicated region
    $region34: #{tpu_custom_call.1} parent=1 // pred_check
      _
    $region35: #{tpu_custom_call.1} parent=1 // pred_check_branch
      %89 = sbr.rel (0) target = $region37
    $region36: #{tpu_custom_call.1} parent=1 // pred_region
      %s91 = ssub.s32 8192, 8192
      %92 = vsyncadd [#allocation14], %s91
      %s93 = sshll.u32 [#allocation13], 4
      %s94 = int_to_ptr.vmem [resolvable:$true] %s93
      %99 = dma.hbm_to_vmem [thread:$0]  %s8, 8192, %s94, [#allocation14], 512, 512, 32
    $region37: #{tpu_custom_call.1} parent=1 // pred_fallthru
      _
    // Predicated region
    $region38: #{tpu_custom_call.1} parent=1 // pred_check
      _
    $region39: #{tpu_custom_call.1} parent=1 // pred_check_branch
      %101 = sbr.rel (0) target = $region41
    $region40: #{tpu_custom_call.1} parent=1 // pred_region
      %s103 = ssub.s32 2048, 2048
      %104 = vsyncadd [#allocation14], %s103
      %s105 = sshll.u32 [#allocation15], 4
      %s106 = int_to_ptr.vmem [resolvable:$true] %s105
      %111 = dma.hbm_to_vmem [thread:$0]  %s9, 2048, %s106, [#allocation14], 128, 128, 8
    $region41: #{tpu_custom_call.1} parent=1 // pred_fallthru
      _
    // Predicated region
    $region42: #{tpu_custom_call.1} parent=1 // pred_check
      _
    $region43: #{tpu_custom_call.1} parent=1 // pred_check_branch
      %113 = sbr.rel (0) target = $region45
    $region44: #{tpu_custom_call.1} parent=1 // pred_region
      %s115 = ssub.s32 2048, 2048
      %116 = vsyncadd [#allocation17], %s115
      %s117 = sshll.u32 [#allocation16], 4
      %s118 = int_to_ptr.vmem [resolvable:$true] %s117
      %123 = dma.hbm_to_vmem [thread:$0]  %s10, 2048, %s118, [#allocation17], 128, 128, 8
    $region45: #{tpu_custom_call.1} parent=1 // pred_fallthru
      _
    // Predicated region
    $region46: #{tpu_custom_call.1} parent=1 // pred_check
      _
    $region47: #{tpu_custom_call.1} parent=1 // pred_check_branch
      %125 = sbr.rel (0) target = $region49
    $region48: #{tpu_custom_call.1} parent=1 // pred_region
      _
    $region49: #{tpu_custom_call.1} parent=1 // pred_fallthru
      _
    // Predicated region
    $region50: #{tpu_custom_call.1} parent=1 // pred_check
      _
    $region51: #{tpu_custom_call.1} parent=1 // pred_check_branch
      %127 = sbr.rel (0) target = $region53
    $region52: #{tpu_custom_call.1} parent=1 // pred_region
      %128 = dma.done [#allocation6], 1024
    $region53: #{tpu_custom_call.1} parent=1 // pred_fallthru
      _
    // Predicated region
    $region54: #{tpu_custom_call.1} parent=1 // pred_check
      _
    $region55: #{tpu_custom_call.1} parent=1 // pred_check_branch
      %130 = sbr.rel (0) target = $region57
    $region56: #{tpu_custom_call.1} parent=1 // pred_region
      %131 = dma.done [#allocation8], 8192
    $region57: #{tpu_custom_call.1} parent=1 // pred_fallthru
      _
    // Predicated region
    $region58: #{tpu_custom_call.1} parent=1 // pred_check
      _
    $region59: #{tpu_custom_call.1} parent=1 // pred_check_branch
      %133 = sbr.rel (0) target = $region61
    $region60: #{tpu_custom_call.1} parent=1 // pred_region
      %134 = dma.done [#allocation8], 8192
    $region61: #{tpu_custom_call.1} parent=1 // pred_fallthru
      _
    // Predicated region
    $region62: #{tpu_custom_call.1} parent=1 // pred_check
      _
    $region63: #{tpu_custom_call.1} parent=1 // pred_check_branch
      %136 = sbr.rel (0) target = $region65
    $region64: #{tpu_custom_call.1} parent=1 // pred_region
      %137 = dma.done [#allocation11], 8192
    $region65: #{tpu_custom_call.1} parent=1 // pred_fallthru
      _
    // Predicated region
    $region66: #{tpu_custom_call.1} parent=1 // pred_check
      _
    $region67: #{tpu_custom_call.1} parent=1 // pred_check_branch
      %139 = sbr.rel (0) target = $region69
    $region68: #{tpu_custom_call.1} parent=1 // pred_region
      %140 = dma.done [#allocation11], 8192
    $region69: #{tpu_custom_call.1} parent=1 // pred_fallthru
      _
    // Predicated region
    $region70: #{tpu_custom_call.1} parent=1 // pred_check
      _
    $region71: #{tpu_custom_call.1} parent=1 // pred_check_branch
      %142 = sbr.rel (0) target = $region73
    $region72: #{tpu_custom_call.1} parent=1 // pred_region
      %143 = dma.done [#allocation14], 8192
    $region73: #{tpu_custom_call.1} parent=1 // pred_fallthru
      _
    // Predicated region
    $region74: #{tpu_custom_call.1} parent=1 // pred_check
      _
    $region75: #{tpu_custom_call.1} parent=1 // pred_check_branch
      %145 = sbr.rel (0) target = $region77
    $region76: #{tpu_custom_call.1} parent=1 // pred_region
      %146 = dma.done [#allocation14], 2048
    $region77: #{tpu_custom_call.1} parent=1 // pred_fallthru
      _
    // Predicated region
    $region78: #{tpu_custom_call.1} parent=1 // pred_check
      _
    $region79: #{tpu_custom_call.1} parent=1 // pred_check_branch
      %148 = sbr.rel (0) target = $region81
    $region80: #{tpu_custom_call.1} parent=1 // pred_region
      %149 = dma.done [#allocation17], 2048
    $region81: #{tpu_custom_call.1} parent=1 // pred_fallthru
      _
    %v150 = vld [vmem:[#allocation9] sm:$0xff]
    %v151 = vld [vmem:[#allocation9 + $0x8] sm:$0xff]
    %v152 = vld [vmem:[#allocation9 + $0x10] sm:$0xff]
    %v153 = vld [vmem:[#allocation9 + $0x18] sm:$0xff]
    %v154 = vld [vmem:[#allocation9 + $0x20] sm:$0xff]
    %v155 = vld [vmem:[#allocation9 + $0x28] sm:$0xff]
    %v156 = vld [vmem:[#allocation9 + $0x30] sm:$0xff]
    %v157 = vld [vmem:[#allocation9 + $0x38] sm:$0xff]
    %v158 = vld [vmem:[#allocation9 + $0x40] sm:$0xff]
    %v159 = vld [vmem:[#allocation9 + $0x48] sm:$0xff]
    %v160 = vld [vmem:[#allocation9 + $0x50] sm:$0xff]
    %v161 = vld [vmem:[#allocation9 + $0x58] sm:$0xff]
    %v162 = vld [vmem:[#allocation9 + $0x60] sm:$0xff]
    %v163 = vld [vmem:[#allocation9 + $0x68] sm:$0xff]
    %v164 = vld [vmem:[#allocation9 + $0x70] sm:$0xff]
    %v165 = vld [vmem:[#allocation9 + $0x78] sm:$0xff]
    %v166 = vld [vmem:[#allocation9 + $0x80] sm:$0xff]
    %v167 = vld [vmem:[#allocation9 + $0x88] sm:$0xff]
    %v168 = vld [vmem:[#allocation9 + $0x90] sm:$0xff]
    %v169 = vld [vmem:[#allocation9 + $0x98] sm:$0xff]
    %v170 = vld [vmem:[#allocation9 + $0xa0] sm:$0xff]
    %v171 = vld [vmem:[#allocation9 + $0xa8] sm:$0xff]
    %v172 = vld [vmem:[#allocation9 + $0xb0] sm:$0xff]
    %v173 = vld [vmem:[#allocation9 + $0xb8] sm:$0xff]
    %v174 = vld [vmem:[#allocation9 + $0xc0] sm:$0xff]
    %v175 = vld [vmem:[#allocation9 + $0xc8] sm:$0xff]
    %v176 = vld [vmem:[#allocation9 + $0xd0] sm:$0xff]
    %v177 = vld [vmem:[#allocation9 + $0xd8] sm:$0xff]
    %v178 = vld [vmem:[#allocation9 + $0xe0] sm:$0xff]
    %v179 = vld [vmem:[#allocation9 + $0xe8] sm:$0xff]
    %v180 = vld [vmem:[#allocation9 + $0xf0] sm:$0xff]
    %v181 = vld [vmem:[#allocation9 + $0xf8] sm:$0xff]
    %v182 = vld [vmem:[#allocation9 + $0x100] sm:$0xff]
    %v183 = vld [vmem:[#allocation9 + $0x108] sm:$0xff]
    %v184 = vld [vmem:[#allocation9 + $0x110] sm:$0xff]
    %v185 = vld [vmem:[#allocation9 + $0x118] sm:$0xff]
    %v186 = vld [vmem:[#allocation9 + $0x120] sm:$0xff]
    %v187 = vld [vmem:[#allocation9 + $0x128] sm:$0xff]
    %v188 = vld [vmem:[#allocation9 + $0x130] sm:$0xff]
    %v189 = vld [vmem:[#allocation9 + $0x138] sm:$0xff]
    %v190 = vld [vmem:[#allocation9 + $0x140] sm:$0xff]
    %v191 = vld [vmem:[#allocation9 + $0x148] sm:$0xff]
    %v192 = vld [vmem:[#allocation9 + $0x150] sm:$0xff]
    %v193 = vld [vmem:[#allocation9 + $0x158] sm:$0xff]
    %v194 = vld [vmem:[#allocation9 + $0x160] sm:$0xff]
    %v195 = vld [vmem:[#allocation9 + $0x168] sm:$0xff]
    %v196 = vld [vmem:[#allocation9 + $0x170] sm:$0xff]
    %v197 = vld [vmem:[#allocation9 + $0x178] sm:$0xff]
    %v198 = vld [vmem:[#allocation9 + $0x180] sm:$0xff]
    %v199 = vld [vmem:[#allocation9 + $0x188] sm:$0xff]
    %v200 = vld [vmem:[#allocation9 + $0x190] sm:$0xff]
    %v201 = vld [vmem:[#allocation9 + $0x198] sm:$0xff]
    %v202 = vld [vmem:[#allocation9 + $0x1a0] sm:$0xff]
    %v203 = vld [vmem:[#allocation9 + $0x1a8] sm:$0xff]
    %v204 = vld [vmem:[#allocation9 + $0x1b0] sm:$0xff]
    %v205 = vld [vmem:[#allocation9 + $0x1b8] sm:$0xff]
    %v206 = vld [vmem:[#allocation9 + $0x1c0] sm:$0xff]
    %v207 = vld [vmem:[#allocation9 + $0x1c8] sm:$0xff]
    %v208 = vld [vmem:[#allocation9 + $0x1d0] sm:$0xff]
    %v209 = vld [vmem:[#allocation9 + $0x1d8] sm:$0xff]
    %v210 = vld [vmem:[#allocation9 + $0x1e0] sm:$0xff]
    %v211 = vld [vmem:[#allocation9 + $0x1e8] sm:$0xff]
    %v212 = vld [vmem:[#allocation9 + $0x1f0] sm:$0xff]
    %v213 = vld [vmem:[#allocation9 + $0x1f8] sm:$0xff]
    %v214 = vld [vmem:[#allocation13] sm:$0xff]
    %v215 = vld [vmem:[#allocation13 + $0x8] sm:$0xff]
    %v216 = vld [vmem:[#allocation13 + $0x10] sm:$0xff]
    %v217 = vld [vmem:[#allocation13 + $0x18] sm:$0xff]
    %v218 = vld [vmem:[#allocation13 + $0x20] sm:$0xff]
    %v219 = vld [vmem:[#allocation13 + $0x28] sm:$0xff]
    %v220 = vld [vmem:[#allocation13 + $0x30] sm:$0xff]
    %v221 = vld [vmem:[#allocation13 + $0x38] sm:$0xff]
    %v222 = vld [vmem:[#allocation13 + $0x40] sm:$0xff]
    %v223 = vld [vmem:[#allocation13 + $0x48] sm:$0xff]
    %v224 = vld [vmem:[#allocation13 + $0x50] sm:$0xff]
    %v225 = vld [vmem:[#allocation13 + $0x58] sm:$0xff]
    %v226 = vld [vmem:[#allocation13 + $0x60] sm:$0xff]
    %v227 = vld [vmem:[#allocation13 + $0x68] sm:$0xff]
    %v228 = vld [vmem:[#allocation13 + $0x70] sm:$0xff]
    %v229 = vld [vmem:[#allocation13 + $0x78] sm:$0xff]
    %v230 = vld [vmem:[#allocation13 + $0x80] sm:$0xff]
    %v231 = vld [vmem:[#allocation13 + $0x88] sm:$0xff]
    %v232 = vld [vmem:[#allocation13 + $0x90] sm:$0xff]
    %v233 = vld [vmem:[#allocation13 + $0x98] sm:$0xff]
    %v234 = vld [vmem:[#allocation13 + $0xa0] sm:$0xff]
    %v235 = vld [vmem:[#allocation13 + $0xa8] sm:$0xff]
    %v236 = vld [vmem:[#allocation13 + $0xb0] sm:$0xff]
    %v237 = vld [vmem:[#allocation13 + $0xb8] sm:$0xff]
    %v238 = vld [vmem:[#allocation13 + $0xc0] sm:$0xff]
    %v239 = vld [vmem:[#allocation13 + $0xc8] sm:$0xff]
    %v240 = vld [vmem:[#allocation13 + $0xd0] sm:$0xff]
    %v241 = vld [vmem:[#allocation13 + $0xd8] sm:$0xff]
    %v242 = vld [vmem:[#allocation13 + $0xe0] sm:$0xff]
    %v243 = vld [vmem:[#allocation13 + $0xe8] sm:$0xff]
    %v244 = vld [vmem:[#allocation13 + $0xf0] sm:$0xff]
    %v245 = vld [vmem:[#allocation13 + $0xf8] sm:$0xff]
    %v246 = vld [vmem:[#allocation13 + $0x100] sm:$0xff]
    %v247 = vld [vmem:[#allocation13 + $0x108] sm:$0xff]
    %v248 = vld [vmem:[#allocation13 + $0x110] sm:$0xff]
    %v249 = vld [vmem:[#allocation13 + $0x118] sm:$0xff]
    %v250 = vld [vmem:[#allocation13 + $0x120] sm:$0xff]
    %v251 = vld [vmem:[#allocation13 + $0x128] sm:$0xff]
    %v252 = vld [vmem:[#allocation13 + $0x130] sm:$0xff]
    %v253 = vld [vmem:[#allocation13 + $0x138] sm:$0xff]
    %v254 = vld [vmem:[#allocation13 + $0x140] sm:$0xff]
    %v255 = vld [vmem:[#allocation13 + $0x148] sm:$0xff]
    %v256 = vld [vmem:[#allocation13 + $0x150] sm:$0xff]
    %v257 = vld [vmem:[#allocation13 + $0x158] sm:$0xff]
    %v258 = vld [vmem:[#allocation13 + $0x160] sm:$0xff]
    %v259 = vld [vmem:[#allocation13 + $0x168] sm:$0xff]
    %v260 = vld [vmem:[#allocation13 + $0x170] sm:$0xff]
    %v261 = vld [vmem:[#allocation13 + $0x178] sm:$0xff]
    %v262 = vld [vmem:[#allocation13 + $0x180] sm:$0xff]
    %v263 = vld [vmem:[#allocation13 + $0x188] sm:$0xff]
    %v264 = vld [vmem:[#allocation13 + $0x190] sm:$0xff]
    %v265 = vld [vmem:[#allocation13 + $0x198] sm:$0xff]
    %v266 = vld [vmem:[#allocation13 + $0x1a0] sm:$0xff]
    %v267 = vld [vmem:[#allocation13 + $0x1a8] sm:$0xff]
    %v268 = vld [vmem:[#allocation13 + $0x1b0] sm:$0xff]
    %v269 = vld [vmem:[#allocation13 + $0x1b8] sm:$0xff]
    %v270 = vld [vmem:[#allocation13 + $0x1c0] sm:$0xff]
    %v271 = vld [vmem:[#allocation13 + $0x1c8] sm:$0xff]
    %v272 = vld [vmem:[#allocation13 + $0x1d0] sm:$0xff]
    %v273 = vld [vmem:[#allocation13 + $0x1d8] sm:$0xff]
    %v274 = vld [vmem:[#allocation13 + $0x1e0] sm:$0xff]
    %v275 = vld [vmem:[#allocation13 + $0x1e8] sm:$0xff]
    %v276 = vld [vmem:[#allocation13 + $0x1f0] sm:$0xff]
    %v277 = vld [vmem:[#allocation13 + $0x1f8] sm:$0xff]
    %v278 = vld [vmem:[#allocation10] sm:$0xff]
    %v279 = vld [vmem:[#allocation10 + $0x8] sm:$0xff]
    %v280 = vld [vmem:[#allocation10 + $0x10] sm:$0xff]
    %v281 = vld [vmem:[#allocation10 + $0x18] sm:$0xff]
    %v282 = vld [vmem:[#allocation10 + $0x20] sm:$0xff]
    %v283 = vld [vmem:[#allocation10 + $0x28] sm:$0xff]
    %v284 = vld [vmem:[#allocation10 + $0x30] sm:$0xff]
    %v285 = vld [vmem:[#allocation10 + $0x38] sm:$0xff]
    %v286 = vld [vmem:[#allocation10 + $0x40] sm:$0xff]
    %v287 = vld [vmem:[#allocation10 + $0x48] sm:$0xff]
    %v288 = vld [vmem:[#allocation10 + $0x50] sm:$0xff]
    %v289 = vld [vmem:[#allocation10 + $0x58] sm:$0xff]
    %v290 = vld [vmem:[#allocation10 + $0x60] sm:$0xff]
    %v291 = vld [vmem:[#allocation10 + $0x68] sm:$0xff]
    %v292 = vld [vmem:[#allocation10 + $0x70] sm:$0xff]
    %v293 = vld [vmem:[#allocation10 + $0x78] sm:$0xff]
    %v294 = vld [vmem:[#allocation10 + $0x80] sm:$0xff]
    %v295 = vld [vmem:[#allocation10 + $0x88] sm:$0xff]
    %v296 = vld [vmem:[#allocation10 + $0x90] sm:$0xff]
    %v297 = vld [vmem:[#allocation10 + $0x98] sm:$0xff]
    %v298 = vld [vmem:[#allocation10 + $0xa0] sm:$0xff]
    %v299 = vld [vmem:[#allocation10 + $0xa8] sm:$0xff]
    %v300 = vld [vmem:[#allocation10 + $0xb0] sm:$0xff]
    %v301 = vld [vmem:[#allocation10 + $0xb8] sm:$0xff]
    %v302 = vld [vmem:[#allocation10 + $0xc0] sm:$0xff]
    %v303 = vld [vmem:[#allocation10 + $0xc8] sm:$0xff]
    %v304 = vld [vmem:[#allocation10 + $0xd0] sm:$0xff]
    %v305 = vld [vmem:[#allocation10 + $0xd8] sm:$0xff]
    %v306 = vld [vmem:[#allocation10 + $0xe0] sm:$0xff]
    %v307 = vld [vmem:[#allocation10 + $0xe8] sm:$0xff]
    %v308 = vld [vmem:[#allocation10 + $0xf0] sm:$0xff]
    %v309 = vld [vmem:[#allocation10 + $0xf8] sm:$0xff]
    %v310 = vld [vmem:[#allocation10 + $0x100] sm:$0xff]
    %v311 = vld [vmem:[#allocation10 + $0x108] sm:$0xff]
    %v312 = vld [vmem:[#allocation10 + $0x110] sm:$0xff]
    %v313 = vld [vmem:[#allocation10 + $0x118] sm:$0xff]
    %v314 = vld [vmem:[#allocation10 + $0x120] sm:$0xff]
    %v315 = vld [vmem:[#allocation10 + $0x128] sm:$0xff]
    %v316 = vld [vmem:[#allocation10 + $0x130] sm:$0xff]
    %v317 = vld [vmem:[#allocation10 + $0x138] sm:$0xff]
    %v318 = vld [vmem:[#allocation10 + $0x140] sm:$0xff]
    %v319 = vld [vmem:[#allocation10 + $0x148] sm:$0xff]
    %v320 = vld [vmem:[#allocation10 + $0x150] sm:$0xff]
    %v321 = vld [vmem:[#allocation10 + $0x158] sm:$0xff]
    %v322 = vld [vmem:[#allocation10 + $0x160] sm:$0xff]
    %v323 = vld [vmem:[#allocation10 + $0x168] sm:$0xff]
    %v324 = vld [vmem:[#allocation10 + $0x170] sm:$0xff]
    %v325 = vld [vmem:[#allocation10 + $0x178] sm:$0xff]
    %v326 = vld [vmem:[#allocation10 + $0x180] sm:$0xff]
    %v327 = vld [vmem:[#allocation10 + $0x188] sm:$0xff]
    %v328 = vld [vmem:[#allocation10 + $0x190] sm:$0xff]
    %v329 = vld [vmem:[#allocation10 + $0x198] sm:$0xff]
    %v330 = vld [vmem:[#allocation10 + $0x1a0] sm:$0xff]
    %v331 = vld [vmem:[#allocation10 + $0x1a8] sm:$0xff]
    %v332 = vld [vmem:[#allocation10 + $0x1b0] sm:$0xff]
    %v333 = vld [vmem:[#allocation10 + $0x1b8] sm:$0xff]
    %v334 = vld [vmem:[#allocation10 + $0x1c0] sm:$0xff]
    %v335 = vld [vmem:[#allocation10 + $0x1c8] sm:$0xff]
    %v336 = vld [vmem:[#allocation10 + $0x1d0] sm:$0xff]
    %v337 = vld [vmem:[#allocation10 + $0x1d8] sm:$0xff]
    %v338 = vld [vmem:[#allocation10 + $0x1e0] sm:$0xff]
    %v339 = vld [vmem:[#allocation10 + $0x1e8] sm:$0xff]
    %v340 = vld [vmem:[#allocation10 + $0x1f0] sm:$0xff]
    %v341 = vld [vmem:[#allocation10 + $0x1f8] sm:$0xff]
    %v342 = vld [vmem:[#allocation15] sm:$0xff]
    %v343 = vld [vmem:[#allocation15 + $0x8] sm:$0xff]
    %v344 = vld [vmem:[#allocation15 + $0x10] sm:$0xff]
    %v345 = vld [vmem:[#allocation15 + $0x18] sm:$0xff]
    %v346 = vld [vmem:[#allocation15 + $0x20] sm:$0xff]
    %v347 = vld [vmem:[#allocation15 + $0x28] sm:$0xff]
    %v348 = vld [vmem:[#allocation15 + $0x30] sm:$0xff]
    %v349 = vld [vmem:[#allocation15 + $0x38] sm:$0xff]
    %v350 = vld [vmem:[#allocation15 + $0x40] sm:$0xff]
    %v351 = vld [vmem:[#allocation15 + $0x48] sm:$0xff]
    %v352 = vld [vmem:[#allocation15 + $0x50] sm:$0xff]
    %v353 = vld [vmem:[#allocation15 + $0x58] sm:$0xff]
    %v354 = vld [vmem:[#allocation15 + $0x60] sm:$0xff]
    %v355 = vld [vmem:[#allocation15 + $0x68] sm:$0xff]
    %v356 = vld [vmem:[#allocation15 + $0x70] sm:$0xff]
    %v357 = vld [vmem:[#allocation15 + $0x78] sm:$0xff]
    %v358 = vld [vmem:[#allocation16] sm:$0xff]
    %v359 = vld [vmem:[#allocation16 + $0x8] sm:$0xff]
    %v360 = vld [vmem:[#allocation16 + $0x10] sm:$0xff]
    %v361 = vld [vmem:[#allocation16 + $0x18] sm:$0xff]
    %v362 = vld [vmem:[#allocation16 + $0x20] sm:$0xff]
    %v363 = vld [vmem:[#allocation16 + $0x28] sm:$0xff]
    %v364 = vld [vmem:[#allocation16 + $0x30] sm:$0xff]
    %v365 = vld [vmem:[#allocation16 + $0x38] sm:$0xff]
    %v366 = vld [vmem:[#allocation16 + $0x40] sm:$0xff]
    %v367 = vld [vmem:[#allocation16 + $0x48] sm:$0xff]
    %v368 = vld [vmem:[#allocation16 + $0x50] sm:$0xff]
    %v369 = vld [vmem:[#allocation16 + $0x58] sm:$0xff]
    %v370 = vld [vmem:[#allocation16 + $0x60] sm:$0xff]
    %v371 = vld [vmem:[#allocation16 + $0x68] sm:$0xff]
    %v372 = vld [vmem:[#allocation16 + $0x70] sm:$0xff]
    %v373 = vld [vmem:[#allocation16 + $0x78] sm:$0xff]
    %v374 = vld [vmem:[%s11] sm:$0x1]
    %v375 = vld [vmem:[#allocation5] sm:$0xff]
    %v376 = vld [vmem:[#allocation5 + $0x8] sm:$0xff]
    %v377 = vld [vmem:[#allocation5 + $0x10] sm:$0xff]
    %v378 = vld [vmem:[#allocation5 + $0x18] sm:$0xff]
    %v379 = vld [vmem:[#allocation5 + $0x20] sm:$0xff]
    %v380 = vld [vmem:[#allocation5 + $0x28] sm:$0xff]
    %v381 = vld [vmem:[#allocation5 + $0x30] sm:$0xff]
    %v382 = vld [vmem:[#allocation5 + $0x38] sm:$0xff]
    %v383 = vld [vmem:[#allocation7] sm:$0xff]
    %v384 = vld [vmem:[#allocation7 + $0x8] sm:$0xff]
    %v385 = vld [vmem:[#allocation7 + $0x10] sm:$0xff]
    %v386 = vld [vmem:[#allocation7 + $0x18] sm:$0xff]
    %v387 = vld [vmem:[#allocation7 + $0x20] sm:$0xff]
    %v388 = vld [vmem:[#allocation7 + $0x28] sm:$0xff]
    %v389 = vld [vmem:[#allocation7 + $0x30] sm:$0xff]
    %v390 = vld [vmem:[#allocation7 + $0x38] sm:$0xff]
    %v391 = vld [vmem:[#allocation7 + $0x40] sm:$0xff]
    %v392 = vld [vmem:[#allocation7 + $0x48] sm:$0xff]
    %v393 = vld [vmem:[#allocation7 + $0x50] sm:$0xff]
    %v394 = vld [vmem:[#allocation7 + $0x58] sm:$0xff]
    %v395 = vld [vmem:[#allocation7 + $0x60] sm:$0xff]
    %v396 = vld [vmem:[#allocation7 + $0x68] sm:$0xff]
    %v397 = vld [vmem:[#allocation7 + $0x70] sm:$0xff]
    %v398 = vld [vmem:[#allocation7 + $0x78] sm:$0xff]
    %v399 = vld [vmem:[#allocation7 + $0x80] sm:$0xff]
    %v400 = vld [vmem:[#allocation7 + $0x88] sm:$0xff]
    %v401 = vld [vmem:[#allocation7 + $0x90] sm:$0xff]
    %v402 = vld [vmem:[#allocation7 + $0x98] sm:$0xff]
    %v403 = vld [vmem:[#allocation7 + $0xa0] sm:$0xff]
    %v404 = vld [vmem:[#allocation7 + $0xa8] sm:$0xff]
    %v405 = vld [vmem:[#allocation7 + $0xb0] sm:$0xff]
    %v406 = vld [vmem:[#allocation7 + $0xb8] sm:$0xff]
    %v407 = vld [vmem:[#allocation7 + $0xc0] sm:$0xff]
    %v408 = vld [vmem:[#allocation7 + $0xc8] sm:$0xff]
    %v409 = vld [vmem:[#allocation7 + $0xd0] sm:$0xff]
    %v410 = vld [vmem:[#allocation7 + $0xd8] sm:$0xff]
    %v411 = vld [vmem:[#allocation7 + $0xe0] sm:$0xff]
    %v412 = vld [vmem:[#allocation7 + $0xe8] sm:$0xff]
    %v413 = vld [vmem:[#allocation7 + $0xf0] sm:$0xff]
    %v414 = vld [vmem:[#allocation7 + $0xf8] sm:$0xff]
    %v415 = vld [vmem:[#allocation7 + $0x100] sm:$0xff]
    %v416 = vld [vmem:[#allocation7 + $0x108] sm:$0xff]
    %v417 = vld [vmem:[#allocation7 + $0x110] sm:$0xff]
    %v418 = vld [vmem:[#allocation7 + $0x118] sm:$0xff]
    %v419 = vld [vmem:[#allocation7 + $0x120] sm:$0xff]
    %v420 = vld [vmem:[#allocation7 + $0x128] sm:$0xff]
    %v421 = vld [vmem:[#allocation7 + $0x130] sm:$0xff]
    %v422 = vld [vmem:[#allocation7 + $0x138] sm:$0xff]
    %v423 = vld [vmem:[#allocation7 + $0x140] sm:$0xff]
    %v424 = vld [vmem:[#allocation7 + $0x148] sm:$0xff]
    %v425 = vld [vmem:[#allocation7 + $0x150] sm:$0xff]
    %v426 = vld [vmem:[#allocation7 + $0x158] sm:$0xff]
    %v427 = vld [vmem:[#allocation7 + $0x160] sm:$0xff]
    %v428 = vld [vmem:[#allocation7 + $0x168] sm:$0xff]
    %v429 = vld [vmem:[#allocation7 + $0x170] sm:$0xff]
    %v430 = vld [vmem:[#allocation7 + $0x178] sm:$0xff]
    %v431 = vld [vmem:[#allocation7 + $0x180] sm:$0xff]
    %v432 = vld [vmem:[#allocation7 + $0x188] sm:$0xff]
    %v433 = vld [vmem:[#allocation7 + $0x190] sm:$0xff]
    %v434 = vld [vmem:[#allocation7 + $0x198] sm:$0xff]
    %v435 = vld [vmem:[#allocation7 + $0x1a0] sm:$0xff]
    %v436 = vld [vmem:[#allocation7 + $0x1a8] sm:$0xff]
    %v437 = vld [vmem:[#allocation7 + $0x1b0] sm:$0xff]
    %v438 = vld [vmem:[#allocation7 + $0x1b8] sm:$0xff]
    %v439 = vld [vmem:[#allocation7 + $0x1c0] sm:$0xff]
    %v440 = vld [vmem:[#allocation7 + $0x1c8] sm:$0xff]
    %v441 = vld [vmem:[#allocation7 + $0x1d0] sm:$0xff]
    %v442 = vld [vmem:[#allocation7 + $0x1d8] sm:$0xff]
    %v443 = vld [vmem:[#allocation7 + $0x1e0] sm:$0xff]
    %v444 = vld [vmem:[#allocation7 + $0x1e8] sm:$0xff]
    %v445 = vld [vmem:[#allocation7 + $0x1f0] sm:$0xff]
    %v446 = vld [vmem:[#allocation7 + $0x1f8] sm:$0xff]
    %v447 = vld [vmem:[%s2] sm:$0xf]
    %v449 = vlaneseq
    %v450 = vshrl.u32 %v449, 7
    %v451 = vsub.s32 0, %v450
    %v452 = vrot.slane %v447, %v451
    %v453 = vlaneseq
    %v454 = vshrl.u32 %v453, 7
    %v455 = vsub.s32 1, %v454
    %v456 = vrot.slane %v447, %v455
    %v457 = vlaneseq
    %v458 = vshrl.u32 %v457, 7
    %v459 = vsub.s32 2, %v458
    %v460 = vrot.slane %v447, %v459
    %v461 = vlaneseq
    %v462 = vshrl.u32 %v461, 7
    %v463 = vsub.s32 3, %v462
    %v464 = vrot.slane %v447, %v463
    %469 = vmatprep.subr.mxu0 %v384
    %470 = vmatpush1.msra.mxu0 %v383
    %471 = vmatprep.subr.mxu0 %v388
    %472 = vmatpush1.msra.mxu0 %v387
    %473 = vmatprep.subr.mxu0 %v392
    %474 = vmatpush1.msra.mxu0 %v391
    %475 = vmatprep.subr.mxu0 %v396
    %476 = vmatpush1.msra.mxu0 %v395
    %477 = vmatprep.subr.mxu0 %v400
    %478 = vmatpush1.msra.mxu0 %v399
    %479 = vmatprep.subr.mxu0 %v404
    %480 = vmatpush1.msra.mxu0 %v403
    %481 = vmatprep.subr.mxu0 %v408
    %482 = vmatpush1.msra.mxu0 %v407
    %483 = vmatprep.subr.mxu0 %v412
    %484 = vmatpush1.msra.mxu0 %v411
    %485 = vmatprep.subr.mxu0 %v416
    %486 = vmatpush1.msra.mxu0 %v415
    %487 = vmatprep.subr.mxu0 %v420
    %488 = vmatpush1.msra.mxu0 %v419
    %489 = vmatprep.subr.mxu0 %v424
    %490 = vmatpush1.msra.mxu0 %v423
    %491 = vmatprep.subr.mxu0 %v428
    %492 = vmatpush1.msra.mxu0 %v427
    %493 = vmatprep.subr.mxu0 %v432
    %494 = vmatpush1.msra.mxu0 %v431
    %495 = vmatprep.subr.mxu0 %v436
    %496 = vmatpush1.msra.mxu0 %v435
    %497 = vmatprep.subr.mxu0 %v440
    %498 = vmatpush1.msra.mxu0 %v439
    %499 = vmatprep.subr.mxu0 %v444
    %500 = vmatpush1.msra.mxu0 %v443
    %501 = vmatprep.subr.mxu0 0.0
    %502 = vmatpush1.msra.mxu0 0.0
    %503 = vmatprep.subr.mxu0 0.0
    %504 = vmatpush1.msra.mxu0 0.0
    %505 = vmatprep.subr.mxu0 0.0
    %506 = vmatpush1.msra.mxu0 0.0
    %507 = vmatprep.subr.mxu0 0.0
    %508 = vmatpush1.msra.mxu0 0.0
    %509 = vmatprep.subr.mxu0 0.0
    %510 = vmatpush1.msra.mxu0 0.0
    %511 = vmatprep.subr.mxu0 0.0
    %512 = vmatpush1.msra.mxu0 0.0
    %513 = vmatprep.subr.mxu0 0.0
    %514 = vmatpush1.msra.mxu0 0.0
    %515 = vmatprep.subr.mxu0 0.0
    %516 = vmatpush1.msra.mxu0 0.0
    %517 = vmatprep.subr.mxu0 0.0
    %518 = vmatpush1.msra.mxu0 0.0
    %519 = vmatprep.subr.mxu0 0.0
    %520 = vmatpush1.msra.mxu0 0.0
    %521 = vmatprep.subr.mxu0 0.0
    %522 = vmatpush1.msra.mxu0 0.0
    %523 = vmatprep.subr.mxu0 0.0
    %524 = vmatpush1.msra.mxu0 0.0
    %525 = vmatprep.subr.mxu0 0.0
    %526 = vmatpush1.msra.mxu0 0.0
    %527 = vmatprep.subr.mxu0 0.0
    %528 = vmatpush1.msra.mxu0 0.0
    %529 = vmatprep.subr.mxu0 0.0
    %530 = vmatpush1.msra.mxu0 0.0
    %531 = vmatprep.subr.mxu0 0.0
    %532 = vmatpush1.msra.mxu0 0.0
    %533 = vmatprep.mubr.f32.mxu0 0.0
    %534 = vmatmul.mubr.f32.gmra.mrb[0].mxu0 %v375
    %v535 = vpop.f32.mrb[0].mxu0
    %v536 = vadd.f32 %v452, %v535
    %v537 = vpop.f32.mrb[0].mxu0
    %v538 = vadd.f32 %v456, %v537
    %539 = vmatprep.mubr.f32.mxu0 0.0
    %540 = vmatmul.mubr.f32.gmra.mrb[0].mxu0 %v376
    %v541 = vpop.f32.mrb[0].mxu0
    %v542 = vadd.f32 %v452, %v541
    %v543 = vpop.f32.mrb[0].mxu0
    %v544 = vadd.f32 %v456, %v543
    %545 = vmatprep.mubr.f32.mxu0 0.0
    %546 = vmatmul.mubr.f32.gmra.mrb[0].mxu0 %v377
    %v547 = vpop.f32.mrb[0].mxu0
    %v548 = vadd.f32 %v452, %v547
    %v549 = vpop.f32.mrb[0].mxu0
    %v550 = vadd.f32 %v456, %v549
    %551 = vmatprep.mubr.f32.mxu0 0.0
    %552 = vmatmul.mubr.f32.gmra.mrb[0].mxu0 %v378
    %v553 = vpop.f32.mrb[0].mxu0
    %v554 = vadd.f32 %v452, %v553
    %v555 = vpop.f32.mrb[0].mxu0
    %v556 = vadd.f32 %v456, %v555
    %557 = vmatprep.mubr.f32.mxu0 0.0
    %558 = vmatmul.mubr.f32.gmra.mrb[0].mxu0 %v379
    %v559 = vpop.f32.mrb[0].mxu0
    %v560 = vadd.f32 %v452, %v559
    %v561 = vpop.f32.mrb[0].mxu0
    %v562 = vadd.f32 %v456, %v561
    %563 = vmatprep.mubr.f32.mxu0 0.0
    %564 = vmatmul.mubr.f32.gmra.mrb[0].mxu0 %v380
    %v565 = vpop.f32.mrb[0].mxu0
    %v566 = vadd.f32 %v452, %v565
    %v567 = vpop.f32.mrb[0].mxu0
    %v568 = vadd.f32 %v456, %v567
    %569 = vmatprep.mubr.f32.mxu0 0.0
    %570 = vmatmul.mubr.f32.gmra.mrb[0].mxu0 %v381
    %v571 = vpop.f32.mrb[0].mxu0
    %v572 = vadd.f32 %v452, %v571
    %v573 = vpop.f32.mrb[0].mxu0
    %v574 = vadd.f32 %v456, %v573
    %575 = vmatprep.mubr.f32.mxu0 0.0
    %576 = vmatmul.mubr.f32.gmra.mrb[0].mxu0 %v382
    %v577 = vpop.f32.mrb[0].mxu0
    %v578 = vadd.f32 %v452, %v577
    %v579 = vpop.f32.mrb[0].mxu0
    %v580 = vadd.f32 %v456, %v579
    %581 = vdwg.mxu0
    %582 = vmatprep.subr.mxu0 %v386
    %583 = vmatpush1.msra.mxu0 %v385
    %584 = vmatprep.subr.mxu0 %v390
    %585 = vmatpush1.msra.mxu0 %v389
    %586 = vmatprep.subr.mxu0 %v394
    %587 = vmatpush1.msra.mxu0 %v393
    %588 = vmatprep.subr.mxu0 %v398
    %589 = vmatpush1.msra.mxu0 %v397
    %590 = vmatprep.subr.mxu0 %v402
    %591 = vmatpush1.msra.mxu0 %v401
    %592 = vmatprep.subr.mxu0 %v406
    %593 = vmatpush1.msra.mxu0 %v405
    %594 = vmatprep.subr.mxu0 %v410
    %595 = vmatpush1.msra.mxu0 %v409
    %596 = vmatprep.subr.mxu0 %v414
    %597 = vmatpush1.msra.mxu0 %v413
    %598 = vmatprep.subr.mxu0 %v418
    %599 = vmatpush1.msra.mxu0 %v417
    %600 = vmatprep.subr.mxu0 %v422
    %601 = vmatpush1.msra.mxu0 %v421
    %602 = vmatprep.subr.mxu0 %v426
    %603 = vmatpush1.msra.mxu0 %v425
    %604 = vmatprep.subr.mxu0 %v430
    %605 = vmatpush1.msra.mxu0 %v429
    %606 = vmatprep.subr.mxu0 %v434
    %607 = vmatpush1.msra.mxu0 %v433
    %608 = vmatprep.subr.mxu0 %v438
    %609 = vmatpush1.msra.mxu0 %v437
    %610 = vmatprep.subr.mxu0 %v442
    %611 = vmatpush1.msra.mxu0 %v441
    %612 = vmatprep.subr.mxu0 %v446
    %613 = vmatpush1.msra.mxu0 %v445
    %614 = vmatprep.subr.mxu0 0.0
    %615 = vmatpush1.msra.mxu0 0.0
    %616 = vmatprep.subr.mxu0 0.0
    %617 = vmatpush1.msra.mxu0 0.0
    %618 = vmatprep.subr.mxu0 0.0
    %619 = vmatpush1.msra.mxu0 0.0
    %620 = vmatprep.subr.mxu0 0.0
    %621 = vmatpush1.msra.mxu0 0.0
    %622 = vmatprep.subr.mxu0 0.0
    %623 = vmatpush1.msra.mxu0 0.0
    %624 = vmatprep.subr.mxu0 0.0
    %625 = vmatpush1.msra.mxu0 0.0
    %626 = vmatprep.subr.mxu0 0.0
    %627 = vmatpush1.msra.mxu0 0.0
    %628 = vmatprep.subr.mxu0 0.0
    %629 = vmatpush1.msra.mxu0 0.0
    %630 = vmatprep.subr.mxu0 0.0
    %631 = vmatpush1.msra.mxu0 0.0
    %632 = vmatprep.subr.mxu0 0.0
    %633 = vmatpush1.msra.mxu0 0.0
    %634 = vmatprep.subr.mxu0 0.0
    %635 = vmatpush1.msra.mxu0 0.0
    %636 = vmatprep.subr.mxu0 0.0
    %637 = vmatpush1.msra.mxu0 0.0
    %638 = vmatprep.subr.mxu0 0.0
    %639 = vmatpush1.msra.mxu0 0.0
    %640 = vmatprep.subr.mxu0 0.0
    %641 = vmatpush1.msra.mxu0 0.0
    %642 = vmatprep.subr.mxu0 0.0
    %643 = vmatpush1.msra.mxu0 0.0
    %644 = vmatprep.subr.mxu0 0.0
    %645 = vmatpush1.msra.mxu0 0.0
    %646 = vmatprep.mubr.f32.mxu0 0.0
    %647 = vmatmul.mubr.f32.gmra.mrb[0].mxu0 %v375
    %v648 = vpop.f32.mrb[0].mxu0
    %v649 = vadd.f32 %v460, %v648
    %v650 = vpop.f32.mrb[0].mxu0
    %v651 = vadd.f32 %v464, %v650
    %652 = vmatprep.mubr.f32.mxu0 0.0
    %653 = vmatmul.mubr.f32.gmra.mrb[0].mxu0 %v376
    %v654 = vpop.f32.mrb[0].mxu0
    %v655 = vadd.f32 %v460, %v654
    %v656 = vpop.f32.mrb[0].mxu0
    %v657 = vadd.f32 %v464, %v656
    %658 = vmatprep.mubr.f32.mxu0 0.0
    %659 = vmatmul.mubr.f32.gmra.mrb[0].mxu0 %v377
    %v660 = vpop.f32.mrb[0].mxu0
    %v661 = vadd.f32 %v460, %v660
    %v662 = vpop.f32.mrb[0].mxu0
    %v663 = vadd.f32 %v464, %v662
    %664 = vmatprep.mubr.f32.mxu0 0.0
    %665 = vmatmul.mubr.f32.gmra.mrb[0].mxu0 %v378
    %v666 = vpop.f32.mrb[0].mxu0
    %v667 = vadd.f32 %v460, %v666
    %v668 = vpop.f32.mrb[0].mxu0
    %v669 = vadd.f32 %v464, %v668
    %670 = vmatprep.mubr.f32.mxu0 0.0
    %671 = vmatmul.mubr.f32.gmra.mrb[0].mxu0 %v379
    %v672 = vpop.f32.mrb[0].mxu0
    %v673 = vadd.f32 %v460, %v672
    %v674 = vpop.f32.mrb[0].mxu0
    %v675 = vadd.f32 %v464, %v674
    %676 = vmatprep.mubr.f32.mxu0 0.0
    %677 = vmatmul.mubr.f32.gmra.mrb[0].mxu0 %v380
    %v678 = vpop.f32.mrb[0].mxu0
    %v679 = vadd.f32 %v460, %v678
    %v680 = vpop.f32.mrb[0].mxu0
    %v681 = vadd.f32 %v464, %v680
    %682 = vmatprep.mubr.f32.mxu0 0.0
    %683 = vmatmul.mubr.f32.gmra.mrb[0].mxu0 %v381
    %v684 = vpop.f32.mrb[0].mxu0
    %v685 = vadd.f32 %v460, %v684
    %v686 = vpop.f32.mrb[0].mxu0
    %v687 = vadd.f32 %v464, %v686
    %688 = vmatprep.mubr.f32.mxu0 0.0
    %689 = vmatmul.mubr.f32.gmra.mrb[0].mxu0 %v382
    %v690 = vpop.f32.mrb[0].mxu0
    %v691 = vadd.f32 %v460, %v690
    %v692 = vpop.f32.mrb[0].mxu0
    %v693 = vadd.f32 %v464, %v692
    %694 = vdwg.mxu0
    %695 = vst [vmem:[#allocation2] sm:$0xff] %v536
    %696 = vst [vmem:[#allocation2 + $0x8] sm:$0xff] %v538
    %697 = vst [vmem:[#allocation2 + $0x10] sm:$0xff] %v649
    %698 = vst [vmem:[#allocation2 + $0x18] sm:$0xff] %v651
    %699 = vst [vmem:[#allocation2 + $0x20] sm:$0xff] %v542
    %700 = vst [vmem:[#allocation2 + $0x28] sm:$0xff] %v544
    %701 = vst [vmem:[#allocation2 + $0x30] sm:$0xff] %v655
    %702 = vst [vmem:[#allocation2 + $0x38] sm:$0xff] %v657
    %703 = vst [vmem:[#allocation2 + $0x40] sm:$0xff] %v548
    %704 = vst [vmem:[#allocation2 + $0x48] sm:$0xff] %v550
    %705 = vst [vmem:[#allocation2 + $0x50] sm:$0xff] %v661
    %706 = vst [vmem:[#allocation2 + $0x58] sm:$0xff] %v663
    %707 = vst [vmem:[#allocation2 + $0x60] sm:$0xff] %v554
    %708 = vst [vmem:[#allocation2 + $0x68] sm:$0xff] %v556
    %709 = vst [vmem:[#allocation2 + $0x70] sm:$0xff] %v667
    %710 = vst [vmem:[#allocation2 + $0x78] sm:$0xff] %v669
    %711 = vst [vmem:[#allocation2 + $0x80] sm:$0xff] %v560
    %712 = vst [vmem:[#allocation2 + $0x88] sm:$0xff] %v562
    %713 = vst [vmem:[#allocation2 + $0x90] sm:$0xff] %v673
    %714 = vst [vmem:[#allocation2 + $0x98] sm:$0xff] %v675
    %715 = vst [vmem:[#allocation2 + $0xa0] sm:$0xff] %v566
    %716 = vst [vmem:[#allocation2 + $0xa8] sm:$0xff] %v568
    %717 = vst [vmem:[#allocation2 + $0xb0] sm:$0xff] %v679
    %718 = vst [vmem:[#allocation2 + $0xb8] sm:$0xff] %v681
    %719 = vst [vmem:[#allocation2 + $0xc0] sm:$0xff] %v572
    %720 = vst [vmem:[#allocation2 + $0xc8] sm:$0xff] %v574
    %721 = vst [vmem:[#allocation2 + $0xd0] sm:$0xff] %v685
    %722 = vst [vmem:[#allocation2 + $0xd8] sm:$0xff] %v687
    %723 = vst [vmem:[#allocation2 + $0xe0] sm:$0xff] %v578
    %724 = vst [vmem:[#allocation2 + $0xe8] sm:$0xff] %v580
    %725 = vst [vmem:[#allocation2 + $0xf0] sm:$0xff] %v691
    %726 = vst [vmem:[#allocation2 + $0xf8] sm:$0xff] %v693
    loop: start=0, step=1, limit=8
    $region82: #{tpu_custom_call.1} parent=1 // loop_pre_header
      _
    $region83: #{tpu_custom_call.1} parent=1 // loop_header
      %s728 = sphi 0, %s732
      %p729 = scmp.ge.s32.totalorder %s728, 8
      %v733 = vphi 0.0, %v911
      %v734 = vphi 0.0, %v909
    $region84: #{tpu_custom_call.1} parent=1 // loop_header_branch
      %731 = sbr.rel (%p729) target = $region88
    $region85: #{tpu_custom_call.1} parent=1 // loop_body
      %s735 = smul.u32 %s728, 4
      %s736 = smul.addr %s735, 8
      %s737 = scalar_lea.vmem [#allocation2], %s736
      %v738 = vld [vmem:[%s737] sm:$0xff]
      %v739 = vld [vmem:[%s737 + $0x8] sm:$0xff]
      %v740 = vld [vmem:[%s737 + $0x10] sm:$0xff]
      %v741 = vld [vmem:[%s737 + $0x18] sm:$0xff]
      %742 = vmatprep.subr.mxu0 %v151
      %743 = vmatpush1.msra.mxu0 %v150
      %744 = vmatprep.subr.mxu0 %v155
      %745 = vmatpush1.msra.mxu0 %v154
      %746 = vmatprep.subr.mxu0 %v159
      %747 = vmatpush1.msra.mxu0 %v158
      %748 = vmatprep.subr.mxu0 %v163
      %749 = vmatpush1.msra.mxu0 %v162
      %750 = vmatprep.subr.mxu0 %v167
      %751 = vmatpush1.msra.mxu0 %v166
      %752 = vmatprep.subr.mxu0 %v171
      %753 = vmatpush1.msra.mxu0 %v170
      %754 = vmatprep.subr.mxu0 %v175
      %755 = vmatpush1.msra.mxu0 %v174
      %756 = vmatprep.subr.mxu0 %v179
      %757 = vmatpush1.msra.mxu0 %v178
      %758 = vmatprep.subr.mxu0 %v183
      %759 = vmatpush1.msra.mxu0 %v182
      %760 = vmatprep.subr.mxu0 %v187
      %761 = vmatpush1.msra.mxu0 %v186
      %762 = vmatprep.subr.mxu0 %v191
      %763 = vmatpush1.msra.mxu0 %v190
      %764 = vmatprep.subr.mxu0 %v195
      %765 = vmatpush1.msra.mxu0 %v194
      %766 = vmatprep.subr.mxu0 %v199
      %767 = vmatpush1.msra.mxu0 %v198
      %768 = vmatprep.subr.mxu0 %v203
      %769 = vmatpush1.msra.mxu0 %v202
      %770 = vmatprep.subr.mxu0 %v207
      %771 = vmatpush1.msra.mxu0 %v206
      %772 = vmatprep.subr.mxu0 %v211
      %773 = vmatpush1.msra.mxu0 %v210
      %774 = vmatprep.subr.mxu0 0.0
      %775 = vmatpush1.msra.mxu0 0.0
      %776 = vmatprep.subr.mxu0 0.0
      %777 = vmatpush1.msra.mxu0 0.0
      %778 = vmatprep.subr.mxu0 0.0
      %779 = vmatpush1.msra.mxu0 0.0
      %780 = vmatprep.subr.mxu0 0.0
      %781 = vmatpush1.msra.mxu0 0.0
      %782 = vmatprep.subr.mxu0 0.0
      %783 = vmatpush1.msra.mxu0 0.0
      %784 = vmatprep.subr.mxu0 0.0
      %785 = vmatpush1.msra.mxu0 0.0
      %786 = vmatprep.subr.mxu0 0.0
      %787 = vmatpush1.msra.mxu0 0.0
      %788 = vmatprep.subr.mxu0 0.0
      %789 = vmatpush1.msra.mxu0 0.0
      %790 = vmatprep.subr.mxu0 0.0
      %791 = vmatpush1.msra.mxu0 0.0
      %792 = vmatprep.subr.mxu0 0.0
      %793 = vmatpush1.msra.mxu0 0.0
      %794 = vmatprep.subr.mxu0 0.0
      %795 = vmatpush1.msra.mxu0 0.0
      %796 = vmatprep.subr.mxu0 0.0
      %797 = vmatpush1.msra.mxu0 0.0
      %798 = vmatprep.subr.mxu0 0.0
      %799 = vmatpush1.msra.mxu0 0.0
      %800 = vmatprep.subr.mxu0 0.0
      %801 = vmatpush1.msra.mxu0 0.0
      %802 = vmatprep.subr.mxu0 0.0
      %803 = vmatpush1.msra.mxu0 0.0
      %804 = vmatprep.subr.mxu0 0.0
      %805 = vmatpush1.msra.mxu0 0.0
      %806 = vmatprep.mubr.f32.mxu0 0.0
      %807 = vmatmul.mubr.f32.gmra.mrb[0].mxu0 %v733
      %v808 = vpop.f32.mrb[0].mxu0
      %v809 = vadd.f32 0.0, %v808
      %v810 = vpop.f32.mrb[0].mxu0
      %v811 = vadd.f32 0.0, %v810
      %812 = vdwg.mxu0
      %813 = vmatprep.subr.mxu0 %v153
      %814 = vmatpush1.msra.mxu0 %v152
      %815 = vmatprep.subr.mxu0 %v157
      %816 = vmatpush1.msra.mxu0 %v156
      %817 = vmatprep.subr.mxu0 %v161
      %818 = vmatpush1.msra.mxu0 %v160
      %819 = vmatprep.subr.mxu0 %v165
      %820 = vmatpush1.msra.mxu0 %v164
      %821 = vmatprep.subr.mxu0 %v169
      %822 = vmatpush1.msra.mxu0 %v168
      %823 = vmatprep.subr.mxu0 %v173
      %824 = vmatpush1.msra.mxu0 %v172
      %825 = vmatprep.subr.mxu0 %v177
      %826 = vmatpush1.msra.mxu0 %v176
      %827 = vmatprep.subr.mxu0 %v181
      %828 = vmatpush1.msra.mxu0 %v180
      %829 = vmatprep.subr.mxu0 %v185
      %830 = vmatpush1.msra.mxu0 %v184
      %831 = vmatprep.subr.mxu0 %v189
      %832 = vmatpush1.msra.mxu0 %v188
      %833 = vmatprep.subr.mxu0 %v193
      %834 = vmatpush1.msra.mxu0 %v192
      %835 = vmatprep.subr.mxu0 %v197
      %836 = vmatpush1.msra.mxu0 %v196
      %837 = vmatprep.subr.mxu0 %v201
      %838 = vmatpush1.msra.mxu0 %v200
      %839 = vmatprep.subr.mxu0 %v205
      %840 = vmatpush1.msra.mxu0 %v204
      %841 = vmatprep.subr.mxu0 %v209
      %842 = vmatpush1.msra.mxu0 %v208
      %843 = vmatprep.subr.mxu0 %v213
      %844 = vmatpush1.msra.mxu0 %v212
      %845 = vmatprep.subr.mxu0 0.0
      %846 = vmatpush1.msra.mxu0 0.0
      %847 = vmatprep.subr.mxu0 0.0
      %848 = vmatpush1.msra.mxu0 0.0
      %849 = vmatprep.subr.mxu0 0.0
      %850 = vmatpush1.msra.mxu0 0.0
      %851 = vmatprep.subr.mxu0 0.0
      %852 = vmatpush1.msra.mxu0 0.0
      %853 = vmatprep.subr.mxu0 0.0
      %854 = vmatpush1.msra.mxu0 0.0
      %855 = vmatprep.subr.mxu0 0.0
      %856 = vmatpush1.msra.mxu0 0.0
      %857 = vmatprep.subr.mxu0 0.0
      %858 = vmatpush1.msra.mxu0 0.0
      %859 = vmatprep.subr.mxu0 0.0
      %860 = vmatpush1.msra.mxu0 0.0
      %861 = vmatprep.subr.mxu0 0.0
      %862 = vmatpush1.msra.mxu0 0.0
      %863 = vmatprep.subr.mxu0 0.0
      %864 = vmatpush1.msra.mxu0 0.0
      %865 = vmatprep.subr.mxu0 0.0
      %866 = vmatpush1.msra.mxu0 0.0
      %867 = vmatprep.subr.mxu0 0.0
      %868 = vmatpush1.msra.mxu0 0.0
      %869 = vmatprep.subr.mxu0 0.0
      %870 = vmatpush1.msra.mxu0 0.0
      %871 = vmatprep.subr.mxu0 0.0
      %872 = vmatpush1.msra.mxu0 0.0
      %873 = vmatprep.subr.mxu0 0.0
      %874 = vmatpush1.msra.mxu0 0.0
      %875 = vmatprep.subr.mxu0 0.0
      %876 = vmatpush1.msra.mxu0 0.0
      %877 = vmatprep.mubr.f32.mxu0 0.0
      %878 = vmatmul.mubr.f32.gmra.mrb[0].mxu0 %v733
      %v879 = vpop.f32.mrb[0].mxu0
      %v880 = vadd.f32 0.0, %v879
      %v881 = vpop.f32.mrb[0].mxu0
      %v882 = vadd.f32 0.0, %v881
      %883 = vdwg.mxu0
      %v884 = vadd.f32 %v738, %v809
      %v885 = vadd.f32 %v739, %v811
      %v886 = vadd.f32 %v740, %v880
      %v887 = vadd.f32 %v741, %v882
      %v888 = vxor.u32 %v884, 2147483648
      %v889 = vmul.f32 %v888, 1.442695
      %v890 = vpow.pop %v889
      %v891 = vadd.f32 %v890, 1.0
      %v892 = vrcp.pop %v891
      %v893 = vmul.f32 1.0, %v892
      %v894 = vxor.u32 %v885, 2147483648
      %v895 = vmul.f32 %v894, 1.442695
      %v896 = vpow.pop %v895
      %v897 = vadd.f32 %v896, 1.0
      %v898 = vrcp.pop %v897
      %v899 = vmul.f32 1.0, %v898
      %v900 = vtanh.pop %v886
      %v901 = vxor.u32 %v887, 2147483648
      %v902 = vmul.f32 %v901, 1.442695
      %v903 = vpow.pop %v902
      %v904 = vadd.f32 %v903, 1.0
      %v905 = vrcp.pop %v904
      %v906 = vmul.f32 1.0, %v905
      %v907 = vmul.f32 %v899, %v734
      %v908 = vmul.f32 %v893, %v900
      %v909 = vadd.f32 %v907, %v908
      %v910 = vtanh.pop %v909
      %v911 = vmul.f32 %v906, %v910
      %s912 = smul.u32 %s728, 8
      %s913 = scalar_lea.vmem [#allocation3], %s912
      %914 = vst [vmem:[%s913] sm:$0xff] %v911
    $region86: #{tpu_custom_call.1} parent=1 // loop_footer
      %s732 = sadd.s32 1, %s728
    $region87: #{tpu_custom_call.1} parent=1 // loop_footer_branch
      %727 = sbr.rel target = $region83
    $region88: #{tpu_custom_call.1} parent=1 // loop_exit
      _
    %v915 = vld [vmem:[%s3] sm:$0xf]
    %v917 = vlaneseq
    %v918 = vshrl.u32 %v917, 7
    %v919 = vsub.s32 0, %v918
    %v920 = vrot.slane %v915, %v919
    %v921 = vlaneseq
    %v922 = vshrl.u32 %v921, 7
    %v923 = vsub.s32 1, %v922
    %v924 = vrot.slane %v915, %v923
    %v925 = vlaneseq
    %v926 = vshrl.u32 %v925, 7
    %v927 = vsub.s32 2, %v926
    %v928 = vrot.slane %v915, %v927
    %v929 = vlaneseq
    %v930 = vshrl.u32 %v929, 7
    %v931 = vsub.s32 3, %v930
    %v932 = vrot.slane %v915, %v931
    loop: start=8, step=1, limit=15
    $region89: #{tpu_custom_call.1} parent=1 // loop_pre_header
      _
    $region90: #{tpu_custom_call.1} parent=1 // loop_header
      %s938 = sphi 8, %s942
      %p939 = scmp.ge.s32.totalorder %s938, 15
      %v943 = vphi %v733, %v1114
      %v944 = vphi %v734, %v1112
    $region91: #{tpu_custom_call.1} parent=1 // loop_header_branch
      %941 = sbr.rel (%p939) target = $region95
    $region92: #{tpu_custom_call.1} parent=1 // loop_body
      %945 = vmatprep.subr.mxu0 %v151
      %946 = vmatpush1.msra.mxu0 %v150
      %947 = vmatprep.subr.mxu0 %v155
      %948 = vmatpush1.msra.mxu0 %v154
      %949 = vmatprep.subr.mxu0 %v159
      %950 = vmatpush1.msra.mxu0 %v158
      %951 = vmatprep.subr.mxu0 %v163
      %952 = vmatpush1.msra.mxu0 %v162
      %953 = vmatprep.subr.mxu0 %v167
      %954 = vmatpush1.msra.mxu0 %v166
      %955 = vmatprep.subr.mxu0 %v171
      %956 = vmatpush1.msra.mxu0 %v170
      %957 = vmatprep.subr.mxu0 %v175
      %958 = vmatpush1.msra.mxu0 %v174
      %959 = vmatprep.subr.mxu0 %v179
      %960 = vmatpush1.msra.mxu0 %v178
      %961 = vmatprep.subr.mxu0 %v183
      %962 = vmatpush1.msra.mxu0 %v182
      %963 = vmatprep.subr.mxu0 %v187
      %964 = vmatpush1.msra.mxu0 %v186
      %965 = vmatprep.subr.mxu0 %v191
      %966 = vmatpush1.msra.mxu0 %v190
      %967 = vmatprep.subr.mxu0 %v195
      %968 = vmatpush1.msra.mxu0 %v194
      %969 = vmatprep.subr.mxu0 %v199
      %970 = vmatpush1.msra.mxu0 %v198
      %971 = vmatprep.subr.mxu0 %v203
      %972 = vmatpush1.msra.mxu0 %v202
      %973 = vmatprep.subr.mxu0 %v207
      %974 = vmatpush1.msra.mxu0 %v206
      %975 = vmatprep.subr.mxu0 %v211
      %976 = vmatpush1.msra.mxu0 %v210
      %977 = vmatprep.subr.mxu0 0.0
      %978 = vmatpush1.msra.mxu0 0.0
      %979 = vmatprep.subr.mxu0 0.0
      %980 = vmatpush1.msra.mxu0 0.0
      %981 = vmatprep.subr.mxu0 0.0
      %982 = vmatpush1.msra.mxu0 0.0
      %983 = vmatprep.subr.mxu0 0.0
      %984 = vmatpush1.msra.mxu0 0.0
      %985 = vmatprep.subr.mxu0 0.0
      %986 = vmatpush1.msra.mxu0 0.0
      %987 = vmatprep.subr.mxu0 0.0
      %988 = vmatpush1.msra.mxu0 0.0
      %989 = vmatprep.subr.mxu0 0.0
      %990 = vmatpush1.msra.mxu0 0.0
      %991 = vmatprep.subr.mxu0 0.0
      %992 = vmatpush1.msra.mxu0 0.0
      %993 = vmatprep.subr.mxu0 0.0
      %994 = vmatpush1.msra.mxu0 0.0
      %995 = vmatprep.subr.mxu0 0.0
      %996 = vmatpush1.msra.mxu0 0.0
      %997 = vmatprep.subr.mxu0 0.0
      %998 = vmatpush1.msra.mxu0 0.0
      %999 = vmatprep.subr.mxu0 0.0
      %1000 = vmatpush1.msra.mxu0 0.0
      %1001 = vmatprep.subr.mxu0 0.0
      %1002 = vmatpush1.msra.mxu0 0.0
      %1003 = vmatprep.subr.mxu0 0.0
      %1004 = vmatpush1.msra.mxu0 0.0
      %1005 = vmatprep.subr.mxu0 0.0
      %1006 = vmatpush1.msra.mxu0 0.0
      %1007 = vmatprep.subr.mxu0 0.0
      %1008 = vmatpush1.msra.mxu0 0.0
      %1009 = vmatprep.mubr.f32.mxu0 0.0
      %1010 = vmatmul.mubr.f32.gmra.mrb[0].mxu0 %v943
      %v1011 = vpop.f32.mrb[0].mxu0
      %v1012 = vadd.f32 0.0, %v1011
      %v1013 = vpop.f32.mrb[0].mxu0
      %v1014 = vadd.f32 0.0, %v1013
      %1015 = vdwg.mxu0
      %1016 = vmatprep.subr.mxu0 %v153
      %1017 = vmatpush1.msra.mxu0 %v152
      %1018 = vmatprep.subr.mxu0 %v157
      %1019 = vmatpush1.msra.mxu0 %v156
      %1020 = vmatprep.subr.mxu0 %v161
      %1021 = vmatpush1.msra.mxu0 %v160
      %1022 = vmatprep.subr.mxu0 %v165
      %1023 = vmatpush1.msra.mxu0 %v164
      %1024 = vmatprep.subr.mxu0 %v169
      %1025 = vmatpush1.msra.mxu0 %v168
      %1026 = vmatprep.subr.mxu0 %v173
      %1027 = vmatpush1.msra.mxu0 %v172
      %1028 = vmatprep.subr.mxu0 %v177
      %1029 = vmatpush1.msra.mxu0 %v176
      %1030 = vmatprep.subr.mxu0 %v181
      %1031 = vmatpush1.msra.mxu0 %v180
      %1032 = vmatprep.subr.mxu0 %v185
      %1033 = vmatpush1.msra.mxu0 %v184
      %1034 = vmatprep.subr.mxu0 %v189
      %1035 = vmatpush1.msra.mxu0 %v188
      %1036 = vmatprep.subr.mxu0 %v193
      %1037 = vmatpush1.msra.mxu0 %v192
      %1038 = vmatprep.subr.mxu0 %v197
      %1039 = vmatpush1.msra.mxu0 %v196
      %1040 = vmatprep.subr.mxu0 %v201
      %1041 = vmatpush1.msra.mxu0 %v200
      %1042 = vmatprep.subr.mxu0 %v205
      %1043 = vmatpush1.msra.mxu0 %v204
      %1044 = vmatprep.subr.mxu0 %v209
      %1045 = vmatpush1.msra.mxu0 %v208
      %1046 = vmatprep.subr.mxu0 %v213
      %1047 = vmatpush1.msra.mxu0 %v212
      %1048 = vmatprep.subr.mxu0 0.0
      %1049 = vmatpush1.msra.mxu0 0.0
      %1050 = vmatprep.subr.mxu0 0.0
      %1051 = vmatpush1.msra.mxu0 0.0
      %1052 = vmatprep.subr.mxu0 0.0
      %1053 = vmatpush1.msra.mxu0 0.0
      %1054 = vmatprep.subr.mxu0 0.0
      %1055 = vmatpush1.msra.mxu0 0.0
      %1056 = vmatprep.subr.mxu0 0.0
      %1057 = vmatpush1.msra.mxu0 0.0
      %1058 = vmatprep.subr.mxu0 0.0
      %1059 = vmatpush1.msra.mxu0 0.0
      %1060 = vmatprep.subr.mxu0 0.0
      %1061 = vmatpush1.msra.mxu0 0.0
      %1062 = vmatprep.subr.mxu0 0.0
      %1063 = vmatpush1.msra.mxu0 0.0
      %1064 = vmatprep.subr.mxu0 0.0
      %1065 = vmatpush1.msra.mxu0 0.0
      %1066 = vmatprep.subr.mxu0 0.0
      %1067 = vmatpush1.msra.mxu0 0.0
      %1068 = vmatprep.subr.mxu0 0.0
      %1069 = vmatpush1.msra.mxu0 0.0
      %1070 = vmatprep.subr.mxu0 0.0
      %1071 = vmatpush1.msra.mxu0 0.0
      %1072 = vmatprep.subr.mxu0 0.0
      %1073 = vmatpush1.msra.mxu0 0.0
      %1074 = vmatprep.subr.mxu0 0.0
      %1075 = vmatpush1.msra.mxu0 0.0
      %1076 = vmatprep.subr.mxu0 0.0
      %1077 = vmatpush1.msra.mxu0 0.0
      %1078 = vmatprep.subr.mxu0 0.0
      %1079 = vmatpush1.msra.mxu0 0.0
      %1080 = vmatprep.mubr.f32.mxu0 0.0
      %1081 = vmatmul.mubr.f32.gmra.mrb[0].mxu0 %v943
      %v1082 = vpop.f32.mrb[0].mxu0
      %v1083 = vadd.f32 0.0, %v1082
      %v1084 = vpop.f32.mrb[0].mxu0
      %v1085 = vadd.f32 0.0, %v1084
      %1086 = vdwg.mxu0
      %v1087 = vadd.f32 %v920, %v1012
      %v1088 = vadd.f32 %v924, %v1014
      %v1089 = vadd.f32 %v928, %v1083
      %v1090 = vadd.f32 %v932, %v1085
      %v1091 = vxor.u32 %v1087, 2147483648
      %v1092 = vmul.f32 %v1091, 1.442695
      %v1093 = vpow.pop %v1092
      %v1094 = vadd.f32 %v1093, 1.0
      %v1095 = vrcp.pop %v1094
      %v1096 = vmul.f32 1.0, %v1095
      %v1097 = vxor.u32 %v1088, 2147483648
      %v1098 = vmul.f32 %v1097, 1.442695
      %v1099 = vpow.pop %v1098
      %v1100 = vadd.f32 %v1099, 1.0
      %v1101 = vrcp.pop %v1100
      %v1102 = vmul.f32 1.0, %v1101
      %v1103 = vtanh.pop %v1089
      %v1104 = vxor.u32 %v1090, 2147483648
      %v1105 = vmul.f32 %v1104, 1.442695
      %v1106 = vpow.pop %v1105
      %v1107 = vadd.f32 %v1106, 1.0
      %v1108 = vrcp.pop %v1107
      %v1109 = vmul.f32 1.0, %v1108
      %v1110 = vmul.f32 %v1102, %v944
      %v1111 = vmul.f32 %v1096, %v1103
      %v1112 = vadd.f32 %v1110, %v1111
      %v1113 = vtanh.pop %v1112
      %v1114 = vmul.f32 %v1109, %v1113
      %s1115 = smul.u32 %s938, 8
      %s1116 = scalar_lea.vmem [#allocation3], %s1115
      %1117 = vst [vmem:[%s1116] sm:$0xff] %v1114
    $region93: #{tpu_custom_call.1} parent=1 // loop_footer
      %s942 = sadd.s32 1, %s938
    $region94: #{tpu_custom_call.1} parent=1 // loop_footer_branch
      %937 = sbr.rel target = $region90
    $region95: #{tpu_custom_call.1} parent=1 // loop_exit
      _
    %v1118 = vld [vmem:[#allocation3] sm:$0xff]
    %v1119 = vld [vmem:[#allocation3 + $0x8] sm:$0xff]
    %v1120 = vld [vmem:[#allocation3 + $0x10] sm:$0xff]
    %v1121 = vld [vmem:[#allocation3 + $0x18] sm:$0xff]
    %v1122 = vld [vmem:[#allocation3 + $0x20] sm:$0xff]
    %v1123 = vld [vmem:[#allocation3 + $0x28] sm:$0xff]
    %v1124 = vld [vmem:[#allocation3 + $0x30] sm:$0xff]
    %v1125 = vld [vmem:[#allocation3 + $0x38] sm:$0xff]
    %v1126 = vld [vmem:[#allocation3 + $0x40] sm:$0xff]
    %v1127 = vld [vmem:[#allocation3 + $0x48] sm:$0xff]
    %v1128 = vld [vmem:[#allocation3 + $0x50] sm:$0xff]
    %v1129 = vld [vmem:[#allocation3 + $0x58] sm:$0xff]
    %v1130 = vld [vmem:[#allocation3 + $0x60] sm:$0xff]
    %v1131 = vld [vmem:[#allocation3 + $0x68] sm:$0xff]
    %v1132 = vld [vmem:[#allocation3 + $0x70] sm:$0xff]
    %v1133 = vld [vmem:[#allocation12] sm:$0xff]
    %v1134 = vld [vmem:[#allocation12 + $0x8] sm:$0xff]
    %v1135 = vld [vmem:[#allocation12 + $0x10] sm:$0xff]
    %v1136 = vld [vmem:[#allocation12 + $0x18] sm:$0xff]
    %v1137 = vld [vmem:[#allocation12 + $0x20] sm:$0xff]
    %v1138 = vld [vmem:[#allocation12 + $0x28] sm:$0xff]
    %v1139 = vld [vmem:[#allocation12 + $0x30] sm:$0xff]
    %v1140 = vld [vmem:[#allocation12 + $0x38] sm:$0xff]
    %v1141 = vld [vmem:[#allocation12 + $0x40] sm:$0xff]
    %v1142 = vld [vmem:[#allocation12 + $0x48] sm:$0xff]
    %v1143 = vld [vmem:[#allocation12 + $0x50] sm:$0xff]
    %v1144 = vld [vmem:[#allocation12 + $0x58] sm:$0xff]
    %v1145 = vld [vmem:[#allocation12 + $0x60] sm:$0xff]
    %v1146 = vld [vmem:[#allocation12 + $0x68] sm:$0xff]
    %v1147 = vld [vmem:[#allocation12 + $0x70] sm:$0xff]
    %v1148 = vld [vmem:[#allocation12 + $0x78] sm:$0xff]
    %v1149 = vld [vmem:[#allocation12 + $0x80] sm:$0xff]
    %v1150 = vld [vmem:[#allocation12 + $0x88] sm:$0xff]
    %v1151 = vld [vmem:[#allocation12 + $0x90] sm:$0xff]
    %v1152 = vld [vmem:[#allocation12 + $0x98] sm:$0xff]
    %v1153 = vld [vmem:[#allocation12 + $0xa0] sm:$0xff]
    %v1154 = vld [vmem:[#allocation12 + $0xa8] sm:$0xff]
    %v1155 = vld [vmem:[#allocation12 + $0xb0] sm:$0xff]
    %v1156 = vld [vmem:[#allocation12 + $0xb8] sm:$0xff]
    %v1157 = vld [vmem:[#allocation12 + $0xc0] sm:$0xff]
    %v1158 = vld [vmem:[#allocation12 + $0xc8] sm:$0xff]
    %v1159 = vld [vmem:[#allocation12 + $0xd0] sm:$0xff]
    %v1160 = vld [vmem:[#allocation12 + $0xd8] sm:$0xff]
    %v1161 = vld [vmem:[#allocation12 + $0xe0] sm:$0xff]
    %v1162 = vld [vmem:[#allocation12 + $0xe8] sm:$0xff]
    %v1163 = vld [vmem:[#allocation12 + $0xf0] sm:$0xff]
    %v1164 = vld [vmem:[#allocation12 + $0xf8] sm:$0xff]
    %v1165 = vld [vmem:[#allocation12 + $0x100] sm:$0xff]
    %v1166 = vld [vmem:[#allocation12 + $0x108] sm:$0xff]
    %v1167 = vld [vmem:[#allocation12 + $0x110] sm:$0xff]
    %v1168 = vld [vmem:[#allocation12 + $0x118] sm:$0xff]
    %v1169 = vld [vmem:[#allocation12 + $0x120] sm:$0xff]
    %v1170 = vld [vmem:[#allocation12 + $0x128] sm:$0xff]
    %v1171 = vld [vmem:[#allocation12 + $0x130] sm:$0xff]
    %v1172 = vld [vmem:[#allocation12 + $0x138] sm:$0xff]
    %v1173 = vld [vmem:[#allocation12 + $0x140] sm:$0xff]
    %v1174 = vld [vmem:[#allocation12 + $0x148] sm:$0xff]
    %v1175 = vld [vmem:[#allocation12 + $0x150] sm:$0xff]
    %v1176 = vld [vmem:[#allocation12 + $0x158] sm:$0xff]
    %v1177 = vld [vmem:[#allocation12 + $0x160] sm:$0xff]
    %v1178 = vld [vmem:[#allocation12 + $0x168] sm:$0xff]
    %v1179 = vld [vmem:[#allocation12 + $0x170] sm:$0xff]
    %v1180 = vld [vmem:[#allocation12 + $0x178] sm:$0xff]
    %v1181 = vld [vmem:[#allocation12 + $0x180] sm:$0xff]
    %v1182 = vld [vmem:[#allocation12 + $0x188] sm:$0xff]
    %v1183 = vld [vmem:[#allocation12 + $0x190] sm:$0xff]
    %v1184 = vld [vmem:[#allocation12 + $0x198] sm:$0xff]
    %v1185 = vld [vmem:[#allocation12 + $0x1a0] sm:$0xff]
    %v1186 = vld [vmem:[#allocation12 + $0x1a8] sm:$0xff]
    %v1187 = vld [vmem:[#allocation12 + $0x1b0] sm:$0xff]
    %v1188 = vld [vmem:[#allocation12 + $0x1b8] sm:$0xff]
    %v1189 = vld [vmem:[#allocation12 + $0x1c0] sm:$0xff]
    %v1190 = vld [vmem:[#allocation12 + $0x1c8] sm:$0xff]
    %v1191 = vld [vmem:[#allocation12 + $0x1d0] sm:$0xff]
    %v1192 = vld [vmem:[#allocation12 + $0x1d8] sm:$0xff]
    %v1193 = vld [vmem:[#allocation12 + $0x1e0] sm:$0xff]
    %v1194 = vld [vmem:[#allocation12 + $0x1e8] sm:$0xff]
    %v1195 = vld [vmem:[#allocation12 + $0x1f0] sm:$0xff]
    %v1196 = vld [vmem:[#allocation12 + $0x1f8] sm:$0xff]
    %v1197 = vld [vmem:[%s7] sm:$0xf]
    %v1199 = vlaneseq
    %v1200 = vshrl.u32 %v1199, 7
    %v1201 = vsub.s32 0, %v1200
    %v1202 = vrot.slane %v1197, %v1201
    %v1203 = vlaneseq
    %v1204 = vshrl.u32 %v1203, 7
    %v1205 = vsub.s32 1, %v1204
    %v1206 = vrot.slane %v1197, %v1205
    %v1207 = vlaneseq
    %v1208 = vshrl.u32 %v1207, 7
    %v1209 = vsub.s32 2, %v1208
    %v1210 = vrot.slane %v1197, %v1209
    %v1211 = vlaneseq
    %v1212 = vshrl.u32 %v1211, 7
    %v1213 = vsub.s32 3, %v1212
    %v1214 = vrot.slane %v1197, %v1213
    %1219 = vmatprep.subr.mxu0 %v1134
    %1220 = vmatpush1.msra.mxu0 %v1133
    %1221 = vmatprep.subr.mxu0 %v1138
    %1222 = vmatpush1.msra.mxu0 %v1137
    %1223 = vmatprep.subr.mxu0 %v1142
    %1224 = vmatpush1.msra.mxu0 %v1141
    %1225 = vmatprep.subr.mxu0 %v1146
    %1226 = vmatpush1.msra.mxu0 %v1145
    %1227 = vmatprep.subr.mxu0 %v1150
    %1228 = vmatpush1.msra.mxu0 %v1149
    %1229 = vmatprep.subr.mxu0 %v1154
    %1230 = vmatpush1.msra.mxu0 %v1153
    %1231 = vmatprep.subr.mxu0 %v1158
    %1232 = vmatpush1.msra.mxu0 %v1157
    %1233 = vmatprep.subr.mxu0 %v1162
    %1234 = vmatpush1.msra.mxu0 %v1161
    %1235 = vmatprep.subr.mxu0 %v1166
    %1236 = vmatpush1.msra.mxu0 %v1165
    %1237 = vmatprep.subr.mxu0 %v1170
    %1238 = vmatpush1.msra.mxu0 %v1169
    %1239 = vmatprep.subr.mxu0 %v1174
    %1240 = vmatpush1.msra.mxu0 %v1173
    %1241 = vmatprep.subr.mxu0 %v1178
    %1242 = vmatpush1.msra.mxu0 %v1177
    %1243 = vmatprep.subr.mxu0 %v1182
    %1244 = vmatpush1.msra.mxu0 %v1181
    %1245 = vmatprep.subr.mxu0 %v1186
    %1246 = vmatpush1.msra.mxu0 %v1185
    %1247 = vmatprep.subr.mxu0 %v1190
    %1248 = vmatpush1.msra.mxu0 %v1189
    %1249 = vmatprep.subr.mxu0 %v1194
    %1250 = vmatpush1.msra.mxu0 %v1193
    %1251 = vmatprep.subr.mxu0 0.0
    %1252 = vmatpush1.msra.mxu0 0.0
    %1253 = vmatprep.subr.mxu0 0.0
    %1254 = vmatpush1.msra.mxu0 0.0
    %1255 = vmatprep.subr.mxu0 0.0
    %1256 = vmatpush1.msra.mxu0 0.0
    %1257 = vmatprep.subr.mxu0 0.0
    %1258 = vmatpush1.msra.mxu0 0.0
    %1259 = vmatprep.subr.mxu0 0.0
    %1260 = vmatpush1.msra.mxu0 0.0
    %1261 = vmatprep.subr.mxu0 0.0
    %1262 = vmatpush1.msra.mxu0 0.0
    %1263 = vmatprep.subr.mxu0 0.0
    %1264 = vmatpush1.msra.mxu0 0.0
    %1265 = vmatprep.subr.mxu0 0.0
    %1266 = vmatpush1.msra.mxu0 0.0
    %1267 = vmatprep.subr.mxu0 0.0
    %1268 = vmatpush1.msra.mxu0 0.0
    %1269 = vmatprep.subr.mxu0 0.0
    %1270 = vmatpush1.msra.mxu0 0.0
    %1271 = vmatprep.subr.mxu0 0.0
    %1272 = vmatpush1.msra.mxu0 0.0
    %1273 = vmatprep.subr.mxu0 0.0
    %1274 = vmatpush1.msra.mxu0 0.0
    %1275 = vmatprep.subr.mxu0 0.0
    %1276 = vmatpush1.msra.mxu0 0.0
    %1277 = vmatprep.subr.mxu0 0.0
    %1278 = vmatpush1.msra.mxu0 0.0
    %1279 = vmatprep.subr.mxu0 0.0
    %1280 = vmatpush1.msra.mxu0 0.0
    %1281 = vmatprep.subr.mxu0 0.0
    %1282 = vmatpush1.msra.mxu0 0.0
    %1283 = vmatprep.mubr.f32.mxu0 0.0
    %1284 = vmatmul.mubr.f32.gmra.mrb[0].mxu0 %v1118
    %v1285 = vpop.f32.mrb[0].mxu0
    %v1286 = vadd.f32 %v1202, %v1285
    %v1287 = vpop.f32.mrb[0].mxu0
    %v1288 = vadd.f32 %v1206, %v1287
    %1289 = vmatprep.mubr.f32.mxu0 0.0
    %1290 = vmatmul.mubr.f32.gmra.mrb[0].mxu0 %v1119
    %v1291 = vpop.f32.mrb[0].mxu0
    %v1292 = vadd.f32 %v1202, %v1291
    %v1293 = vpop.f32.mrb[0].mxu0
    %v1294 = vadd.f32 %v1206, %v1293
    %1295 = vmatprep.mubr.f32.mxu0 0.0
    %1296 = vmatmul.mubr.f32.gmra.mrb[0].mxu0 %v1120
    %v1297 = vpop.f32.mrb[0].mxu0
    %v1298 = vadd.f32 %v1202, %v1297
    %v1299 = vpop.f32.mrb[0].mxu0
    %v1300 = vadd.f32 %v1206, %v1299
    %1301 = vmatprep.mubr.f32.mxu0 0.0
    %1302 = vmatmul.mubr.f32.gmra.mrb[0].mxu0 %v1121
    %v1303 = vpop.f32.mrb[0].mxu0
    %v1304 = vadd.f32 %v1202, %v1303
    %v1305 = vpop.f32.mrb[0].mxu0
    %v1306 = vadd.f32 %v1206, %v1305
    %1307 = vmatprep.mubr.f32.mxu0 0.0
    %1308 = vmatmul.mubr.f32.gmra.mrb[0].mxu0 %v1122
    %v1309 = vpop.f32.mrb[0].mxu0
    %v1310 = vadd.f32 %v1202, %v1309
    %v1311 = vpop.f32.mrb[0].mxu0
    %v1312 = vadd.f32 %v1206, %v1311
    %1313 = vmatprep.mubr.f32.mxu0 0.0
    %1314 = vmatmul.mubr.f32.gmra.mrb[0].mxu0 %v1123
    %v1315 = vpop.f32.mrb[0].mxu0
    %v1316 = vadd.f32 %v1202, %v1315
    %v1317 = vpop.f32.mrb[0].mxu0
    %v1318 = vadd.f32 %v1206, %v1317
    %1319 = vmatprep.mubr.f32.mxu0 0.0
    %1320 = vmatmul.mubr.f32.gmra.mrb[0].mxu0 %v1124
    %v1321 = vpop.f32.mrb[0].mxu0
    %v1322 = vadd.f32 %v1202, %v1321
    %v1323 = vpop.f32.mrb[0].mxu0
    %v1324 = vadd.f32 %v1206, %v1323
    %1325 = vmatprep.mubr.f32.mxu0 0.0
    %1326 = vmatmul.mubr.f32.gmra.mrb[0].mxu0 %v1125
    %v1327 = vpop.f32.mrb[0].mxu0
    %v1328 = vadd.f32 %v1202, %v1327
    %v1329 = vpop.f32.mrb[0].mxu0
    %v1330 = vadd.f32 %v1206, %v1329
    %1331 = vmatprep.mubr.f32.mxu0 0.0
    %1332 = vmatmul.mubr.f32.gmra.mrb[0].mxu0 %v1126
    %v1333 = vpop.f32.mrb[0].mxu0
    %v1334 = vadd.f32 %v1202, %v1333
    %v1335 = vpop.f32.mrb[0].mxu0
    %v1336 = vadd.f32 %v1206, %v1335
    %1337 = vmatprep.mubr.f32.mxu0 0.0
    %1338 = vmatmul.mubr.f32.gmra.mrb[0].mxu0 %v1127
    %v1339 = vpop.f32.mrb[0].mxu0
    %v1340 = vadd.f32 %v1202, %v1339
    %v1341 = vpop.f32.mrb[0].mxu0
    %v1342 = vadd.f32 %v1206, %v1341
    %1343 = vmatprep.mubr.f32.mxu0 0.0
    %1344 = vmatmul.mubr.f32.gmra.mrb[0].mxu0 %v1128
    %v1345 = vpop.f32.mrb[0].mxu0
    %v1346 = vadd.f32 %v1202, %v1345
    %v1347 = vpop.f32.mrb[0].mxu0
    %v1348 = vadd.f32 %v1206, %v1347
    %1349 = vmatprep.mubr.f32.mxu0 0.0
    %1350 = vmatmul.mubr.f32.gmra.mrb[0].mxu0 %v1129
    %v1351 = vpop.f32.mrb[0].mxu0
    %v1352 = vadd.f32 %v1202, %v1351
    %v1353 = vpop.f32.mrb[0].mxu0
    %v1354 = vadd.f32 %v1206, %v1353
    %1355 = vmatprep.mubr.f32.mxu0 0.0
    %1356 = vmatmul.mubr.f32.gmra.mrb[0].mxu0 %v1130
    %v1357 = vpop.f32.mrb[0].mxu0
    %v1358 = vadd.f32 %v1202, %v1357
    %v1359 = vpop.f32.mrb[0].mxu0
    %v1360 = vadd.f32 %v1206, %v1359
    %1361 = vmatprep.mubr.f32.mxu0 0.0
    %1362 = vmatmul.mubr.f32.gmra.mrb[0].mxu0 %v1131
    %v1363 = vpop.f32.mrb[0].mxu0
    %v1364 = vadd.f32 %v1202, %v1363
    %v1365 = vpop.f32.mrb[0].mxu0
    %v1366 = vadd.f32 %v1206, %v1365
    %1367 = vmatprep.mubr.f32.mxu0 0.0
    %1368 = vmatmul.mubr.f32.gmra.mrb[0].mxu0 %v1132
    %v1369 = vpop.f32.mrb[0].mxu0
    %v1370 = vadd.f32 %v1202, %v1369
    %v1371 = vpop.f32.mrb[0].mxu0
    %v1372 = vadd.f32 %v1206, %v1371
    %1373 = vdwg.mxu0
    %1374 = vmatprep.subr.mxu0 %v1136
    %1375 = vmatpush1.msra.mxu0 %v1135
    %1376 = vmatprep.subr.mxu0 %v1140
    %1377 = vmatpush1.msra.mxu0 %v1139
    %1378 = vmatprep.subr.mxu0 %v1144
    %1379 = vmatpush1.msra.mxu0 %v1143
    %1380 = vmatprep.subr.mxu0 %v1148
    %1381 = vmatpush1.msra.mxu0 %v1147
    %1382 = vmatprep.subr.mxu0 %v1152
    %1383 = vmatpush1.msra.mxu0 %v1151
    %1384 = vmatprep.subr.mxu0 %v1156
    %1385 = vmatpush1.msra.mxu0 %v1155
    %1386 = vmatprep.subr.mxu0 %v1160
    %1387 = vmatpush1.msra.mxu0 %v1159
    %1388 = vmatprep.subr.mxu0 %v1164
    %1389 = vmatpush1.msra.mxu0 %v1163
    %1390 = vmatprep.subr.mxu0 %v1168
    %1391 = vmatpush1.msra.mxu0 %v1167
    %1392 = vmatprep.subr.mxu0 %v1172
    %1393 = vmatpush1.msra.mxu0 %v1171
    %1394 = vmatprep.subr.mxu0 %v1176
    %1395 = vmatpush1.msra.mxu0 %v1175
    %1396 = vmatprep.subr.mxu0 %v1180
    %1397 = vmatpush1.msra.mxu0 %v1179
    %1398 = vmatprep.subr.mxu0 %v1184
    %1399 = vmatpush1.msra.mxu0 %v1183
    %1400 = vmatprep.subr.mxu0 %v1188
    %1401 = vmatpush1.msra.mxu0 %v1187
    %1402 = vmatprep.subr.mxu0 %v1192
    %1403 = vmatpush1.msra.mxu0 %v1191
    %1404 = vmatprep.subr.mxu0 %v1196
    %1405 = vmatpush1.msra.mxu0 %v1195
    %1406 = vmatprep.subr.mxu0 0.0
    %1407 = vmatpush1.msra.mxu0 0.0
    %1408 = vmatprep.subr.mxu0 0.0
    %1409 = vmatpush1.msra.mxu0 0.0
    %1410 = vmatprep.subr.mxu0 0.0
    %1411 = vmatpush1.msra.mxu0 0.0
    %1412 = vmatprep.subr.mxu0 0.0
    %1413 = vmatpush1.msra.mxu0 0.0
    %1414 = vmatprep.subr.mxu0 0.0
    %1415 = vmatpush1.msra.mxu0 0.0
    %1416 = vmatprep.subr.mxu0 0.0
    %1417 = vmatpush1.msra.mxu0 0.0
    %1418 = vmatprep.subr.mxu0 0.0
    %1419 = vmatpush1.msra.mxu0 0.0
    %1420 = vmatprep.subr.mxu0 0.0
    %1421 = vmatpush1.msra.mxu0 0.0
    %1422 = vmatprep.subr.mxu0 0.0
    %1423 = vmatpush1.msra.mxu0 0.0
    %1424 = vmatprep.subr.mxu0 0.0
    %1425 = vmatpush1.msra.mxu0 0.0
    %1426 = vmatprep.subr.mxu0 0.0
    %1427 = vmatpush1.msra.mxu0 0.0
    %1428 = vmatprep.subr.mxu0 0.0
    %1429 = vmatpush1.msra.mxu0 0.0
    %1430 = vmatprep.subr.mxu0 0.0
    %1431 = vmatpush1.msra.mxu0 0.0
    %1432 = vmatprep.subr.mxu0 0.0
    %1433 = vmatpush1.msra.mxu0 0.0
    %1434 = vmatprep.subr.mxu0 0.0
    %1435 = vmatpush1.msra.mxu0 0.0
    %1436 = vmatprep.subr.mxu0 0.0
    %1437 = vmatpush1.msra.mxu0 0.0
    %1438 = vmatprep.mubr.f32.mxu0 0.0
    %1439 = vmatmul.mubr.f32.gmra.mrb[0].mxu0 %v1118
    %v1440 = vpop.f32.mrb[0].mxu0
    %v1441 = vadd.f32 %v1210, %v1440
    %v1442 = vpop.f32.mrb[0].mxu0
    %v1443 = vadd.f32 %v1214, %v1442
    %1444 = vmatprep.mubr.f32.mxu0 0.0
    %1445 = vmatmul.mubr.f32.gmra.mrb[0].mxu0 %v1119
    %v1446 = vpop.f32.mrb[0].mxu0
    %v1447 = vadd.f32 %v1210, %v1446
    %v1448 = vpop.f32.mrb[0].mxu0
    %v1449 = vadd.f32 %v1214, %v1448
    %1450 = vmatprep.mubr.f32.mxu0 0.0
    %1451 = vmatmul.mubr.f32.gmra.mrb[0].mxu0 %v1120
    %v1452 = vpop.f32.mrb[0].mxu0
    %v1453 = vadd.f32 %v1210, %v1452
    %v1454 = vpop.f32.mrb[0].mxu0
    %v1455 = vadd.f32 %v1214, %v1454
    %1456 = vmatprep.mubr.f32.mxu0 0.0
    %1457 = vmatmul.mubr.f32.gmra.mrb[0].mxu0 %v1121
    %v1458 = vpop.f32.mrb[0].mxu0
    %v1459 = vadd.f32 %v1210, %v1458
    %v1460 = vpop.f32.mrb[0].mxu0
    %v1461 = vadd.f32 %v1214, %v1460
    %1462 = vmatprep.mubr.f32.mxu0 0.0
    %1463 = vmatmul.mubr.f32.gmra.mrb[0].mxu0 %v1122
    %v1464 = vpop.f32.mrb[0].mxu0
    %v1465 = vadd.f32 %v1210, %v1464
    %v1466 = vpop.f32.mrb[0].mxu0
    %v1467 = vadd.f32 %v1214, %v1466
    %1468 = vmatprep.mubr.f32.mxu0 0.0
    %1469 = vmatmul.mubr.f32.gmra.mrb[0].mxu0 %v1123
    %v1470 = vpop.f32.mrb[0].mxu0
    %v1471 = vadd.f32 %v1210, %v1470
    %v1472 = vpop.f32.mrb[0].mxu0
    %v1473 = vadd.f32 %v1214, %v1472
    %1474 = vmatprep.mubr.f32.mxu0 0.0
    %1475 = vmatmul.mubr.f32.gmra.mrb[0].mxu0 %v1124
    %v1476 = vpop.f32.mrb[0].mxu0
    %v1477 = vadd.f32 %v1210, %v1476
    %v1478 = vpop.f32.mrb[0].mxu0
    %v1479 = vadd.f32 %v1214, %v1478
    %1480 = vmatprep.mubr.f32.mxu0 0.0
    %1481 = vmatmul.mubr.f32.gmra.mrb[0].mxu0 %v1125
    %v1482 = vpop.f32.mrb[0].mxu0
    %v1483 = vadd.f32 %v1210, %v1482
    %v1484 = vpop.f32.mrb[0].mxu0
    %v1485 = vadd.f32 %v1214, %v1484
    %1486 = vmatprep.mubr.f32.mxu0 0.0
    %1487 = vmatmul.mubr.f32.gmra.mrb[0].mxu0 %v1126
    %v1488 = vpop.f32.mrb[0].mxu0
    %v1489 = vadd.f32 %v1210, %v1488
    %v1490 = vpop.f32.mrb[0].mxu0
    %v1491 = vadd.f32 %v1214, %v1490
    %1492 = vmatprep.mubr.f32.mxu0 0.0
    %1493 = vmatmul.mubr.f32.gmra.mrb[0].mxu0 %v1127
    %v1494 = vpop.f32.mrb[0].mxu0
    %v1495 = vadd.f32 %v1210, %v1494
    %v1496 = vpop.f32.mrb[0].mxu0
    %v1497 = vadd.f32 %v1214, %v1496
    %1498 = vmatprep.mubr.f32.mxu0 0.0
    %1499 = vmatmul.mubr.f32.gmra.mrb[0].mxu0 %v1128
    %v1500 = vpop.f32.mrb[0].mxu0
    %v1501 = vadd.f32 %v1210, %v1500
    %v1502 = vpop.f32.mrb[0].mxu0
    %v1503 = vadd.f32 %v1214, %v1502
    %1504 = vmatprep.mubr.f32.mxu0 0.0
    %1505 = vmatmul.mubr.f32.gmra.mrb[0].mxu0 %v1129
    %v1506 = vpop.f32.mrb[0].mxu0
    %v1507 = vadd.f32 %v1210, %v1506
    %v1508 = vpop.f32.mrb[0].mxu0
    %v1509 = vadd.f32 %v1214, %v1508
    %1510 = vmatprep.mubr.f32.mxu0 0.0
    %1511 = vmatmul.mubr.f32.gmra.mrb[0].mxu0 %v1130
    %v1512 = vpop.f32.mrb[0].mxu0
    %v1513 = vadd.f32 %v1210, %v1512
    %v1514 = vpop.f32.mrb[0].mxu0
    %v1515 = vadd.f32 %v1214, %v1514
    %1516 = vmatprep.mubr.f32.mxu0 0.0
    %1517 = vmatmul.mubr.f32.gmra.mrb[0].mxu0 %v1131
    %v1518 = vpop.f32.mrb[0].mxu0
    %v1519 = vadd.f32 %v1210, %v1518
    %v1520 = vpop.f32.mrb[0].mxu0
    %v1521 = vadd.f32 %v1214, %v1520
    %1522 = vmatprep.mubr.f32.mxu0 0.0
    %1523 = vmatmul.mubr.f32.gmra.mrb[0].mxu0 %v1132
    %v1524 = vpop.f32.mrb[0].mxu0
    %v1525 = vadd.f32 %v1210, %v1524
    %v1526 = vpop.f32.mrb[0].mxu0
    %v1527 = vadd.f32 %v1214, %v1526
    %1528 = vdwg.mxu0
    %1529 = vst [vmem:[#allocation4] sm:$0xff] %v1286
    %1530 = vst [vmem:[#allocation4 + $0x8] sm:$0xff] %v1288
    %1531 = vst [vmem:[#allocation4 + $0x10] sm:$0xff] %v1441
    %1532 = vst [vmem:[#allocation4 + $0x18] sm:$0xff] %v1443
    %1533 = vst [vmem:[#allocation4 + $0x20] sm:$0xff] %v1292
    %1534 = vst [vmem:[#allocation4 + $0x28] sm:$0xff] %v1294
    %1535 = vst [vmem:[#allocation4 + $0x30] sm:$0xff] %v1447
    %1536 = vst [vmem:[#allocation4 + $0x38] sm:$0xff] %v1449
    %1537 = vst [vmem:[#allocation4 + $0x40] sm:$0xff] %v1298
    %1538 = vst [vmem:[#allocation4 + $0x48] sm:$0xff] %v1300
    %1539 = vst [vmem:[#allocation4 + $0x50] sm:$0xff] %v1453
    %1540 = vst [vmem:[#allocation4 + $0x58] sm:$0xff] %v1455
    %1541 = vst [vmem:[#allocation4 + $0x60] sm:$0xff] %v1304
    %1542 = vst [vmem:[#allocation4 + $0x68] sm:$0xff] %v1306
    %1543 = vst [vmem:[#allocation4 + $0x70] sm:$0xff] %v1459
    %1544 = vst [vmem:[#allocation4 + $0x78] sm:$0xff] %v1461
    %1545 = vst [vmem:[#allocation4 + $0x80] sm:$0xff] %v1310
    %1546 = vst [vmem:[#allocation4 + $0x88] sm:$0xff] %v1312
    %1547 = vst [vmem:[#allocation4 + $0x90] sm:$0xff] %v1465
    %1548 = vst [vmem:[#allocation4 + $0x98] sm:$0xff] %v1467
    %1549 = vst [vmem:[#allocation4 + $0xa0] sm:$0xff] %v1316
    %1550 = vst [vmem:[#allocation4 + $0xa8] sm:$0xff] %v1318
    %1551 = vst [vmem:[#allocation4 + $0xb0] sm:$0xff] %v1471
    %1552 = vst [vmem:[#allocation4 + $0xb8] sm:$0xff] %v1473
    %1553 = vst [vmem:[#allocation4 + $0xc0] sm:$0xff] %v1322
    %1554 = vst [vmem:[#allocation4 + $0xc8] sm:$0xff] %v1324
    %1555 = vst [vmem:[#allocation4 + $0xd0] sm:$0xff] %v1477
    %1556 = vst [vmem:[#allocation4 + $0xd8] sm:$0xff] %v1479
    %1557 = vst [vmem:[#allocation4 + $0xe0] sm:$0xff] %v1328
    %1558 = vst [vmem:[#allocation4 + $0xe8] sm:$0xff] %v1330
    %1559 = vst [vmem:[#allocation4 + $0xf0] sm:$0xff] %v1483
    %1560 = vst [vmem:[#allocation4 + $0xf8] sm:$0xff] %v1485
    %1561 = vst [vmem:[#allocation4 + $0x100] sm:$0xff] %v1334
    %1562 = vst [vmem:[#allocation4 + $0x108] sm:$0xff] %v1336
    %1563 = vst [vmem:[#allocation4 + $0x110] sm:$0xff] %v1489
    %1564 = vst [vmem:[#allocation4 + $0x118] sm:$0xff] %v1491
    %1565 = vst [vmem:[#allocation4 + $0x120] sm:$0xff] %v1340
    %1566 = vst [vmem:[#allocation4 + $0x128] sm:$0xff] %v1342
    %1567 = vst [vmem:[#allocation4 + $0x130] sm:$0xff] %v1495
    %1568 = vst [vmem:[#allocation4 + $0x138] sm:$0xff] %v1497
    %1569 = vst [vmem:[#allocation4 + $0x140] sm:$0xff] %v1346
    %1570 = vst [vmem:[#allocation4 + $0x148] sm:$0xff] %v1348
    %1571 = vst [vmem:[#allocation4 + $0x150] sm:$0xff] %v1501
    %1572 = vst [vmem:[#allocation4 + $0x158] sm:$0xff] %v1503
    %1573 = vst [vmem:[#allocation4 + $0x160] sm:$0xff] %v1352
    %1574 = vst [vmem:[#allocation4 + $0x168] sm:$0xff] %v1354
    %1575 = vst [vmem:[#allocation4 + $0x170] sm:$0xff] %v1507
    %1576 = vst [vmem:[#allocation4 + $0x178] sm:$0xff] %v1509
    %1577 = vst [vmem:[#allocation4 + $0x180] sm:$0xff] %v1358
    %1578 = vst [vmem:[#allocation4 + $0x188] sm:$0xff] %v1360
    %1579 = vst [vmem:[#allocation4 + $0x190] sm:$0xff] %v1513
    %1580 = vst [vmem:[#allocation4 + $0x198] sm:$0xff] %v1515
    %1581 = vst [vmem:[#allocation4 + $0x1a0] sm:$0xff] %v1364
    %1582 = vst [vmem:[#allocation4 + $0x1a8] sm:$0xff] %v1366
    %1583 = vst [vmem:[#allocation4 + $0x1b0] sm:$0xff] %v1519
    %1584 = vst [vmem:[#allocation4 + $0x1b8] sm:$0xff] %v1521
    %1585 = vst [vmem:[#allocation4 + $0x1c0] sm:$0xff] %v1370
    %1586 = vst [vmem:[#allocation4 + $0x1c8] sm:$0xff] %v1372
    %1587 = vst [vmem:[#allocation4 + $0x1d0] sm:$0xff] %v1525
    %1588 = vst [vmem:[#allocation4 + $0x1d8] sm:$0xff] %v1527
    loop: start=0, step=1, limit=8
    $region96: #{tpu_custom_call.1} parent=1 // loop_pre_header
      _
    $region97: #{tpu_custom_call.1} parent=1 // loop_header
      %s1590 = sphi 0, %s1594
      %p1591 = scmp.ge.s32.totalorder %s1590, 8
      %v1595 = vphi 0.0, %v1773
      %v1596 = vphi 0.0, %v1771
    $region98: #{tpu_custom_call.1} parent=1 // loop_header_branch
      %1593 = sbr.rel (%p1591) target = $region102
    $region99: #{tpu_custom_call.1} parent=1 // loop_body
      %s1597 = smul.u32 %s1590, 4
      %s1598 = smul.addr %s1597, 8
      %s1599 = scalar_lea.vmem [#allocation4], %s1598
      %v1600 = vld [vmem:[%s1599] sm:$0xff]
      %v1601 = vld [vmem:[%s1599 + $0x8] sm:$0xff]
      %v1602 = vld [vmem:[%s1599 + $0x10] sm:$0xff]
      %v1603 = vld [vmem:[%s1599 + $0x18] sm:$0xff]
      %1604 = vmatprep.subr.mxu0 %v215
      %1605 = vmatpush1.msra.mxu0 %v214
      %1606 = vmatprep.subr.mxu0 %v219
      %1607 = vmatpush1.msra.mxu0 %v218
      %1608 = vmatprep.subr.mxu0 %v223
      %1609 = vmatpush1.msra.mxu0 %v222
      %1610 = vmatprep.subr.mxu0 %v227
      %1611 = vmatpush1.msra.mxu0 %v226
      %1612 = vmatprep.subr.mxu0 %v231
      %1613 = vmatpush1.msra.mxu0 %v230
      %1614 = vmatprep.subr.mxu0 %v235
      %1615 = vmatpush1.msra.mxu0 %v234
      %1616 = vmatprep.subr.mxu0 %v239
      %1617 = vmatpush1.msra.mxu0 %v238
      %1618 = vmatprep.subr.mxu0 %v243
      %1619 = vmatpush1.msra.mxu0 %v242
      %1620 = vmatprep.subr.mxu0 %v247
      %1621 = vmatpush1.msra.mxu0 %v246
      %1622 = vmatprep.subr.mxu0 %v251
      %1623 = vmatpush1.msra.mxu0 %v250
      %1624 = vmatprep.subr.mxu0 %v255
      %1625 = vmatpush1.msra.mxu0 %v254
      %1626 = vmatprep.subr.mxu0 %v259
      %1627 = vmatpush1.msra.mxu0 %v258
      %1628 = vmatprep.subr.mxu0 %v263
      %1629 = vmatpush1.msra.mxu0 %v262
      %1630 = vmatprep.subr.mxu0 %v267
      %1631 = vmatpush1.msra.mxu0 %v266
      %1632 = vmatprep.subr.mxu0 %v271
      %1633 = vmatpush1.msra.mxu0 %v270
      %1634 = vmatprep.subr.mxu0 %v275
      %1635 = vmatpush1.msra.mxu0 %v274
      %1636 = vmatprep.subr.mxu0 0.0
      %1637 = vmatpush1.msra.mxu0 0.0
      %1638 = vmatprep.subr.mxu0 0.0
      %1639 = vmatpush1.msra.mxu0 0.0
      %1640 = vmatprep.subr.mxu0 0.0
      %1641 = vmatpush1.msra.mxu0 0.0
      %1642 = vmatprep.subr.mxu0 0.0
      %1643 = vmatpush1.msra.mxu0 0.0
      %1644 = vmatprep.subr.mxu0 0.0
      %1645 = vmatpush1.msra.mxu0 0.0
      %1646 = vmatprep.subr.mxu0 0.0
      %1647 = vmatpush1.msra.mxu0 0.0
      %1648 = vmatprep.subr.mxu0 0.0
      %1649 = vmatpush1.msra.mxu0 0.0
      %1650 = vmatprep.subr.mxu0 0.0
      %1651 = vmatpush1.msra.mxu0 0.0
      %1652 = vmatprep.subr.mxu0 0.0
      %1653 = vmatpush1.msra.mxu0 0.0
      %1654 = vmatprep.subr.mxu0 0.0
      %1655 = vmatpush1.msra.mxu0 0.0
      %1656 = vmatprep.subr.mxu0 0.0
      %1657 = vmatpush1.msra.mxu0 0.0
      %1658 = vmatprep.subr.mxu0 0.0
      %1659 = vmatpush1.msra.mxu0 0.0
      %1660 = vmatprep.subr.mxu0 0.0
      %1661 = vmatpush1.msra.mxu0 0.0
      %1662 = vmatprep.subr.mxu0 0.0
      %1663 = vmatpush1.msra.mxu0 0.0
      %1664 = vmatprep.subr.mxu0 0.0
      %1665 = vmatpush1.msra.mxu0 0.0
      %1666 = vmatprep.subr.mxu0 0.0
      %1667 = vmatpush1.msra.mxu0 0.0
      %1668 = vmatprep.mubr.f32.mxu0 0.0
      %1669 = vmatmul.mubr.f32.gmra.mrb[0].mxu0 %v1595
      %v1670 = vpop.f32.mrb[0].mxu0
      %v1671 = vadd.f32 0.0, %v1670
      %v1672 = vpop.f32.mrb[0].mxu0
      %v1673 = vadd.f32 0.0, %v1672
      %1674 = vdwg.mxu0
      %1675 = vmatprep.subr.mxu0 %v217
      %1676 = vmatpush1.msra.mxu0 %v216
      %1677 = vmatprep.subr.mxu0 %v221
      %1678 = vmatpush1.msra.mxu0 %v220
      %1679 = vmatprep.subr.mxu0 %v225
      %1680 = vmatpush1.msra.mxu0 %v224
      %1681 = vmatprep.subr.mxu0 %v229
      %1682 = vmatpush1.msra.mxu0 %v228
      %1683 = vmatprep.subr.mxu0 %v233
      %1684 = vmatpush1.msra.mxu0 %v232
      %1685 = vmatprep.subr.mxu0 %v237
      %1686 = vmatpush1.msra.mxu0 %v236
      %1687 = vmatprep.subr.mxu0 %v241
      %1688 = vmatpush1.msra.mxu0 %v240
      %1689 = vmatprep.subr.mxu0 %v245
      %1690 = vmatpush1.msra.mxu0 %v244
      %1691 = vmatprep.subr.mxu0 %v249
      %1692 = vmatpush1.msra.mxu0 %v248
      %1693 = vmatprep.subr.mxu0 %v253
      %1694 = vmatpush1.msra.mxu0 %v252
      %1695 = vmatprep.subr.mxu0 %v257
      %1696 = vmatpush1.msra.mxu0 %v256
      %1697 = vmatprep.subr.mxu0 %v261
      %1698 = vmatpush1.msra.mxu0 %v260
      %1699 = vmatprep.subr.mxu0 %v265
      %1700 = vmatpush1.msra.mxu0 %v264
      %1701 = vmatprep.subr.mxu0 %v269
      %1702 = vmatpush1.msra.mxu0 %v268
      %1703 = vmatprep.subr.mxu0 %v273
      %1704 = vmatpush1.msra.mxu0 %v272
      %1705 = vmatprep.subr.mxu0 %v277
      %1706 = vmatpush1.msra.mxu0 %v276
      %1707 = vmatprep.subr.mxu0 0.0
      %1708 = vmatpush1.msra.mxu0 0.0
      %1709 = vmatprep.subr.mxu0 0.0
      %1710 = vmatpush1.msra.mxu0 0.0
      %1711 = vmatprep.subr.mxu0 0.0
      %1712 = vmatpush1.msra.mxu0 0.0
      %1713 = vmatprep.subr.mxu0 0.0
      %1714 = vmatpush1.msra.mxu0 0.0
      %1715 = vmatprep.subr.mxu0 0.0
      %1716 = vmatpush1.msra.mxu0 0.0
      %1717 = vmatprep.subr.mxu0 0.0
      %1718 = vmatpush1.msra.mxu0 0.0
      %1719 = vmatprep.subr.mxu0 0.0
      %1720 = vmatpush1.msra.mxu0 0.0
      %1721 = vmatprep.subr.mxu0 0.0
      %1722 = vmatpush1.msra.mxu0 0.0
      %1723 = vmatprep.subr.mxu0 0.0
      %1724 = vmatpush1.msra.mxu0 0.0
      %1725 = vmatprep.subr.mxu0 0.0
      %1726 = vmatpush1.msra.mxu0 0.0
      %1727 = vmatprep.subr.mxu0 0.0
      %1728 = vmatpush1.msra.mxu0 0.0
      %1729 = vmatprep.subr.mxu0 0.0
      %1730 = vmatpush1.msra.mxu0 0.0
      %1731 = vmatprep.subr.mxu0 0.0
      %1732 = vmatpush1.msra.mxu0 0.0
      %1733 = vmatprep.subr.mxu0 0.0
      %1734 = vmatpush1.msra.mxu0 0.0
      %1735 = vmatprep.subr.mxu0 0.0
      %1736 = vmatpush1.msra.mxu0 0.0
      %1737 = vmatprep.subr.mxu0 0.0
      %1738 = vmatpush1.msra.mxu0 0.0
      %1739 = vmatprep.mubr.f32.mxu0 0.0
      %1740 = vmatmul.mubr.f32.gmra.mrb[0].mxu0 %v1595
      %v1741 = vpop.f32.mrb[0].mxu0
      %v1742 = vadd.f32 0.0, %v1741
      %v1743 = vpop.f32.mrb[0].mxu0
      %v1744 = vadd.f32 0.0, %v1743
      %1745 = vdwg.mxu0
      %v1746 = vadd.f32 %v1600, %v1671
      %v1747 = vadd.f32 %v1601, %v1673
      %v1748 = vadd.f32 %v1602, %v1742
      %v1749 = vadd.f32 %v1603, %v1744
      %v1750 = vxor.u32 %v1746, 2147483648
      %v1751 = vmul.f32 %v1750, 1.442695
      %v1752 = vpow.pop %v1751
      %v1753 = vadd.f32 %v1752, 1.0
      %v1754 = vrcp.pop %v1753
      %v1755 = vmul.f32 1.0, %v1754
      %v1756 = vxor.u32 %v1747, 2147483648
      %v1757 = vmul.f32 %v1756, 1.442695
      %v1758 = vpow.pop %v1757
      %v1759 = vadd.f32 %v1758, 1.0
      %v1760 = vrcp.pop %v1759
      %v1761 = vmul.f32 1.0, %v1760
      %v1762 = vtanh.pop %v1748
      %v1763 = vxor.u32 %v1749, 2147483648
      %v1764 = vmul.f32 %v1763, 1.442695
      %v1765 = vpow.pop %v1764
      %v1766 = vadd.f32 %v1765, 1.0
      %v1767 = vrcp.pop %v1766
      %v1768 = vmul.f32 1.0, %v1767
      %v1769 = vmul.f32 %v1761, %v1596
      %v1770 = vmul.f32 %v1755, %v1762
      %v1771 = vadd.f32 %v1769, %v1770
      %v1772 = vtanh.pop %v1771
      %v1773 = vmul.f32 %v1768, %v1772
    $region100: #{tpu_custom_call.1} parent=1 // loop_footer
      %s1594 = sadd.s32 1, %s1590
    $region101: #{tpu_custom_call.1} parent=1 // loop_footer_branch
      %1589 = sbr.rel target = $region97
    $region102: #{tpu_custom_call.1} parent=1 // loop_exit
      _
    %v1774 = vlaneseq
    %v1775 = vand.u32 %v1774, 127
    %v1776 = vlaneseq
    %v1777 = vshrl.u32 %v1776, 7
    %v1778 = vsub.s32 1, %v1777
    %v1779 = vrot.slane %v342, %v1778
    %s1780 = scalar_lea.vmem [#allocation4], 256
    %v1781 = vld [vmem:[%s1780] sm:$0xff]
    %v1782 = vld [vmem:[%s1780 + $0x8] sm:$0xff]
    %v1783 = vld [vmem:[%s1780 + $0x10] sm:$0xff]
    %v1784 = vld [vmem:[%s1780 + $0x18] sm:$0xff]
    %1785 = vmatprep.subr.mxu0 %v279
    %1786 = vmatpush1.msra.mxu0 %v278
    %1787 = vmatprep.subr.mxu0 %v283
    %1788 = vmatpush1.msra.mxu0 %v282
    %1789 = vmatprep.subr.mxu0 %v287
    %1790 = vmatpush1.msra.mxu0 %v286
    %1791 = vmatprep.subr.mxu0 %v291
    %1792 = vmatpush1.msra.mxu0 %v290
    %1793 = vmatprep.subr.mxu0 %v295
    %1794 = vmatpush1.msra.mxu0 %v294
    %1795 = vmatprep.subr.mxu0 %v299
    %1796 = vmatpush1.msra.mxu0 %v298
    %1797 = vmatprep.subr.mxu0 %v303
    %1798 = vmatpush1.msra.mxu0 %v302
    %1799 = vmatprep.subr.mxu0 %v307
    %1800 = vmatpush1.msra.mxu0 %v306
    %1801 = vmatprep.subr.mxu0 %v311
    %1802 = vmatpush1.msra.mxu0 %v310
    %1803 = vmatprep.subr.mxu0 %v315
    %1804 = vmatpush1.msra.mxu0 %v314
    %1805 = vmatprep.subr.mxu0 %v319
    %1806 = vmatpush1.msra.mxu0 %v318
    %1807 = vmatprep.subr.mxu0 %v323
    %1808 = vmatpush1.msra.mxu0 %v322
    %1809 = vmatprep.subr.mxu0 %v327
    %1810 = vmatpush1.msra.mxu0 %v326
    %1811 = vmatprep.subr.mxu0 %v331
    %1812 = vmatpush1.msra.mxu0 %v330
    %1813 = vmatprep.subr.mxu0 %v335
    %1814 = vmatpush1.msra.mxu0 %v334
    %1815 = vmatprep.subr.mxu0 %v339
    %1816 = vmatpush1.msra.mxu0 %v338
    %1817 = vmatprep.subr.mxu0 0.0
    %1818 = vmatpush1.msra.mxu0 0.0
    %1819 = vmatprep.subr.mxu0 0.0
    %1820 = vmatpush1.msra.mxu0 0.0
    %1821 = vmatprep.subr.mxu0 0.0
    %1822 = vmatpush1.msra.mxu0 0.0
    %1823 = vmatprep.subr.mxu0 0.0
    %1824 = vmatpush1.msra.mxu0 0.0
    %1825 = vmatprep.subr.mxu0 0.0
    %1826 = vmatpush1.msra.mxu0 0.0
    %1827 = vmatprep.subr.mxu0 0.0
    %1828 = vmatpush1.msra.mxu0 0.0
    %1829 = vmatprep.subr.mxu0 0.0
    %1830 = vmatpush1.msra.mxu0 0.0
    %1831 = vmatprep.subr.mxu0 0.0
    %1832 = vmatpush1.msra.mxu0 0.0
    %1833 = vmatprep.subr.mxu0 0.0
    %1834 = vmatpush1.msra.mxu0 0.0
    %1835 = vmatprep.subr.mxu0 0.0
    %1836 = vmatpush1.msra.mxu0 0.0
    %1837 = vmatprep.subr.mxu0 0.0
    %1838 = vmatpush1.msra.mxu0 0.0
    %1839 = vmatprep.subr.mxu0 0.0
    %1840 = vmatpush1.msra.mxu0 0.0
    %1841 = vmatprep.subr.mxu0 0.0
    %1842 = vmatpush1.msra.mxu0 0.0
    %1843 = vmatprep.subr.mxu0 0.0
    %1844 = vmatpush1.msra.mxu0 0.0
    %1845 = vmatprep.subr.mxu0 0.0
    %1846 = vmatpush1.msra.mxu0 0.0
    %1847 = vmatprep.subr.mxu0 0.0
    %1848 = vmatpush1.msra.mxu0 0.0
    %1849 = vmatprep.mubr.f32.mxu0 0.0
    %1850 = vmatmul.mubr.f32.gmra.mrb[0].mxu0 %v1779
    %v1851 = vpop.f32.mrb[0].mxu0
    %v1852 = vadd.f32 %v1781, %v1851
    %v1853 = vpop.f32.mrb[0].mxu0
    %v1854 = vadd.f32 %v1782, %v1853
    %1855 = vdwg.mxu0
    %1856 = vmatprep.subr.mxu0 %v281
    %1857 = vmatpush1.msra.mxu0 %v280
    %1858 = vmatprep.subr.mxu0 %v285
    %1859 = vmatpush1.msra.mxu0 %v284
    %1860 = vmatprep.subr.mxu0 %v289
    %1861 = vmatpush1.msra.mxu0 %v288
    %1862 = vmatprep.subr.mxu0 %v293
    %1863 = vmatpush1.msra.mxu0 %v292
    %1864 = vmatprep.subr.mxu0 %v297
    %1865 = vmatpush1.msra.mxu0 %v296
    %1866 = vmatprep.subr.mxu0 %v301
    %1867 = vmatpush1.msra.mxu0 %v300
    %1868 = vmatprep.subr.mxu0 %v305
    %1869 = vmatpush1.msra.mxu0 %v304
    %1870 = vmatprep.subr.mxu0 %v309
    %1871 = vmatpush1.msra.mxu0 %v308
    %1872 = vmatprep.subr.mxu0 %v313
    %1873 = vmatpush1.msra.mxu0 %v312
    %1874 = vmatprep.subr.mxu0 %v317
    %1875 = vmatpush1.msra.mxu0 %v316
    %1876 = vmatprep.subr.mxu0 %v321
    %1877 = vmatpush1.msra.mxu0 %v320
    %1878 = vmatprep.subr.mxu0 %v325
    %1879 = vmatpush1.msra.mxu0 %v324
    %1880 = vmatprep.subr.mxu0 %v329
    %1881 = vmatpush1.msra.mxu0 %v328
    %1882 = vmatprep.subr.mxu0 %v333
    %1883 = vmatpush1.msra.mxu0 %v332
    %1884 = vmatprep.subr.mxu0 %v337
    %1885 = vmatpush1.msra.mxu0 %v336
    %1886 = vmatprep.subr.mxu0 %v341
    %1887 = vmatpush1.msra.mxu0 %v340
    %1888 = vmatprep.subr.mxu0 0.0
    %1889 = vmatpush1.msra.mxu0 0.0
    %1890 = vmatprep.subr.mxu0 0.0
    %1891 = vmatpush1.msra.mxu0 0.0
    %1892 = vmatprep.subr.mxu0 0.0
    %1893 = vmatpush1.msra.mxu0 0.0
    %1894 = vmatprep.subr.mxu0 0.0
    %1895 = vmatpush1.msra.mxu0 0.0
    %1896 = vmatprep.subr.mxu0 0.0
    %1897 = vmatpush1.msra.mxu0 0.0
    %1898 = vmatprep.subr.mxu0 0.0
    %1899 = vmatpush1.msra.mxu0 0.0
    %1900 = vmatprep.subr.mxu0 0.0
    %1901 = vmatpush1.msra.mxu0 0.0
    %1902 = vmatprep.subr.mxu0 0.0
    %1903 = vmatpush1.msra.mxu0 0.0
    %1904 = vmatprep.subr.mxu0 0.0
    %1905 = vmatpush1.msra.mxu0 0.0
    %1906 = vmatprep.subr.mxu0 0.0
    %1907 = vmatpush1.msra.mxu0 0.0
    %1908 = vmatprep.subr.mxu0 0.0
    %1909 = vmatpush1.msra.mxu0 0.0
    %1910 = vmatprep.subr.mxu0 0.0
    %1911 = vmatpush1.msra.mxu0 0.0
    %1912 = vmatprep.subr.mxu0 0.0
    %1913 = vmatpush1.msra.mxu0 0.0
    %1914 = vmatprep.subr.mxu0 0.0
    %1915 = vmatpush1.msra.mxu0 0.0
    %1916 = vmatprep.subr.mxu0 0.0
    %1917 = vmatpush1.msra.mxu0 0.0
    %1918 = vmatprep.subr.mxu0 0.0
    %1919 = vmatpush1.msra.mxu0 0.0
    %1920 = vmatprep.mubr.f32.mxu0 0.0
    %1921 = vmatmul.mubr.f32.gmra.mrb[0].mxu0 %v1779
    %v1922 = vpop.f32.mrb[0].mxu0
    %v1923 = vadd.f32 %v1783, %v1922
    %v1924 = vpop.f32.mrb[0].mxu0
    %v1925 = vadd.f32 %v1784, %v1924
    %1926 = vdwg.mxu0
    %1927 = vmatprep.subr.mxu0 %v215
    %1928 = vmatpush1.msra.mxu0 %v214
    %1929 = vmatprep.subr.mxu0 %v219
    %1930 = vmatpush1.msra.mxu0 %v218
    %1931 = vmatprep.subr.mxu0 %v223
    %1932 = vmatpush1.msra.mxu0 %v222
    %1933 = vmatprep.subr.mxu0 %v227
    %1934 = vmatpush1.msra.mxu0 %v226
    %1935 = vmatprep.subr.mxu0 %v231
    %1936 = vmatpush1.msra.mxu0 %v230
    %1937 = vmatprep.subr.mxu0 %v235
    %1938 = vmatpush1.msra.mxu0 %v234
    %1939 = vmatprep.subr.mxu0 %v239
    %1940 = vmatpush1.msra.mxu0 %v238
    %1941 = vmatprep.subr.mxu0 %v243
    %1942 = vmatpush1.msra.mxu0 %v242
    %1943 = vmatprep.subr.mxu0 %v247
    %1944 = vmatpush1.msra.mxu0 %v246
    %1945 = vmatprep.subr.mxu0 %v251
    %1946 = vmatpush1.msra.mxu0 %v250
    %1947 = vmatprep.subr.mxu0 %v255
    %1948 = vmatpush1.msra.mxu0 %v254
    %1949 = vmatprep.subr.mxu0 %v259
    %1950 = vmatpush1.msra.mxu0 %v258
    %1951 = vmatprep.subr.mxu0 %v263
    %1952 = vmatpush1.msra.mxu0 %v262
    %1953 = vmatprep.subr.mxu0 %v267
    %1954 = vmatpush1.msra.mxu0 %v266
    %1955 = vmatprep.subr.mxu0 %v271
    %1956 = vmatpush1.msra.mxu0 %v270
    %1957 = vmatprep.subr.mxu0 %v275
    %1958 = vmatpush1.msra.mxu0 %v274
    %1959 = vmatprep.subr.mxu0 0.0
    %1960 = vmatpush1.msra.mxu0 0.0
    %1961 = vmatprep.subr.mxu0 0.0
    %1962 = vmatpush1.msra.mxu0 0.0
    %1963 = vmatprep.subr.mxu0 0.0
    %1964 = vmatpush1.msra.mxu0 0.0
    %1965 = vmatprep.subr.mxu0 0.0
    %1966 = vmatpush1.msra.mxu0 0.0
    %1967 = vmatprep.subr.mxu0 0.0
    %1968 = vmatpush1.msra.mxu0 0.0
    %1969 = vmatprep.subr.mxu0 0.0
    %1970 = vmatpush1.msra.mxu0 0.0
    %1971 = vmatprep.subr.mxu0 0.0
    %1972 = vmatpush1.msra.mxu0 0.0
    %1973 = vmatprep.subr.mxu0 0.0
    %1974 = vmatpush1.msra.mxu0 0.0
    %1975 = vmatprep.subr.mxu0 0.0
    %1976 = vmatpush1.msra.mxu0 0.0
    %1977 = vmatprep.subr.mxu0 0.0
    %1978 = vmatpush1.msra.mxu0 0.0
    %1979 = vmatprep.subr.mxu0 0.0
    %1980 = vmatpush1.msra.mxu0 0.0
    %1981 = vmatprep.subr.mxu0 0.0
    %1982 = vmatpush1.msra.mxu0 0.0
    %1983 = vmatprep.subr.mxu0 0.0
    %1984 = vmatpush1.msra.mxu0 0.0
    %1985 = vmatprep.subr.mxu0 0.0
    %1986 = vmatpush1.msra.mxu0 0.0
    %1987 = vmatprep.subr.mxu0 0.0
    %1988 = vmatpush1.msra.mxu0 0.0
    %1989 = vmatprep.subr.mxu0 0.0
    %1990 = vmatpush1.msra.mxu0 0.0
    %1991 = vmatprep.mubr.f32.mxu0 0.0
    %1992 = vmatmul.mubr.f32.gmra.mrb[0].mxu0 %v1595
    %v1993 = vpop.f32.mrb[0].mxu0
    %v1994 = vadd.f32 0.0, %v1993
    %v1995 = vpop.f32.mrb[0].mxu0
    %v1996 = vadd.f32 0.0, %v1995
    %1997 = vdwg.mxu0
    %1998 = vmatprep.subr.mxu0 %v217
    %1999 = vmatpush1.msra.mxu0 %v216
    %2000 = vmatprep.subr.mxu0 %v221
    %2001 = vmatpush1.msra.mxu0 %v220
    %2002 = vmatprep.subr.mxu0 %v225
    %2003 = vmatpush1.msra.mxu0 %v224
    %2004 = vmatprep.subr.mxu0 %v229
    %2005 = vmatpush1.msra.mxu0 %v228
    %2006 = vmatprep.subr.mxu0 %v233
    %2007 = vmatpush1.msra.mxu0 %v232
    %2008 = vmatprep.subr.mxu0 %v237
    %2009 = vmatpush1.msra.mxu0 %v236
    %2010 = vmatprep.subr.mxu0 %v241
    %2011 = vmatpush1.msra.mxu0 %v240
    %2012 = vmatprep.subr.mxu0 %v245
    %2013 = vmatpush1.msra.mxu0 %v244
    %2014 = vmatprep.subr.mxu0 %v249
    %2015 = vmatpush1.msra.mxu0 %v248
    %2016 = vmatprep.subr.mxu0 %v253
    %2017 = vmatpush1.msra.mxu0 %v252
    %2018 = vmatprep.subr.mxu0 %v257
    %2019 = vmatpush1.msra.mxu0 %v256
    %2020 = vmatprep.subr.mxu0 %v261
    %2021 = vmatpush1.msra.mxu0 %v260
    %2022 = vmatprep.subr.mxu0 %v265
    %2023 = vmatpush1.msra.mxu0 %v264
    %2024 = vmatprep.subr.mxu0 %v269
    %2025 = vmatpush1.msra.mxu0 %v268
    %2026 = vmatprep.subr.mxu0 %v273
    %2027 = vmatpush1.msra.mxu0 %v272
    %2028 = vmatprep.subr.mxu0 %v277
    %2029 = vmatpush1.msra.mxu0 %v276
    %2030 = vmatprep.subr.mxu0 0.0
    %2031 = vmatpush1.msra.mxu0 0.0
    %2032 = vmatprep.subr.mxu0 0.0
    %2033 = vmatpush1.msra.mxu0 0.0
    %2034 = vmatprep.subr.mxu0 0.0
    %2035 = vmatpush1.msra.mxu0 0.0
    %2036 = vmatprep.subr.mxu0 0.0
    %2037 = vmatpush1.msra.mxu0 0.0
    %2038 = vmatprep.subr.mxu0 0.0
    %2039 = vmatpush1.msra.mxu0 0.0
    %2040 = vmatprep.subr.mxu0 0.0
    %2041 = vmatpush1.msra.mxu0 0.0
    %2042 = vmatprep.subr.mxu0 0.0
    %2043 = vmatpush1.msra.mxu0 0.0
    %2044 = vmatprep.subr.mxu0 0.0
    %2045 = vmatpush1.msra.mxu0 0.0
    %2046 = vmatprep.subr.mxu0 0.0
    %2047 = vmatpush1.msra.mxu0 0.0
    %2048 = vmatprep.subr.mxu0 0.0
    %2049 = vmatpush1.msra.mxu0 0.0
    %2050 = vmatprep.subr.mxu0 0.0
    %2051 = vmatpush1.msra.mxu0 0.0
    %2052 = vmatprep.subr.mxu0 0.0
    %2053 = vmatpush1.msra.mxu0 0.0
    %2054 = vmatprep.subr.mxu0 0.0
    %2055 = vmatpush1.msra.mxu0 0.0
    %2056 = vmatprep.subr.mxu0 0.0
    %2057 = vmatpush1.msra.mxu0 0.0
    %2058 = vmatprep.subr.mxu0 0.0
    %2059 = vmatpush1.msra.mxu0 0.0
    %2060 = vmatprep.subr.mxu0 0.0
    %2061 = vmatpush1.msra.mxu0 0.0
    %2062 = vmatprep.mubr.f32.mxu0 0.0
    %2063 = vmatmul.mubr.f32.gmra.mrb[0].mxu0 %v1595
    %v2064 = vpop.f32.mrb[0].mxu0
    %v2065 = vadd.f32 0.0, %v2064
    %v2066 = vpop.f32.mrb[0].mxu0
    %v2067 = vadd.f32 0.0, %v2066
    %2068 = vdwg.mxu0
    %v2069 = vadd.f32 %v1852, %v1994
    %v2070 = vadd.f32 %v1854, %v1996
    %v2071 = vadd.f32 %v1923, %v2065
    %v2072 = vadd.f32 %v1925, %v2067
    %v2073 = vxor.u32 %v2069, 2147483648
    %v2074 = vmul.f32 %v2073, 1.442695
    %v2075 = vpow.pop %v2074
    %v2076 = vadd.f32 %v2075, 1.0
    %v2077 = vrcp.pop %v2076
    %v2078 = vmul.f32 1.0, %v2077
    %v2079 = vxor.u32 %v2070, 2147483648
    %v2080 = vmul.f32 %v2079, 1.442695
    %v2081 = vpow.pop %v2080
    %v2082 = vadd.f32 %v2081, 1.0
    %v2083 = vrcp.pop %v2082
    %v2084 = vmul.f32 1.0, %v2083
    %v2085 = vtanh.pop %v2071
    %v2086 = vxor.u32 %v2072, 2147483648
    %v2087 = vmul.f32 %v2086, 1.442695
    %v2088 = vpow.pop %v2087
    %v2089 = vadd.f32 %v2088, 1.0
    %v2090 = vrcp.pop %v2089
    %v2091 = vmul.f32 1.0, %v2090
    %v2092 = vmul.f32 %v2084, %v1596
    %v2093 = vmul.f32 %v2078, %v2085
    %v2094 = vadd.f32 %v2092, %v2093
    %v2095 = vtanh.pop %v2094
    %v2096 = vmul.f32 %v2091, %v2095
    %v2098 = vlaneseq
    %v2099 = vshrl.u32 %v2098, 7
    %v2100 = vsub.s32 0, %v2099
    %v2101 = vrot.slane %v374, %v2100
    %2103 = vmatprep.subr.mxu0 0.0
    %2104 = vmatpush1.msra.mxu0 %v358
    %2105 = vmatprep.subr.mxu0 0.0
    %2106 = vmatpush1.msra.mxu0 %v359
    %2107 = vmatprep.subr.mxu0 0.0
    %2108 = vmatpush1.msra.mxu0 %v360
    %2109 = vmatprep.subr.mxu0 0.0
    %2110 = vmatpush1.msra.mxu0 %v361
    %2111 = vmatprep.subr.mxu0 0.0
    %2112 = vmatpush1.msra.mxu0 %v362
    %2113 = vmatprep.subr.mxu0 0.0
    %2114 = vmatpush1.msra.mxu0 %v363
    %2115 = vmatprep.subr.mxu0 0.0
    %2116 = vmatpush1.msra.mxu0 %v364
    %2117 = vmatprep.subr.mxu0 0.0
    %2118 = vmatpush1.msra.mxu0 %v365
    %2119 = vmatprep.subr.mxu0 0.0
    %2120 = vmatpush1.msra.mxu0 %v366
    %2121 = vmatprep.subr.mxu0 0.0
    %2122 = vmatpush1.msra.mxu0 %v367
    %2123 = vmatprep.subr.mxu0 0.0
    %2124 = vmatpush1.msra.mxu0 %v368
    %2125 = vmatprep.subr.mxu0 0.0
    %2126 = vmatpush1.msra.mxu0 %v369
    %2127 = vmatprep.subr.mxu0 0.0
    %2128 = vmatpush1.msra.mxu0 %v370
    %2129 = vmatprep.subr.mxu0 0.0
    %2130 = vmatpush1.msra.mxu0 %v371
    %2131 = vmatprep.subr.mxu0 0.0
    %2132 = vmatpush1.msra.mxu0 %v372
    %2133 = vmatprep.subr.mxu0 0.0
    %2134 = vmatpush1.msra.mxu0 %v373
    %2135 = vmatprep.subr.mxu0 0.0
    %2136 = vmatpush1.msra.mxu0 0.0
    %2137 = vmatprep.subr.mxu0 0.0
    %2138 = vmatpush1.msra.mxu0 0.0
    %2139 = vmatprep.subr.mxu0 0.0
    %2140 = vmatpush1.msra.mxu0 0.0
    %2141 = vmatprep.subr.mxu0 0.0
    %2142 = vmatpush1.msra.mxu0 0.0
    %2143 = vmatprep.subr.mxu0 0.0
    %2144 = vmatpush1.msra.mxu0 0.0
    %2145 = vmatprep.subr.mxu0 0.0
    %2146 = vmatpush1.msra.mxu0 0.0
    %2147 = vmatprep.subr.mxu0 0.0
    %2148 = vmatpush1.msra.mxu0 0.0
    %2149 = vmatprep.subr.mxu0 0.0
    %2150 = vmatpush1.msra.mxu0 0.0
    %2151 = vmatprep.subr.mxu0 0.0
    %2152 = vmatpush1.msra.mxu0 0.0
    %2153 = vmatprep.subr.mxu0 0.0
    %2154 = vmatpush1.msra.mxu0 0.0
    %2155 = vmatprep.subr.mxu0 0.0
    %2156 = vmatpush1.msra.mxu0 0.0
    %2157 = vmatprep.subr.mxu0 0.0
    %2158 = vmatpush1.msra.mxu0 0.0
    %2159 = vmatprep.subr.mxu0 0.0
    %2160 = vmatpush1.msra.mxu0 0.0
    %2161 = vmatprep.subr.mxu0 0.0
    %2162 = vmatpush1.msra.mxu0 0.0
    %2163 = vmatprep.subr.mxu0 0.0
    %2164 = vmatpush1.msra.mxu0 0.0
    %2165 = vmatprep.subr.mxu0 0.0
    %2166 = vmatpush1.msra.mxu0 0.0
    %2167 = vmatprep.mubr.f32.mxu0 0.0
    %2168 = vmatmul.mubr.f32.gmra.mrb[0].mxu0 %v2096
    %v2169 = vpop.f32.mrb[0].mxu0
    %v2170 = vadd.f32 %v2101, %v2169
    %v2171 = vpop.f32.mrb[0].mxu0
    %2172 = vdwg.mxu0
    %2173 = vmax.xlane.f32.xlu0 %v2170
    %v2174 = vpop.xlane.xlu0 %2173
    %vm2175 = vcmp.eq.f32.partialorder %v2170, %v2174
    %v2176 = vsel %vm2175, %v1775, 128
    %v2177 = vand.u32 %v2176, 65535
    %v2178 = vshra.s32 %v2176, 16
    %v2179 = vcvt.s32.f32 %v2177
    %v2180 = vcvt.s32.f32 %v2178
    %2181 = vmin.xlane.f32.xlu0 %v2180
    %v2182 = vpop.xlane.xlu0 %2181
    %vm2183 = vcmp.eq.f32.partialorder %v2180, %v2182
    %v2184 = vsel %vm2183, %v2179, inf
    %2185 = vmin.xlane.f32.xlu0 %v2184
    %v2186 = vpop.xlane.xlu0 %2185
    %v2187 = vcvt.f32.s32 %v2186
    %v2188 = vcvt.f32.s32 %v2182
    %v2189 = vshll.u32 %v2188, 16
    %v2190 = vadd.s32 %v2189, %v2187
    %vm2191 = vcmask 7168
    %2192 = vst.msk [vmem:[%s12] sm:$0xff] %vm2191, %v2190
    loop: start=1, step=1, limit=7
    $region103: #{tpu_custom_call.1} parent=1 // loop_pre_header
      _
    $region104: #{tpu_custom_call.1} parent=1 // loop_header
      %s2194 = sphi 1, %s2198
      %p2195 = scmp.ge.s32.totalorder %s2194, 7
      %v2199 = vphi %v2190, %v2682
      %v2200 = vphi %v2096, %v2594
      %v2201 = vphi %v2094, %v2592
    $region105: #{tpu_custom_call.1} parent=1 // loop_header_branch
      %2197 = sbr.rel (%p2195) target = $region109
    $region106: #{tpu_custom_call.1} parent=1 // loop_body
      %vm2202 = vcmp.eq.s32.totalorder %v2199, %v1775
      %v2203 = vsel %vm2202, 1, 0
      %v2204 = vcvt.s32.f32 %v2203
      %2205 = vmatprep.subr.mxu0 0.0
      %2206 = vmatpush1.msra.mxu0 %v342
      %2207 = vmatprep.subr.mxu0 0.0
      %2208 = vmatpush1.msra.mxu0 %v343
      %2209 = vmatprep.subr.mxu0 0.0
      %2210 = vmatpush1.msra.mxu0 %v344
      %2211 = vmatprep.subr.mxu0 0.0
      %2212 = vmatpush1.msra.mxu0 %v345
      %2213 = vmatprep.subr.mxu0 0.0
      %2214 = vmatpush1.msra.mxu0 %v346
      %2215 = vmatprep.subr.mxu0 0.0
      %2216 = vmatpush1.msra.mxu0 %v347
      %2217 = vmatprep.subr.mxu0 0.0
      %2218 = vmatpush1.msra.mxu0 %v348
      %2219 = vmatprep.subr.mxu0 0.0
      %2220 = vmatpush1.msra.mxu0 %v349
      %2221 = vmatprep.subr.mxu0 0.0
      %2222 = vmatpush1.msra.mxu0 %v350
      %2223 = vmatprep.subr.mxu0 0.0
      %2224 = vmatpush1.msra.mxu0 %v351
      %2225 = vmatprep.subr.mxu0 0.0
      %2226 = vmatpush1.msra.mxu0 %v352
      %2227 = vmatprep.subr.mxu0 0.0
      %2228 = vmatpush1.msra.mxu0 %v353
      %2229 = vmatprep.subr.mxu0 0.0
      %2230 = vmatpush1.msra.mxu0 %v354
      %2231 = vmatprep.subr.mxu0 0.0
      %2232 = vmatpush1.msra.mxu0 %v355
      %2233 = vmatprep.subr.mxu0 0.0
      %2234 = vmatpush1.msra.mxu0 %v356
      %2235 = vmatprep.subr.mxu0 0.0
      %2236 = vmatpush1.msra.mxu0 %v357
      %2237 = vmatprep.subr.mxu0 0.0
      %2238 = vmatpush1.msra.mxu0 0.0
      %2239 = vmatprep.subr.mxu0 0.0
      %2240 = vmatpush1.msra.mxu0 0.0
      %2241 = vmatprep.subr.mxu0 0.0
      %2242 = vmatpush1.msra.mxu0 0.0
      %2243 = vmatprep.subr.mxu0 0.0
      %2244 = vmatpush1.msra.mxu0 0.0
      %2245 = vmatprep.subr.mxu0 0.0
      %2246 = vmatpush1.msra.mxu0 0.0
      %2247 = vmatprep.subr.mxu0 0.0
      %2248 = vmatpush1.msra.mxu0 0.0
      %2249 = vmatprep.subr.mxu0 0.0
      %2250 = vmatpush1.msra.mxu0 0.0
      %2251 = vmatprep.subr.mxu0 0.0
      %2252 = vmatpush1.msra.mxu0 0.0
      %2253 = vmatprep.subr.mxu0 0.0
      %2254 = vmatpush1.msra.mxu0 0.0
      %2255 = vmatprep.subr.mxu0 0.0
      %2256 = vmatpush1.msra.mxu0 0.0
      %2257 = vmatprep.subr.mxu0 0.0
      %2258 = vmatpush1.msra.mxu0 0.0
      %2259 = vmatprep.subr.mxu0 0.0
      %2260 = vmatpush1.msra.mxu0 0.0
      %2261 = vmatprep.subr.mxu0 0.0
      %2262 = vmatpush1.msra.mxu0 0.0
      %2263 = vmatprep.subr.mxu0 0.0
      %2264 = vmatpush1.msra.mxu0 0.0
      %2265 = vmatprep.subr.mxu0 0.0
      %2266 = vmatpush1.msra.mxu0 0.0
      %2267 = vmatprep.subr.mxu0 0.0
      %2268 = vmatpush1.msra.mxu0 0.0
      %2269 = vmatprep.mubr.f32.mxu0 0.0
      %2270 = vmatmul.mubr.f32.gmra.mrb[0].mxu0 %v2204
      %v2271 = vpop.f32.mrb[0].mxu0
      %v2272 = vadd.f32 0.0, %v2271
      %v2273 = vpop.f32.mrb[0].mxu0
      %2274 = vdwg.mxu0
      %s2275 = sadd.s32 %s2194, 8
      %s2276 = smul.u32 %s2275, 4
      %s2277 = smul.addr %s2276, 8
      %s2278 = scalar_lea.vmem [#allocation4], %s2277
      %v2279 = vld [vmem:[%s2278] sm:$0xff]
      %v2280 = vld [vmem:[%s2278 + $0x8] sm:$0xff]
      %v2281 = vld [vmem:[%s2278 + $0x10] sm:$0xff]
      %v2282 = vld [vmem:[%s2278 + $0x18] sm:$0xff]
      %2283 = vmatprep.subr.mxu0 %v279
      %2284 = vmatpush1.msra.mxu0 %v278
      %2285 = vmatprep.subr.mxu0 %v283
      %2286 = vmatpush1.msra.mxu0 %v282
      %2287 = vmatprep.subr.mxu0 %v287
      %2288 = vmatpush1.msra.mxu0 %v286
      %2289 = vmatprep.subr.mxu0 %v291
      %2290 = vmatpush1.msra.mxu0 %v290
      %2291 = vmatprep.subr.mxu0 %v295
      %2292 = vmatpush1.msra.mxu0 %v294
      %2293 = vmatprep.subr.mxu0 %v299
      %2294 = vmatpush1.msra.mxu0 %v298
      %2295 = vmatprep.subr.mxu0 %v303
      %2296 = vmatpush1.msra.mxu0 %v302
      %2297 = vmatprep.subr.mxu0 %v307
      %2298 = vmatpush1.msra.mxu0 %v306
      %2299 = vmatprep.subr.mxu0 %v311
      %2300 = vmatpush1.msra.mxu0 %v310
      %2301 = vmatprep.subr.mxu0 %v315
      %2302 = vmatpush1.msra.mxu0 %v314
      %2303 = vmatprep.subr.mxu0 %v319
      %2304 = vmatpush1.msra.mxu0 %v318
      %2305 = vmatprep.subr.mxu0 %v323
      %2306 = vmatpush1.msra.mxu0 %v322
      %2307 = vmatprep.subr.mxu0 %v327
      %2308 = vmatpush1.msra.mxu0 %v326
      %2309 = vmatprep.subr.mxu0 %v331
      %2310 = vmatpush1.msra.mxu0 %v330
      %2311 = vmatprep.subr.mxu0 %v335
      %2312 = vmatpush1.msra.mxu0 %v334
      %2313 = vmatprep.subr.mxu0 %v339
      %2314 = vmatpush1.msra.mxu0 %v338
      %2315 = vmatprep.subr.mxu0 0.0
      %2316 = vmatpush1.msra.mxu0 0.0
      %2317 = vmatprep.subr.mxu0 0.0
      %2318 = vmatpush1.msra.mxu0 0.0
      %2319 = vmatprep.subr.mxu0 0.0
      %2320 = vmatpush1.msra.mxu0 0.0
      %2321 = vmatprep.subr.mxu0 0.0
      %2322 = vmatpush1.msra.mxu0 0.0
      %2323 = vmatprep.subr.mxu0 0.0
      %2324 = vmatpush1.msra.mxu0 0.0
      %2325 = vmatprep.subr.mxu0 0.0
      %2326 = vmatpush1.msra.mxu0 0.0
      %2327 = vmatprep.subr.mxu0 0.0
      %2328 = vmatpush1.msra.mxu0 0.0
      %2329 = vmatprep.subr.mxu0 0.0
      %2330 = vmatpush1.msra.mxu0 0.0
      %2331 = vmatprep.subr.mxu0 0.0
      %2332 = vmatpush1.msra.mxu0 0.0
      %2333 = vmatprep.subr.mxu0 0.0
      %2334 = vmatpush1.msra.mxu0 0.0
      %2335 = vmatprep.subr.mxu0 0.0
      %2336 = vmatpush1.msra.mxu0 0.0
      %2337 = vmatprep.subr.mxu0 0.0
      %2338 = vmatpush1.msra.mxu0 0.0
      %2339 = vmatprep.subr.mxu0 0.0
      %2340 = vmatpush1.msra.mxu0 0.0
      %2341 = vmatprep.subr.mxu0 0.0
      %2342 = vmatpush1.msra.mxu0 0.0
      %2343 = vmatprep.subr.mxu0 0.0
      %2344 = vmatpush1.msra.mxu0 0.0
      %2345 = vmatprep.subr.mxu0 0.0
      %2346 = vmatpush1.msra.mxu0 0.0
      %2347 = vmatprep.mubr.f32.mxu0 0.0
      %2348 = vmatmul.mubr.f32.gmra.mrb[0].mxu0 %v2272
      %v2349 = vpop.f32.mrb[0].mxu0
      %v2350 = vadd.f32 %v2279, %v2349
      %v2351 = vpop.f32.mrb[0].mxu0
      %v2352 = vadd.f32 %v2280, %v2351
      %2353 = vdwg.mxu0
      %2354 = vmatprep.subr.mxu0 %v281
      %2355 = vmatpush1.msra.mxu0 %v280
      %2356 = vmatprep.subr.mxu0 %v285
      %2357 = vmatpush1.msra.mxu0 %v284
      %2358 = vmatprep.subr.mxu0 %v289
      %2359 = vmatpush1.msra.mxu0 %v288
      %2360 = vmatprep.subr.mxu0 %v293
      %2361 = vmatpush1.msra.mxu0 %v292
      %2362 = vmatprep.subr.mxu0 %v297
      %2363 = vmatpush1.msra.mxu0 %v296
      %2364 = vmatprep.subr.mxu0 %v301
      %2365 = vmatpush1.msra.mxu0 %v300
      %2366 = vmatprep.subr.mxu0 %v305
      %2367 = vmatpush1.msra.mxu0 %v304
      %2368 = vmatprep.subr.mxu0 %v309
      %2369 = vmatpush1.msra.mxu0 %v308
      %2370 = vmatprep.subr.mxu0 %v313
      %2371 = vmatpush1.msra.mxu0 %v312
      %2372 = vmatprep.subr.mxu0 %v317
      %2373 = vmatpush1.msra.mxu0 %v316
      %2374 = vmatprep.subr.mxu0 %v321
      %2375 = vmatpush1.msra.mxu0 %v320
      %2376 = vmatprep.subr.mxu0 %v325
      %2377 = vmatpush1.msra.mxu0 %v324
      %2378 = vmatprep.subr.mxu0 %v329
      %2379 = vmatpush1.msra.mxu0 %v328
      %2380 = vmatprep.subr.mxu0 %v333
      %2381 = vmatpush1.msra.mxu0 %v332
      %2382 = vmatprep.subr.mxu0 %v337
      %2383 = vmatpush1.msra.mxu0 %v336
      %2384 = vmatprep.subr.mxu0 %v341
      %2385 = vmatpush1.msra.mxu0 %v340
      %2386 = vmatprep.subr.mxu0 0.0
      %2387 = vmatpush1.msra.mxu0 0.0
      %2388 = vmatprep.subr.mxu0 0.0
      %2389 = vmatpush1.msra.mxu0 0.0
      %2390 = vmatprep.subr.mxu0 0.0
      %2391 = vmatpush1.msra.mxu0 0.0
      %2392 = vmatprep.subr.mxu0 0.0
      %2393 = vmatpush1.msra.mxu0 0.0
      %2394 = vmatprep.subr.mxu0 0.0
      %2395 = vmatpush1.msra.mxu0 0.0
      %2396 = vmatprep.subr.mxu0 0.0
      %2397 = vmatpush1.msra.mxu0 0.0
      %2398 = vmatprep.subr.mxu0 0.0
      %2399 = vmatpush1.msra.mxu0 0.0
      %2400 = vmatprep.subr.mxu0 0.0
      %2401 = vmatpush1.msra.mxu0 0.0
      %2402 = vmatprep.subr.mxu0 0.0
      %2403 = vmatpush1.msra.mxu0 0.0
      %2404 = vmatprep.subr.mxu0 0.0
      %2405 = vmatpush1.msra.mxu0 0.0
      %2406 = vmatprep.subr.mxu0 0.0
      %2407 = vmatpush1.msra.mxu0 0.0
      %2408 = vmatprep.subr.mxu0 0.0
      %2409 = vmatpush1.msra.mxu0 0.0
      %2410 = vmatprep.subr.mxu0 0.0
      %2411 = vmatpush1.msra.mxu0 0.0
      %2412 = vmatprep.subr.mxu0 0.0
      %2413 = vmatpush1.msra.mxu0 0.0
      %2414 = vmatprep.subr.mxu0 0.0
      %2415 = vmatpush1.msra.mxu0 0.0
      %2416 = vmatprep.subr.mxu0 0.0
      %2417 = vmatpush1.msra.mxu0 0.0
      %2418 = vmatprep.mubr.f32.mxu0 0.0
      %2419 = vmatmul.mubr.f32.gmra.mrb[0].mxu0 %v2272
      %v2420 = vpop.f32.mrb[0].mxu0
      %v2421 = vadd.f32 %v2281, %v2420
      %v2422 = vpop.f32.mrb[0].mxu0
      %v2423 = vadd.f32 %v2282, %v2422
      %2424 = vdwg.mxu0
      %2425 = vmatprep.subr.mxu0 %v215
      %2426 = vmatpush1.msra.mxu0 %v214
      %2427 = vmatprep.subr.mxu0 %v219
      %2428 = vmatpush1.msra.mxu0 %v218
      %2429 = vmatprep.subr.mxu0 %v223
      %2430 = vmatpush1.msra.mxu0 %v222
      %2431 = vmatprep.subr.mxu0 %v227
      %2432 = vmatpush1.msra.mxu0 %v226
      %2433 = vmatprep.subr.mxu0 %v231
      %2434 = vmatpush1.msra.mxu0 %v230
      %2435 = vmatprep.subr.mxu0 %v235
      %2436 = vmatpush1.msra.mxu0 %v234
      %2437 = vmatprep.subr.mxu0 %v239
      %2438 = vmatpush1.msra.mxu0 %v238
      %2439 = vmatprep.subr.mxu0 %v243
      %2440 = vmatpush1.msra.mxu0 %v242
      %2441 = vmatprep.subr.mxu0 %v247
      %2442 = vmatpush1.msra.mxu0 %v246
      %2443 = vmatprep.subr.mxu0 %v251
      %2444 = vmatpush1.msra.mxu0 %v250
      %2445 = vmatprep.subr.mxu0 %v255
      %2446 = vmatpush1.msra.mxu0 %v254
      %2447 = vmatprep.subr.mxu0 %v259
      %2448 = vmatpush1.msra.mxu0 %v258
      %2449 = vmatprep.subr.mxu0 %v263
      %2450 = vmatpush1.msra.mxu0 %v262
      %2451 = vmatprep.subr.mxu0 %v267
      %2452 = vmatpush1.msra.mxu0 %v266
      %2453 = vmatprep.subr.mxu0 %v271
      %2454 = vmatpush1.msra.mxu0 %v270
      %2455 = vmatprep.subr.mxu0 %v275
      %2456 = vmatpush1.msra.mxu0 %v274
      %2457 = vmatprep.subr.mxu0 0.0
      %2458 = vmatpush1.msra.mxu0 0.0
      %2459 = vmatprep.subr.mxu0 0.0
      %2460 = vmatpush1.msra.mxu0 0.0
      %2461 = vmatprep.subr.mxu0 0.0
      %2462 = vmatpush1.msra.mxu0 0.0
      %2463 = vmatprep.subr.mxu0 0.0
      %2464 = vmatpush1.msra.mxu0 0.0
      %2465 = vmatprep.subr.mxu0 0.0
      %2466 = vmatpush1.msra.mxu0 0.0
      %2467 = vmatprep.subr.mxu0 0.0
      %2468 = vmatpush1.msra.mxu0 0.0
      %2469 = vmatprep.subr.mxu0 0.0
      %2470 = vmatpush1.msra.mxu0 0.0
      %2471 = vmatprep.subr.mxu0 0.0
      %2472 = vmatpush1.msra.mxu0 0.0
      %2473 = vmatprep.subr.mxu0 0.0
      %2474 = vmatpush1.msra.mxu0 0.0
      %2475 = vmatprep.subr.mxu0 0.0
      %2476 = vmatpush1.msra.mxu0 0.0
      %2477 = vmatprep.subr.mxu0 0.0
      %2478 = vmatpush1.msra.mxu0 0.0
      %2479 = vmatprep.subr.mxu0 0.0
      %2480 = vmatpush1.msra.mxu0 0.0
      %2481 = vmatprep.subr.mxu0 0.0
      %2482 = vmatpush1.msra.mxu0 0.0
      %2483 = vmatprep.subr.mxu0 0.0
      %2484 = vmatpush1.msra.mxu0 0.0
      %2485 = vmatprep.subr.mxu0 0.0
      %2486 = vmatpush1.msra.mxu0 0.0
      %2487 = vmatprep.subr.mxu0 0.0
      %2488 = vmatpush1.msra.mxu0 0.0
      %2489 = vmatprep.mubr.f32.mxu0 0.0
      %2490 = vmatmul.mubr.f32.gmra.mrb[0].mxu0 %v2200
      %v2491 = vpop.f32.mrb[0].mxu0
      %v2492 = vadd.f32 0.0, %v2491
      %v2493 = vpop.f32.mrb[0].mxu0
      %v2494 = vadd.f32 0.0, %v2493
      %2495 = vdwg.mxu0
      %2496 = vmatprep.subr.mxu0 %v217
      %2497 = vmatpush1.msra.mxu0 %v216
      %2498 = vmatprep.subr.mxu0 %v221
      %2499 = vmatpush1.msra.mxu0 %v220
      %2500 = vmatprep.subr.mxu0 %v225
      %2501 = vmatpush1.msra.mxu0 %v224
      %2502 = vmatprep.subr.mxu0 %v229
      %2503 = vmatpush1.msra.mxu0 %v228
      %2504 = vmatprep.subr.mxu0 %v233
      %2505 = vmatpush1.msra.mxu0 %v232
      %2506 = vmatprep.subr.mxu0 %v237
      %2507 = vmatpush1.msra.mxu0 %v236
      %2508 = vmatprep.subr.mxu0 %v241
      %2509 = vmatpush1.msra.mxu0 %v240
      %2510 = vmatprep.subr.mxu0 %v245
      %2511 = vmatpush1.msra.mxu0 %v244
      %2512 = vmatprep.subr.mxu0 %v249
      %2513 = vmatpush1.msra.mxu0 %v248
      %2514 = vmatprep.subr.mxu0 %v253
      %2515 = vmatpush1.msra.mxu0 %v252
      %2516 = vmatprep.subr.mxu0 %v257
      %2517 = vmatpush1.msra.mxu0 %v256
      %2518 = vmatprep.subr.mxu0 %v261
      %2519 = vmatpush1.msra.mxu0 %v260
      %2520 = vmatprep.subr.mxu0 %v265
      %2521 = vmatpush1.msra.mxu0 %v264
      %2522 = vmatprep.subr.mxu0 %v269
      %2523 = vmatpush1.msra.mxu0 %v268
      %2524 = vmatprep.subr.mxu0 %v273
      %2525 = vmatpush1.msra.mxu0 %v272
      %2526 = vmatprep.subr.mxu0 %v277
      %2527 = vmatpush1.msra.mxu0 %v276
      %2528 = vmatprep.subr.mxu0 0.0
      %2529 = vmatpush1.msra.mxu0 0.0
      %2530 = vmatprep.subr.mxu0 0.0
      %2531 = vmatpush1.msra.mxu0 0.0
      %2532 = vmatprep.subr.mxu0 0.0
      %2533 = vmatpush1.msra.mxu0 0.0
      %2534 = vmatprep.subr.mxu0 0.0
      %2535 = vmatpush1.msra.mxu0 0.0
      %2536 = vmatprep.subr.mxu0 0.0
      %2537 = vmatpush1.msra.mxu0 0.0
      %2538 = vmatprep.subr.mxu0 0.0
      %2539 = vmatpush1.msra.mxu0 0.0
      %2540 = vmatprep.subr.mxu0 0.0
      %2541 = vmatpush1.msra.mxu0 0.0
      %2542 = vmatprep.subr.mxu0 0.0
      %2543 = vmatpush1.msra.mxu0 0.0
      %2544 = vmatprep.subr.mxu0 0.0
      %2545 = vmatpush1.msra.mxu0 0.0
      %2546 = vmatprep.subr.mxu0 0.0
      %2547 = vmatpush1.msra.mxu0 0.0
      %2548 = vmatprep.subr.mxu0 0.0
      %2549 = vmatpush1.msra.mxu0 0.0
      %2550 = vmatprep.subr.mxu0 0.0
      %2551 = vmatpush1.msra.mxu0 0.0
      %2552 = vmatprep.subr.mxu0 0.0
      %2553 = vmatpush1.msra.mxu0 0.0
      %2554 = vmatprep.subr.mxu0 0.0
      %2555 = vmatpush1.msra.mxu0 0.0
      %2556 = vmatprep.subr.mxu0 0.0
      %2557 = vmatpush1.msra.mxu0 0.0
      %2558 = vmatprep.subr.mxu0 0.0
      %2559 = vmatpush1.msra.mxu0 0.0
      %2560 = vmatprep.mubr.f32.mxu0 0.0
      %2561 = vmatmul.mubr.f32.gmra.mrb[0].mxu0 %v2200
      %v2562 = vpop.f32.mrb[0].mxu0
      %v2563 = vadd.f32 0.0, %v2562
      %v2564 = vpop.f32.mrb[0].mxu0
      %v2565 = vadd.f32 0.0, %v2564
      %2566 = vdwg.mxu0
      %v2567 = vadd.f32 %v2350, %v2492
      %v2568 = vadd.f32 %v2352, %v2494
      %v2569 = vadd.f32 %v2421, %v2563
      %v2570 = vadd.f32 %v2423, %v2565
      %v2571 = vxor.u32 %v2567, 2147483648
      %v2572 = vmul.f32 %v2571, 1.442695
      %v2573 = vpow.pop %v2572
      %v2574 = vadd.f32 %v2573, 1.0
      %v2575 = vrcp.pop %v2574
      %v2576 = vmul.f32 1.0, %v2575
      %v2577 = vxor.u32 %v2568, 2147483648
      %v2578 = vmul.f32 %v2577, 1.442695
      %v2579 = vpow.pop %v2578
      %v2580 = vadd.f32 %v2579, 1.0
      %v2581 = vrcp.pop %v2580
      %v2582 = vmul.f32 1.0, %v2581
      %v2583 = vtanh.pop %v2569
      %v2584 = vxor.u32 %v2570, 2147483648
      %v2585 = vmul.f32 %v2584, 1.442695
      %v2586 = vpow.pop %v2585
      %v2587 = vadd.f32 %v2586, 1.0
      %v2588 = vrcp.pop %v2587
      %v2589 = vmul.f32 1.0, %v2588
      %v2590 = vmul.f32 %v2582, %v2201
      %v2591 = vmul.f32 %v2576, %v2583
      %v2592 = vadd.f32 %v2590, %v2591
      %v2593 = vtanh.pop %v2592
      %v2594 = vmul.f32 %v2589, %v2593
      %2595 = vmatprep.subr.mxu0 0.0
      %2596 = vmatpush1.msra.mxu0 %v358
      %2597 = vmatprep.subr.mxu0 0.0
      %2598 = vmatpush1.msra.mxu0 %v359
      %2599 = vmatprep.subr.mxu0 0.0
      %2600 = vmatpush1.msra.mxu0 %v360
      %2601 = vmatprep.subr.mxu0 0.0
      %2602 = vmatpush1.msra.mxu0 %v361
      %2603 = vmatprep.subr.mxu0 0.0
      %2604 = vmatpush1.msra.mxu0 %v362
      %2605 = vmatprep.subr.mxu0 0.0
      %2606 = vmatpush1.msra.mxu0 %v363
      %2607 = vmatprep.subr.mxu0 0.0
      %2608 = vmatpush1.msra.mxu0 %v364
      %2609 = vmatprep.subr.mxu0 0.0
      %2610 = vmatpush1.msra.mxu0 %v365
      %2611 = vmatprep.subr.mxu0 0.0
      %2612 = vmatpush1.msra.mxu0 %v366
      %2613 = vmatprep.subr.mxu0 0.0
      %2614 = vmatpush1.msra.mxu0 %v367
      %2615 = vmatprep.subr.mxu0 0.0
      %2616 = vmatpush1.msra.mxu0 %v368
      %2617 = vmatprep.subr.mxu0 0.0
      %2618 = vmatpush1.msra.mxu0 %v369
      %2619 = vmatprep.subr.mxu0 0.0
      %2620 = vmatpush1.msra.mxu0 %v370
      %2621 = vmatprep.subr.mxu0 0.0
      %2622 = vmatpush1.msra.mxu0 %v371
      %2623 = vmatprep.subr.mxu0 0.0
      %2624 = vmatpush1.msra.mxu0 %v372
      %2625 = vmatprep.subr.mxu0 0.0
      %2626 = vmatpush1.msra.mxu0 %v373
      %2627 = vmatprep.subr.mxu0 0.0
      %2628 = vmatpush1.msra.mxu0 0.0
      %2629 = vmatprep.subr.mxu0 0.0
      %2630 = vmatpush1.msra.mxu0 0.0
      %2631 = vmatprep.subr.mxu0 0.0
      %2632 = vmatpush1.msra.mxu0 0.0
      %2633 = vmatprep.subr.mxu0 0.0
      %2634 = vmatpush1.msra.mxu0 0.0
      %2635 = vmatprep.subr.mxu0 0.0
      %2636 = vmatpush1.msra.mxu0 0.0
      %2637 = vmatprep.subr.mxu0 0.0
      %2638 = vmatpush1.msra.mxu0 0.0
      %2639 = vmatprep.subr.mxu0 0.0
      %2640 = vmatpush1.msra.mxu0 0.0
      %2641 = vmatprep.subr.mxu0 0.0
      %2642 = vmatpush1.msra.mxu0 0.0
      %2643 = vmatprep.subr.mxu0 0.0
      %2644 = vmatpush1.msra.mxu0 0.0
      %2645 = vmatprep.subr.mxu0 0.0
      %2646 = vmatpush1.msra.mxu0 0.0
      %2647 = vmatprep.subr.mxu0 0.0
      %2648 = vmatpush1.msra.mxu0 0.0
      %2649 = vmatprep.subr.mxu0 0.0
      %2650 = vmatpush1.msra.mxu0 0.0
      %2651 = vmatprep.subr.mxu0 0.0
      %2652 = vmatpush1.msra.mxu0 0.0
      %2653 = vmatprep.subr.mxu0 0.0
      %2654 = vmatpush1.msra.mxu0 0.0
      %2655 = vmatprep.subr.mxu0 0.0
      %2656 = vmatpush1.msra.mxu0 0.0
      %2657 = vmatprep.subr.mxu0 0.0
      %2658 = vmatpush1.msra.mxu0 0.0
      %2659 = vmatprep.mubr.f32.mxu0 0.0
      %2660 = vmatmul.mubr.f32.gmra.mrb[0].mxu0 %v2594
      %v2661 = vpop.f32.mrb[0].mxu0
      %v2662 = vadd.f32 %v2101, %v2661
      %v2663 = vpop.f32.mrb[0].mxu0
      %2664 = vdwg.mxu0
      %2665 = vmax.xlane.f32.xlu0 %v2662
      %v2666 = vpop.xlane.xlu0 %2665
      %vm2667 = vcmp.eq.f32.partialorder %v2662, %v2666
      %v2668 = vsel %vm2667, %v1775, 128
      %v2669 = vand.u32 %v2668, 65535
      %v2670 = vshra.s32 %v2668, 16
      %v2671 = vcvt.s32.f32 %v2669
      %v2672 = vcvt.s32.f32 %v2670
      %2673 = vmin.xlane.f32.xlu0 %v2672
      %v2674 = vpop.xlane.xlu0 %2673
      %vm2675 = vcmp.eq.f32.partialorder %v2672, %v2674
      %v2676 = vsel %vm2675, %v2671, inf
      %2677 = vmin.xlane.f32.xlu0 %v2676
      %v2678 = vpop.xlane.xlu0 %2677
      %v2679 = vcvt.f32.s32 %v2678
      %v2680 = vcvt.f32.s32 %v2674
      %v2681 = vshll.u32 %v2680, 16
      %v2682 = vadd.s32 %v2681, %v2679
      %s2683 = smul.u32 %s2194, 8
      %s2684 = scalar_lea.vmem %s12, %s2683
      %2685 = vst.msk [vmem:[%s2684] sm:$0xff] %vm2191, %v2682
    $region107: #{tpu_custom_call.1} parent=1 // loop_footer
      %s2198 = sadd.s32 1, %s2194
    $region108: #{tpu_custom_call.1} parent=1 // loop_footer_branch
      %2193 = sbr.rel target = $region104
    $region109: #{tpu_custom_call.1} parent=1 // loop_exit
      _
    // Predicated region
    $region110: #{tpu_custom_call.1} parent=1 // pred_check
      _
    $region111: #{tpu_custom_call.1} parent=1 // pred_check_branch
      %2687 = sbr.rel (0) target = $region113
    $region112: #{tpu_custom_call.1} parent=1 // pred_region
      _
    $region113: #{tpu_custom_call.1} parent=1 // pred_fallthru
      _
    // Predicated region
    $region114: #{tpu_custom_call.1} parent=1 // pred_check
      _
    $region115: #{tpu_custom_call.1} parent=1 // pred_check_branch
      %2689 = sbr.rel (0) target = $region117
    $region116: #{tpu_custom_call.1} parent=1 // pred_region
      _
    $region117: #{tpu_custom_call.1} parent=1 // pred_fallthru
      _
    %2690 = vsyncpa [#allocation6], 1
    %2691 = vsyncpa [#allocation8], 1
    %2692 = vsyncpa [#allocation11], 1
    %2693 = vsyncpa [#allocation14], 1
    %2694 = vsyncpa [#allocation17], 1

</llo_original>
